<compile_context>
chip_gen: v7x
topology: tpu7x:2x2x1
jax: 0.10.0
libtpu: 0.0.40
codegen_flags: <defaults>
</compile_context>

<pallas_src>
import functools
import math

import jax
import jax.numpy as jnp
from jax.experimental import pallas as pl
from jax.experimental.pallas import tpu as pltpu


# ----------------------------------------------------------------------------
# Fused per-batch kernel
# ----------------------------------------------------------------------------
def _st_att_block_kernel(xin_ref, ms_ref, mt_ref,
                         wqkv_ref, sqkv_ref,
                         wo_ref, so_ref,
                         wg_ref, sg_ref,
                         wh1_ref, sh1_ref,
                         wh2_ref, sh2_ref,
                         o_ref, *, K, d, Cx, inv_sqrt_d):
    f32 = jnp.float32
    bf16 = jnp.bfloat16
    D = K * d

    xin = xin_ref[0]                      # [TN, 2D+m]  ([X | STE] per position)
    mask_s = ms_ref[...]                  # [TN, TN] additive mask (same step)
    mask_t = mt_ref[...]                  # [TN, TN] additive mask (same vertex)

    # --- fused Q/K/V projection for both branches (+ folded BN + ReLU) -------
    qkv = jnp.dot(xin.astype(bf16), wqkv_ref[...], preferred_element_type=f32)
    qkv = jnp.maximum(qkv + sqkv_ref[...], 0.0)          # [TN, 6D]

    # --- masked full-slab attention (no reshapes / transposes) --------------
    def attend(q, k, v, addmask):
        # q, k, v: [TN, d];  scores over all row pairs, invalid pairs masked.
        s = jax.lax.dot_general(q.astype(bf16), k.astype(bf16),
                                (((1,), (1,)), ((), ())),
                                preferred_element_type=f32)
        s = s * inv_sqrt_d + addmask
        s = s - jnp.max(s, axis=-1, keepdims=True)
        p = jnp.exp(s)
        p = p * pl.reciprocal(jnp.sum(p, axis=-1, keepdims=True), approx=True)
        return jnp.dot(p.astype(bf16), v.astype(bf16),
                       preferred_element_type=f32)        # [TN, d]

    heads_s, heads_t = [], []
    for h in range(K):                                    # K is small; unrolled
        qs = qkv[:, 0 * D + h * d:0 * D + (h + 1) * d]
        ks = qkv[:, 1 * D + h * d:1 * D + (h + 1) * d]
        vs = qkv[:, 2 * D + h * d:2 * D + (h + 1) * d]
        heads_s.append(attend(qs, ks, vs, mask_s))
        qt = qkv[:, 3 * D + h * d:3 * D + (h + 1) * d]
        kt = qkv[:, 4 * D + h * d:4 * D + (h + 1) * d]
        vt = qkv[:, 5 * D + h * d:5 * D + (h + 1) * d]
        heads_t.append(attend(qt, kt, vt, mask_t))
    hst = jnp.concatenate(heads_s + heads_t, axis=-1)     # [TN, 2D] = [HS|HT]

    # --- branch output FCs: single block-diagonal [2D,2D] matmul + ReLU -----
    hso = jnp.dot(hst.astype(bf16), wo_ref[...], preferred_element_type=f32)
    hso = jnp.maximum(hso + so_ref[...], 0.0)             # [TN, 2D] = [HS|HT]
    hs = hso[:, :D]
    ht = hso[:, D:]

    # --- gated fusion: z = sigmoid(HS @ Wxs + HT @ Wxt + b) ------------------
    g = jnp.dot(hso.astype(bf16), wg_ref[...], preferred_element_type=f32)
    g = g + sg_ref[...]
    z = 1.0 / (1.0 + jnp.exp(-g))                         # exact sigmoid
    hgate = z * hs + (1.0 - z) * ht

    # --- FC_h: D -> D (ReLU) -> D + m, then residual add ---------------------
    h1 = jnp.maximum(jnp.dot(hgate.astype(bf16), wh1_ref[...],
                             preferred_element_type=f32) + sh1_ref[...], 0.0)
    h2 = jnp.dot(h1.astype(bf16), wh2_ref[...],
                 preferred_element_type=f32) + sh2_ref[...]

    o_ref[0] = xin[:, :Cx] + h2                           # residual: X + H


# ----------------------------------------------------------------------------
# Wrapper
# ----------------------------------------------------------------------------
def st_att_block(X, STE, params, K, d):
    B, T, N, Cx = X.shape
    D = K * d
    TN = T * N
    p = params

    # lane-concatenate X|STE once (single QKV matmul in the kernel)
    xin = jnp.concatenate([X, STE], axis=-1).reshape(B, TN, Cx + D)

    # additive block masks encoding the attention structure
    t_idx = jnp.repeat(jnp.arange(T, dtype=jnp.int32), N)     # time index / row
    n_idx = jnp.tile(jnp.arange(N, dtype=jnp.int32), T)       # vertex index / row
    neg = jnp.float32(-1e30)
    mask_s = jnp.where(t_idx[:, None] == t_idx[None, :], 0.0, neg).astype(jnp.float32)
    mask_t = jnp.where(n_idx[:, None] == n_idx[None, :], 0.0, neg).astype(jnp.float32)

    kernel = functools.partial(_st_att_block_kernel, K=K, d=d, Cx=Cx,
                               inv_sqrt_d=1.0 / math.sqrt(d))

    def const(a):
        nd = a.ndim
        return pl.BlockSpec(a.shape, lambda b, _nd=nd: (0,) * _nd)

    out = pl.pallas_call(
        kernel,
        out_shape=jax.ShapeDtypeStruct((B, TN, Cx), jnp.float32),
        grid_spec=pltpu.PrefetchScalarGridSpec(
            num_scalar_prefetch=0,
            grid=(B,),
            in_specs=[
                pl.BlockSpec((1, TN, Cx + D), lambda b: (b, 0, 0)),
                const(mask_s), const(mask_t),
                const(p["wqkv"]), const(p["sqkv"]),
                const(p["wo"]), const(p["so"]),
                const(p["wg"]), const(p["sg"]),
                const(p["wh1"]), const(p["sh1"]),
                const(p["wh2"]), const(p["sh2"]),
            ],
            out_specs=pl.BlockSpec((1, TN, Cx), lambda b: (b, 0, 0)),
        ),
        compiler_params=pltpu.CompilerParams(
            dimension_semantics=("parallel",)),
    )(xin, mask_s, mask_t,
      p["wqkv"], p["sqkv"], p["wo"], p["so"], p["wg"], p["sg"],
      p["wh1"], p["sh1"], p["wh2"], p["sh2"])

    return out.reshape(B, T, N, Cx)


# ----------------------------------------------------------------------------
# Parameter construction (deterministic, mirrors module __init__; BN folded)
# ----------------------------------------------------------------------------
def make_fc_params(key, cin, cout):
    eps = 1e-5
    bound = math.sqrt(6.0 / (cin + cout))                  # xavier_uniform
    w = jax.random.uniform(key, (cin, cout), jnp.float32, -bound, bound)
    bias = jnp.zeros((cout,), jnp.float32)
    gamma = jnp.ones((cout,), jnp.float32)
    beta = jnp.zeros((cout,), jnp.float32)
    r_mean = jnp.zeros((cout,), jnp.float32)
    r_var = jnp.ones((cout,), jnp.float32)
    scale = gamma / jnp.sqrt(r_var + eps)
    shift = (bias - r_mean) * scale + beta
    return {"w": w * scale[None, :], "shift": shift}       # BN folded into W


def init_params(key, K, d, m):
    D = K * d
    cin = 2 * D + m
    ks = jax.random.split(key, 12)
    bf16 = jnp.bfloat16

    sq = make_fc_params(ks[0], cin, D)
    sk = make_fc_params(ks[1], cin, D)
    sv = make_fc_params(ks[2], cin, D)
    so = make_fc_params(ks[3], D, D)
    tq = make_fc_params(ks[4], cin, D)
    tk = make_fc_params(ks[5], cin, D)
    tv = make_fc_params(ks[6], cin, D)
    to_ = make_fc_params(ks[7], D, D)
    xs = make_fc_params(ks[8], D, D)    # FC_xs (no bias; bias is zero anyway)
    xt = make_fc_params(ks[9], D, D)    # FC_xt
    h1 = make_fc_params(ks[10], D, D)
    h2 = make_fc_params(ks[11], D, D + m)

    # fused QKV: columns = [q_s | k_s | v_s | q_t | k_t | v_t], head-major in D
    wqkv = jnp.concatenate([sq["w"], sk["w"], sv["w"],
                            tq["w"], tk["w"], tv["w"]], axis=1)
    sqkv = jnp.concatenate([sq["shift"], sk["shift"], sv["shift"],
                            tq["shift"], tk["shift"], tv["shift"]])

    # branch output FCs fused into a block-diagonal [2D,2D]
    wo = jnp.zeros((2 * D, 2 * D), jnp.float32)
    wo = wo.at[:D, :D].set(so["w"]).at[D:, D:].set(to_["w"])
    so_shift = jnp.concatenate([so["shift"], to_["shift"]])

    # gate FCs stacked into one [2D, D]
    wg = jnp.concatenate([xs["w"], xt["w"]], axis=0)
    sg = xs["shift"] + xt["shift"]

    return {
        "wqkv": wqkv.astype(bf16), "sqkv": sqkv.reshape(1, 6 * D),
        "wo": wo.astype(bf16), "so": so_shift.reshape(1, 2 * D),
        "wg": wg.astype(bf16), "sg": sg.reshape(1, D),
        "wh1": h1["w"].astype(bf16), "sh1": h1["shift"].reshape(1, D),
        "wh2": h2["w"].astype(bf16), "sh2": h2["shift"].reshape(1, D + m),
    }


# ----------------------------------------------------------------------------
# Pure-JAX reference (structure check; f32 math, grouped attention)
# ----------------------------------------------------------------------------
def st_att_block_ref(X, STE, p, K, d):
    B, T, N, Cx = X.shape
    D = K * d
    f32 = jnp.float32
    xin = jnp.concatenate([X, STE], axis=-1)
    qkv = jax.nn.relu(jnp.einsum("btnc,cf->btnf", xin, p["wqkv"].astype(f32))
                      + p["sqkv"][0])
    def heads(a):
        return a.reshape(B, T, N, K, d)
    qs, ks, vs, qt, kt, vt = [heads(qkv[..., i * D:(i + 1) * D]) for i in range(6)]
    # spatial: attend over vertices
    s = jnp.einsum("btnkd,btmkd->btknm", qs, ks) / math.sqrt(d)
    hs_pre = jnp.einsum("btknm,btmkd->btnkd", jax.nn.softmax(s, axis=-1),
                        vs).reshape(B, T, N, D)
    # temporal: attend over time steps
    s = jnp.einsum("btnkd,bsnkd->bnkts", qt, kt) / math.sqrt(d)
    ht_pre = jnp.einsum("bnkts,bsnkd->btnkd", jax.nn.softmax(s, axis=-1),
                        vt).reshape(B, T, N, D)
    wo = p["wo"].astype(f32); so = p["so"][0]
    hs = jax.nn.relu(hs_pre @ wo[:D, :D] + so[:D])
    ht = jax.nn.relu(ht_pre @ wo[D:, D:] + so[D:])
    wg = p["wg"].astype(f32)
    z = jax.nn.sigmoid(hs @ wg[:D] + ht @ wg[D:] + p["sg"][0])
    h = z * hs + (1.0 - z) * ht
    h1 = jax.nn.relu(h @ p["wh1"].astype(f32) + p["sh1"][0])
    h2 = h1 @ p["wh2"].astype(f32) + p["sh2"][0]
    return X + h2


# ----------------------------------------------------------------------------
if __name__ == "__main__":
    K, d, m = 2, 8, 4
    D = K * d
    B, T, N = 2, 8, 16

    root = jax.random.PRNGKey(0)
    kx, kste, kp = jax.random.split(root, 3)
    # X carries the memory-augmented features (D + m); STE carries D features,
    # so the concatenated Q/K/V input has 2*D + m channels as in the module.
    X = jax.random.normal(kx, (B, T, N, D + m), jnp.float32)
    STE = jax.random.normal(kste, (B, T, N, D), jnp.float32)

    params = init_params(kp, K, d, m)

    fwd = jax.jit(st_att_block, static_argnums=(3, 4))
    out = jax.block_until_ready(fwd(X, STE, params, K, d))
    assert out.shape == (B, T, N, D + m), out.shape
    assert bool(jnp.all(jnp.isfinite(out)))

    # structural correctness vs pure-JAX reference (bf16 matmuls in the kernel
    # -> loose tolerance; a mask / head-mapping bug would be O(1))
    ref = st_att_block_ref(X, STE, params, K, d)
    err = float(jnp.max(jnp.abs(out - ref)))
    assert err < 0.25, f"max abs diff vs reference: {err}"

    print("KERNEL_OK")
</pallas_src>

<mosaic_0001>
module attributes {stable_mosaic.version = 11 : i64} {
  func.func @_st_att_block_kernel(%arg0: i32, %arg1: memref<1x128x36xf32, #tpu.memory_space<vmem>>, %arg2: memref<128x128xf32, #tpu.memory_space<vmem>>, %arg3: memref<128x128xf32, #tpu.memory_space<vmem>>, %arg4: memref<36x96xbf16, #tpu.memory_space<vmem>>, %arg5: memref<1x96xf32, #tpu.memory_space<vmem>>, %arg6: memref<32x32xbf16, #tpu.memory_space<vmem>>, %arg7: memref<1x32xf32, #tpu.memory_space<vmem>>, %arg8: memref<32x16xbf16, #tpu.memory_space<vmem>>, %arg9: memref<1x16xf32, #tpu.memory_space<vmem>>, %arg10: memref<16x16xbf16, #tpu.memory_space<vmem>>, %arg11: memref<1x16xf32, #tpu.memory_space<vmem>>, %arg12: memref<16x20xbf16, #tpu.memory_space<vmem>>, %arg13: memref<1x20xf32, #tpu.memory_space<vmem>>, %arg14: memref<1x128x20xf32, #tpu.memory_space<vmem>>) attributes {dimension_semantics = [#tpu.dimension_semantics<parallel>], iteration_bounds = array<i64: 2>, scalar_prefetch = 0 : i64, scratch_operands = 0 : i64, tpu.core_type = #tpu.core_type<tc>, window_params = [{transform_indices = @transform_0, window_bounds = array<i64: 1, 128, 36>}, {pipeline_mode = #tpu.pipeline_mode<synchronous>, transform_indices = @transform_1, window_bounds = array<i64: 128, 128>}, {pipeline_mode = #tpu.pipeline_mode<synchronous>, transform_indices = @transform_2, window_bounds = array<i64: 128, 128>}, {pipeline_mode = #tpu.pipeline_mode<synchronous>, transform_indices = @transform_3, window_bounds = array<i64: 36, 96>}, {pipeline_mode = #tpu.pipeline_mode<synchronous>, transform_indices = @transform_4, window_bounds = array<i64: 1, 96>}, {pipeline_mode = #tpu.pipeline_mode<synchronous>, transform_indices = @transform_5, window_bounds = array<i64: 32, 32>}, {pipeline_mode = #tpu.pipeline_mode<synchronous>, transform_indices = @transform_6, window_bounds = array<i64: 1, 32>}, {pipeline_mode = #tpu.pipeline_mode<synchronous>, transform_indices = @transform_7, window_bounds = array<i64: 32, 16>}, {pipeline_mode = #tpu.pipeline_mode<synchronous>, transform_indices = @transform_8, window_bounds = array<i64: 1, 16>}, {pipeline_mode = #tpu.pipeline_mode<synchronous>, transform_indices = @transform_9, window_bounds = array<i64: 16, 16>}, {pipeline_mode = #tpu.pipeline_mode<synchronous>, transform_indices = @transform_10, window_bounds = array<i64: 1, 16>}, {pipeline_mode = #tpu.pipeline_mode<synchronous>, transform_indices = @transform_11, window_bounds = array<i64: 16, 20>}, {pipeline_mode = #tpu.pipeline_mode<synchronous>, transform_indices = @transform_12, window_bounds = array<i64: 1, 20>}, {transform_indices = @transform_13, window_bounds = array<i64: 1, 128, 20>}]} {
    %c0 = arith.constant 0 : index
    %c0_0 = arith.constant 0 : index
    %c0_1 = arith.constant 0 : index
    %0 = vector.load %arg1[%c0, %c0_0, %c0_1] : memref<1x128x36xf32, #tpu.memory_space<vmem>>, vector<1x128x36xf32>
    %1 = vector.shape_cast %0 : vector<1x128x36xf32> to vector<128x36xf32>
    %c0_2 = arith.constant 0 : index
    %c0_3 = arith.constant 0 : index
    %2 = vector.load %arg2[%c0_2, %c0_3] : memref<128x128xf32, #tpu.memory_space<vmem>>, vector<128x128xf32>
    %c0_4 = arith.constant 0 : index
    %c0_5 = arith.constant 0 : index
    %3 = vector.load %arg3[%c0_4, %c0_5] : memref<128x128xf32, #tpu.memory_space<vmem>>, vector<128x128xf32>
    %4 = arith.truncf %1 : vector<128x36xf32> to vector<128x36xbf16>
    %c0_6 = arith.constant 0 : index
    %c0_7 = arith.constant 0 : index
    %5 = vector.load %arg4[%c0_6, %c0_7] : memref<36x96xbf16, #tpu.memory_space<vmem>>, vector<36x96xbf16>
    %cst = arith.constant dense<0.000000e+00> : vector<128x96xf32>
    %6 = tpu.matmul %4, %5, %cst {dimension_numbers = #tpu.dot_dimension_numbers<[1], [0], [0], [1], [0, 0, 1, 1], [], []>} : vector<128x36xbf16>, vector<36x96xbf16>, vector<128x96xf32> -> vector<128x96xf32>
    %c0_8 = arith.constant 0 : index
    %c0_9 = arith.constant 0 : index
    %7 = vector.load %arg5[%c0_8, %c0_9] : memref<1x96xf32, #tpu.memory_space<vmem>>, vector<1x96xf32>
    %8 = vector.broadcast %7 : vector<1x96xf32> to vector<128x96xf32>
    %9 = arith.addf %6, %8 : vector<128x96xf32>
    %cst_10 = arith.constant 0.000000e+00 : f32
    %10 = vector.broadcast %cst_10 : f32 to vector<128x96xf32>
    %11 = arith.maximumf %9, %10 : vector<128x96xf32>
    %12 = vector.extract_strided_slice %11 {offsets = [0, 0], sizes = [128, 8], strides = [1, 1]} : vector<128x96xf32> to vector<128x8xf32>
    %13 = vector.extract_strided_slice %11 {offsets = [0, 16], sizes = [128, 8], strides = [1, 1]} : vector<128x96xf32> to vector<128x8xf32>
    %14 = vector.extract_strided_slice %11 {offsets = [0, 32], sizes = [128, 8], strides = [1, 1]} : vector<128x96xf32> to vector<128x8xf32>
    %15 = arith.truncf %12 : vector<128x8xf32> to vector<128x8xbf16>
    %16 = arith.truncf %13 : vector<128x8xf32> to vector<128x8xbf16>
    %cst_11 = arith.constant dense<0.000000e+00> : vector<128x128xf32>
    %17 = tpu.matmul %15, %16, %cst_11 {dimension_numbers = #tpu.dot_dimension_numbers<[1], [1], [0], [0], [0, 0, 1, 0], [], []>} : vector<128x8xbf16>, vector<128x8xbf16>, vector<128x128xf32> -> vector<128x128xf32>
    %cst_12 = arith.constant 0.353553385 : f32
    %18 = vector.broadcast %cst_12 : f32 to vector<128x128xf32>
    %19 = arith.mulf %17, %18 : vector<128x128xf32>
    %20 = arith.addf %19, %2 : vector<128x128xf32>
    %cst_13 = arith.constant dense<0xFF800000> : vector<128xf32>
    %21 = vector.multi_reduction <maximumf>, %20, %cst_13 [1] : vector<128x128xf32> to vector<128xf32>
    %22 = vector.shape_cast %21 : vector<128xf32> to vector<128x1xf32>
    %23 = vector.broadcast %22 : vector<128x1xf32> to vector<128x128xf32>
    %24 = arith.subf %20, %23 : vector<128x128xf32>
    %25 = math.exp %24 : vector<128x128xf32>
    %cst_14 = arith.constant dense<0.000000e+00> : vector<128xf32>
    %26 = vector.multi_reduction <add>, %25, %cst_14 [1] : vector<128x128xf32> to vector<128xf32>
    %27 = vector.shape_cast %26 : vector<128xf32> to vector<128x1xf32>
    %28 = tpu.reciprocal %27 {approx = true} : vector<128x1xf32> -> vector<128x1xf32>
    %29 = vector.broadcast %28 : vector<128x1xf32> to vector<128x128xf32>
    %30 = arith.mulf %25, %29 : vector<128x128xf32>
    %31 = arith.truncf %30 : vector<128x128xf32> to vector<128x128xbf16>
    %32 = arith.truncf %14 : vector<128x8xf32> to vector<128x8xbf16>
    %cst_15 = arith.constant dense<0.000000e+00> : vector<128x8xf32>
    %33 = tpu.matmul %31, %32, %cst_15 {dimension_numbers = #tpu.dot_dimension_numbers<[1], [0], [0], [1], [0, 0, 1, 1], [], []>} : vector<128x128xbf16>, vector<128x8xbf16>, vector<128x8xf32> -> vector<128x8xf32>
    %34 = vector.extract_strided_slice %11 {offsets = [0, 48], sizes = [128, 8], strides = [1, 1]} : vector<128x96xf32> to vector<128x8xf32>
    %35 = vector.extract_strided_slice %11 {offsets = [0, 64], sizes = [128, 8], strides = [1, 1]} : vector<128x96xf32> to vector<128x8xf32>
    %36 = vector.extract_strided_slice %11 {offsets = [0, 80], sizes = [128, 8], strides = [1, 1]} : vector<128x96xf32> to vector<128x8xf32>
    %37 = arith.truncf %34 : vector<128x8xf32> to vector<128x8xbf16>
    %38 = arith.truncf %35 : vector<128x8xf32> to vector<128x8xbf16>
    %cst_16 = arith.constant dense<0.000000e+00> : vector<128x128xf32>
    %39 = tpu.matmul %37, %38, %cst_16 {dimension_numbers = #tpu.dot_dimension_numbers<[1], [1], [0], [0], [0, 0, 1, 0], [], []>} : vector<128x8xbf16>, vector<128x8xbf16>, vector<128x128xf32> -> vector<128x128xf32>
    %cst_17 = arith.constant 0.353553385 : f32
    %40 = vector.broadcast %cst_17 : f32 to vector<128x128xf32>
    %41 = arith.mulf %39, %40 : vector<128x128xf32>
    %42 = arith.addf %41, %3 : vector<128x128xf32>
    %cst_18 = arith.constant dense<0xFF800000> : vector<128xf32>
    %43 = vector.multi_reduction <maximumf>, %42, %cst_18 [1] : vector<128x128xf32> to vector<128xf32>
    %44 = vector.shape_cast %43 : vector<128xf32> to vector<128x1xf32>
    %45 = vector.broadcast %44 : vector<128x1xf32> to vector<128x128xf32>
    %46 = arith.subf %42, %45 : vector<128x128xf32>
    %47 = math.exp %46 : vector<128x128xf32>
    %cst_19 = arith.constant dense<0.000000e+00> : vector<128xf32>
    %48 = vector.multi_reduction <add>, %47, %cst_19 [1] : vector<128x128xf32> to vector<128xf32>
    %49 = vector.shape_cast %48 : vector<128xf32> to vector<128x1xf32>
    %50 = tpu.reciprocal %49 {approx = true} : vector<128x1xf32> -> vector<128x1xf32>
    %51 = vector.broadcast %50 : vector<128x1xf32> to vector<128x128xf32>
    %52 = arith.mulf %47, %51 : vector<128x128xf32>
    %53 = arith.truncf %52 : vector<128x128xf32> to vector<128x128xbf16>
    %54 = arith.truncf %36 : vector<128x8xf32> to vector<128x8xbf16>
    %cst_20 = arith.constant dense<0.000000e+00> : vector<128x8xf32>
    %55 = tpu.matmul %53, %54, %cst_20 {dimension_numbers = #tpu.dot_dimension_numbers<[1], [0], [0], [1], [0, 0, 1, 1], [], []>} : vector<128x128xbf16>, vector<128x8xbf16>, vector<128x8xf32> -> vector<128x8xf32>
    %56 = vector.extract_strided_slice %11 {offsets = [0, 8], sizes = [128, 8], strides = [1, 1]} : vector<128x96xf32> to vector<128x8xf32>
    %57 = vector.extract_strided_slice %11 {offsets = [0, 24], sizes = [128, 8], strides = [1, 1]} : vector<128x96xf32> to vector<128x8xf32>
    %58 = vector.extract_strided_slice %11 {offsets = [0, 40], sizes = [128, 8], strides = [1, 1]} : vector<128x96xf32> to vector<128x8xf32>
    %59 = arith.truncf %56 : vector<128x8xf32> to vector<128x8xbf16>
    %60 = arith.truncf %57 : vector<128x8xf32> to vector<128x8xbf16>
    %cst_21 = arith.constant dense<0.000000e+00> : vector<128x128xf32>
    %61 = tpu.matmul %59, %60, %cst_21 {dimension_numbers = #tpu.dot_dimension_numbers<[1], [1], [0], [0], [0, 0, 1, 0], [], []>} : vector<128x8xbf16>, vector<128x8xbf16>, vector<128x128xf32> -> vector<128x128xf32>
    %cst_22 = arith.constant 0.353553385 : f32
    %62 = vector.broadcast %cst_22 : f32 to vector<128x128xf32>
    %63 = arith.mulf %61, %62 : vector<128x128xf32>
    %64 = arith.addf %63, %2 : vector<128x128xf32>
    %cst_23 = arith.constant dense<0xFF800000> : vector<128xf32>
    %65 = vector.multi_reduction <maximumf>, %64, %cst_23 [1] : vector<128x128xf32> to vector<128xf32>
    %66 = vector.shape_cast %65 : vector<128xf32> to vector<128x1xf32>
    %67 = vector.broadcast %66 : vector<128x1xf32> to vector<128x128xf32>
    %68 = arith.subf %64, %67 : vector<128x128xf32>
    %69 = math.exp %68 : vector<128x128xf32>
    %cst_24 = arith.constant dense<0.000000e+00> : vector<128xf32>
    %70 = vector.multi_reduction <add>, %69, %cst_24 [1] : vector<128x128xf32> to vector<128xf32>
    %71 = vector.shape_cast %70 : vector<128xf32> to vector<128x1xf32>
    %72 = tpu.reciprocal %71 {approx = true} : vector<128x1xf32> -> vector<128x1xf32>
    %73 = vector.broadcast %72 : vector<128x1xf32> to vector<128x128xf32>
    %74 = arith.mulf %69, %73 : vector<128x128xf32>
    %75 = arith.truncf %74 : vector<128x128xf32> to vector<128x128xbf16>
    %76 = arith.truncf %58 : vector<128x8xf32> to vector<128x8xbf16>
    %cst_25 = arith.constant dense<0.000000e+00> : vector<128x8xf32>
    %77 = tpu.matmul %75, %76, %cst_25 {dimension_numbers = #tpu.dot_dimension_numbers<[1], [0], [0], [1], [0, 0, 1, 1], [], []>} : vector<128x128xbf16>, vector<128x8xbf16>, vector<128x8xf32> -> vector<128x8xf32>
    %78 = vector.extract_strided_slice %11 {offsets = [0, 56], sizes = [128, 8], strides = [1, 1]} : vector<128x96xf32> to vector<128x8xf32>
    %79 = vector.extract_strided_slice %11 {offsets = [0, 72], sizes = [128, 8], strides = [1, 1]} : vector<128x96xf32> to vector<128x8xf32>
    %80 = vector.extract_strided_slice %11 {offsets = [0, 88], sizes = [128, 8], strides = [1, 1]} : vector<128x96xf32> to vector<128x8xf32>
    %81 = arith.truncf %78 : vector<128x8xf32> to vector<128x8xbf16>
    %82 = arith.truncf %79 : vector<128x8xf32> to vector<128x8xbf16>
    %cst_26 = arith.constant dense<0.000000e+00> : vector<128x128xf32>
    %83 = tpu.matmul %81, %82, %cst_26 {dimension_numbers = #tpu.dot_dimension_numbers<[1], [1], [0], [0], [0, 0, 1, 0], [], []>} : vector<128x8xbf16>, vector<128x8xbf16>, vector<128x128xf32> -> vector<128x128xf32>
    %cst_27 = arith.constant 0.353553385 : f32
    %84 = vector.broadcast %cst_27 : f32 to vector<128x128xf32>
    %85 = arith.mulf %83, %84 : vector<128x128xf32>
    %86 = arith.addf %85, %3 : vector<128x128xf32>
    %cst_28 = arith.constant dense<0xFF800000> : vector<128xf32>
    %87 = vector.multi_reduction <maximumf>, %86, %cst_28 [1] : vector<128x128xf32> to vector<128xf32>
    %88 = vector.shape_cast %87 : vector<128xf32> to vector<128x1xf32>
    %89 = vector.broadcast %88 : vector<128x1xf32> to vector<128x128xf32>
    %90 = arith.subf %86, %89 : vector<128x128xf32>
    %91 = math.exp %90 : vector<128x128xf32>
    %cst_29 = arith.constant dense<0.000000e+00> : vector<128xf32>
    %92 = vector.multi_reduction <add>, %91, %cst_29 [1] : vector<128x128xf32> to vector<128xf32>
    %93 = vector.shape_cast %92 : vector<128xf32> to vector<128x1xf32>
    %94 = tpu.reciprocal %93 {approx = true} : vector<128x1xf32> -> vector<128x1xf32>
    %95 = vector.broadcast %94 : vector<128x1xf32> to vector<128x128xf32>
    %96 = arith.mulf %91, %95 : vector<128x128xf32>
    %97 = arith.truncf %96 : vector<128x128xf32> to vector<128x128xbf16>
    %98 = arith.truncf %80 : vector<128x8xf32> to vector<128x8xbf16>
    %cst_30 = arith.constant dense<0.000000e+00> : vector<128x8xf32>
    %99 = tpu.matmul %97, %98, %cst_30 {dimension_numbers = #tpu.dot_dimension_numbers<[1], [0], [0], [1], [0, 0, 1, 1], [], []>} : vector<128x128xbf16>, vector<128x8xbf16>, vector<128x8xf32> -> vector<128x8xf32>
    %100 = tpu.concatenate %33, %77, %55, %99 in 1 : vector<128x8xf32>, vector<128x8xf32>, vector<128x8xf32>, vector<128x8xf32> -> vector<128x32xf32>
    %101 = arith.truncf %100 : vector<128x32xf32> to vector<128x32xbf16>
    %c0_31 = arith.constant 0 : index
    %c0_32 = arith.constant 0 : index
    %102 = vector.load %arg6[%c0_31, %c0_32] : memref<32x32xbf16, #tpu.memory_space<vmem>>, vector<32x32xbf16>
    %cst_33 = arith.constant dense<0.000000e+00> : vector<128x32xf32>
    %103 = tpu.matmul %101, %102, %cst_33 {dimension_numbers = #tpu.dot_dimension_numbers<[1], [0], [0], [1], [0, 0, 1, 1], [], []>} : vector<128x32xbf16>, vector<32x32xbf16>, vector<128x32xf32> -> vector<128x32xf32>
    %c0_34 = arith.constant 0 : index
    %c0_35 = arith.constant 0 : index
    %104 = vector.load %arg7[%c0_34, %c0_35] : memref<1x32xf32, #tpu.memory_space<vmem>>, vector<1x32xf32>
    %105 = vector.broadcast %104 : vector<1x32xf32> to vector<128x32xf32>
    %106 = arith.addf %103, %105 : vector<128x32xf32>
    %cst_36 = arith.constant 0.000000e+00 : f32
    %107 = vector.broadcast %cst_36 : f32 to vector<128x32xf32>
    %108 = arith.maximumf %106, %107 : vector<128x32xf32>
    %109 = vector.extract_strided_slice %108 {offsets = [0, 0], sizes = [128, 16], strides = [1, 1]} : vector<128x32xf32> to vector<128x16xf32>
    %110 = vector.extract_strided_slice %108 {offsets = [0, 16], sizes = [128, 16], strides = [1, 1]} : vector<128x32xf32> to vector<128x16xf32>
    %111 = arith.truncf %108 : vector<128x32xf32> to vector<128x32xbf16>
    %c0_37 = arith.constant 0 : index
    %c0_38 = arith.constant 0 : index
    %112 = vector.load %arg8[%c0_37, %c0_38] : memref<32x16xbf16, #tpu.memory_space<vmem>>, vector<32x16xbf16>
    %cst_39 = arith.constant dense<0.000000e+00> : vector<128x16xf32>
    %113 = tpu.matmul %111, %112, %cst_39 {dimension_numbers = #tpu.dot_dimension_numbers<[1], [0], [0], [1], [0, 0, 1, 1], [], []>} : vector<128x32xbf16>, vector<32x16xbf16>, vector<128x16xf32> -> vector<128x16xf32>
    %c0_40 = arith.constant 0 : index
    %c0_41 = arith.constant 0 : index
    %114 = vector.load %arg9[%c0_40, %c0_41] : memref<1x16xf32, #tpu.memory_space<vmem>>, vector<1x16xf32>
    %115 = vector.broadcast %114 : vector<1x16xf32> to vector<128x16xf32>
    %116 = arith.addf %113, %115 : vector<128x16xf32>
    %cst_42 = arith.constant 0.000000e+00 : f32
    %117 = vector.broadcast %cst_42 : f32 to vector<128x16xf32>
    %118 = arith.subf %117, %116 : vector<128x16xf32>
    %119 = math.exp %118 : vector<128x16xf32>
    %cst_43 = arith.constant 1.000000e+00 : f32
    %120 = vector.broadcast %cst_43 : f32 to vector<128x16xf32>
    %121 = arith.addf %120, %119 : vector<128x16xf32>
    %cst_44 = arith.constant 1.000000e+00 : f32
    %122 = vector.broadcast %cst_44 : f32 to vector<128x16xf32>
    %123 = arith.divf %122, %121 : vector<128x16xf32>
    %124 = arith.mulf %123, %109 : vector<128x16xf32>
    %cst_45 = arith.constant 1.000000e+00 : f32
    %125 = vector.broadcast %cst_45 : f32 to vector<128x16xf32>
    %126 = arith.subf %125, %123 : vector<128x16xf32>
    %127 = arith.mulf %126, %110 : vector<128x16xf32>
    %128 = arith.addf %124, %127 : vector<128x16xf32>
    %129 = arith.truncf %128 : vector<128x16xf32> to vector<128x16xbf16>
    %c0_46 = arith.constant 0 : index
    %c0_47 = arith.constant 0 : index
    %130 = vector.load %arg10[%c0_46, %c0_47] : memref<16x16xbf16, #tpu.memory_space<vmem>>, vector<16x16xbf16>
    %cst_48 = arith.constant dense<0.000000e+00> : vector<128x16xf32>
    %131 = tpu.matmul %129, %130, %cst_48 {dimension_numbers = #tpu.dot_dimension_numbers<[1], [0], [0], [1], [0, 0, 1, 1], [], []>} : vector<128x16xbf16>, vector<16x16xbf16>, vector<128x16xf32> -> vector<128x16xf32>
    %c0_49 = arith.constant 0 : index
    %c0_50 = arith.constant 0 : index
    %132 = vector.load %arg11[%c0_49, %c0_50] : memref<1x16xf32, #tpu.memory_space<vmem>>, vector<1x16xf32>
    %133 = vector.broadcast %132 : vector<1x16xf32> to vector<128x16xf32>
    %134 = arith.addf %131, %133 : vector<128x16xf32>
    %cst_51 = arith.constant 0.000000e+00 : f32
    %135 = vector.broadcast %cst_51 : f32 to vector<128x16xf32>
    %136 = arith.maximumf %134, %135 : vector<128x16xf32>
    %137 = arith.truncf %136 : vector<128x16xf32> to vector<128x16xbf16>
    %c0_52 = arith.constant 0 : index
    %c0_53 = arith.constant 0 : index
    %138 = vector.load %arg12[%c0_52, %c0_53] : memref<16x20xbf16, #tpu.memory_space<vmem>>, vector<16x20xbf16>
    %cst_54 = arith.constant dense<0.000000e+00> : vector<128x20xf32>
    %139 = tpu.matmul %137, %138, %cst_54 {dimension_numbers = #tpu.dot_dimension_numbers<[1], [0], [0], [1], [0, 0, 1, 1], [], []>} : vector<128x16xbf16>, vector<16x20xbf16>, vector<128x20xf32> -> vector<128x20xf32>
    %c0_55 = arith.constant 0 : index
    %c0_56 = arith.constant 0 : index
    %140 = vector.load %arg13[%c0_55, %c0_56] : memref<1x20xf32, #tpu.memory_space<vmem>>, vector<1x20xf32>
    %141 = vector.broadcast %140 : vector<1x20xf32> to vector<128x20xf32>
    %142 = arith.addf %139, %141 : vector<128x20xf32>
    %143 = vector.extract_strided_slice %1 {offsets = [0, 0], sizes = [128, 20], strides = [1, 1]} : vector<128x36xf32> to vector<128x20xf32>
    %144 = arith.addf %143, %142 : vector<128x20xf32>
    %c0_57 = arith.constant 0 : index
    %c0_58 = arith.constant 0 : index
    %c0_59 = arith.constant 0 : index
    %145 = vector.load %arg14[%c0_57, %c0_58, %c0_59] : memref<1x128x20xf32, #tpu.memory_space<vmem>>, vector<1x128x20xf32>
    %146 = vector.shape_cast %145 : vector<1x128x20xf32> to vector<128x20xf32>
    %147 = vector.shape_cast %144 : vector<128x20xf32> to vector<1x128x20xf32>
    tpu.vector_store %arg14[%c0_57, %c0_58, %c0_59], %147 {strides = array<i32>} : memref<1x128x20xf32, #tpu.memory_space<vmem>>, vector<1x128x20xf32>,
    return
  }
  func.func @transform_0(%arg0: i32) -> (i32, i32, i32) {
    %c0_i32 = arith.constant 0 : i32
    %c0_i32_0 = arith.constant 0 : i32
    %c0_i32_1 = arith.constant 0 : i32
    return %arg0, %c0_i32, %c0_i32_0 : i32, i32, i32
  }
  func.func @transform_1(%arg0: i32) -> (i32, i32) {
    %c0_i32 = arith.constant 0 : i32
    %c0_i32_0 = arith.constant 0 : i32
    %c0_i32_1 = arith.constant 0 : i32
    return %c0_i32, %c0_i32_0 : i32, i32
  }
  func.func @transform_2(%arg0: i32) -> (i32, i32) {
    %c0_i32 = arith.constant 0 : i32
    %c0_i32_0 = arith.constant 0 : i32
    %c0_i32_1 = arith.constant 0 : i32
    return %c0_i32, %c0_i32_0 : i32, i32
  }
  func.func @transform_3(%arg0: i32) -> (i32, i32) {
    %c0_i32 = arith.constant 0 : i32
    %c0_i32_0 = arith.constant 0 : i32
    %c0_i32_1 = arith.constant 0 : i32
    return %c0_i32, %c0_i32_0 : i32, i32
  }
  func.func @transform_4(%arg0: i32) -> (i32, i32) {
    %c0_i32 = arith.constant 0 : i32
    %c0_i32_0 = arith.constant 0 : i32
    %c0_i32_1 = arith.constant 0 : i32
    return %c0_i32, %c0_i32_0 : i32, i32
  }
  func.func @transform_5(%arg0: i32) -> (i32, i32) {
    %c0_i32 = arith.constant 0 : i32
    %c0_i32_0 = arith.constant 0 : i32
    %c0_i32_1 = arith.constant 0 : i32
    return %c0_i32, %c0_i32_0 : i32, i32
  }
  func.func @transform_6(%arg0: i32) -> (i32, i32) {
    %c0_i32 = arith.constant 0 : i32
    %c0_i32_0 = arith.constant 0 : i32
    %c0_i32_1 = arith.constant 0 : i32
    return %c0_i32, %c0_i32_0 : i32, i32
  }
  func.func @transform_7(%arg0: i32) -> (i32, i32) {
    %c0_i32 = arith.constant 0 : i32
    %c0_i32_0 = arith.constant 0 : i32
    %c0_i32_1 = arith.constant 0 : i32
    return %c0_i32, %c0_i32_0 : i32, i32
  }
  func.func @transform_8(%arg0: i32) -> (i32, i32) {
    %c0_i32 = arith.constant 0 : i32
    %c0_i32_0 = arith.constant 0 : i32
    %c0_i32_1 = arith.constant 0 : i32
    return %c0_i32, %c0_i32_0 : i32, i32
  }
  func.func @transform_9(%arg0: i32) -> (i32, i32) {
    %c0_i32 = arith.constant 0 : i32
    %c0_i32_0 = arith.constant 0 : i32
    %c0_i32_1 = arith.constant 0 : i32
    return %c0_i32, %c0_i32_0 : i32, i32
  }
  func.func @transform_10(%arg0: i32) -> (i32, i32) {
    %c0_i32 = arith.constant 0 : i32
    %c0_i32_0 = arith.constant 0 : i32
    %c0_i32_1 = arith.constant 0 : i32
    return %c0_i32, %c0_i32_0 : i32, i32
  }
  func.func @transform_11(%arg0: i32) -> (i32, i32) {
    %c0_i32 = arith.constant 0 : i32
    %c0_i32_0 = arith.constant 0 : i32
    %c0_i32_1 = arith.constant 0 : i32
    return %c0_i32, %c0_i32_0 : i32, i32
  }
  func.func @transform_12(%arg0: i32) -> (i32, i32) {
    %c0_i32 = arith.constant 0 : i32
    %c0_i32_0 = arith.constant 0 : i32
    %c0_i32_1 = arith.constant 0 : i32
    return %c0_i32, %c0_i32_0 : i32, i32
  }
  func.func @transform_13(%arg0: i32) -> (i32, i32, i32) {
    %c0_i32 = arith.constant 0 : i32
    %c0_i32_0 = arith.constant 0 : i32
    %c0_i32_1 = arith.constant 0 : i32
    return %arg0, %c0_i32, %c0_i32_0 : i32, i32, i32
  }
}

</mosaic_0001>

<llo_original>
// kernel: eq.22
$region0: #{eq.22}
  %s0 = inlined_call_operand.vmem [shape: s32[8,16], index: 0, kind: input, shape index: {}]
  %s1 = inlined_call_operand.vmem [shape: s32[128], index: 1, kind: output, shape index: {}]
  $region1: #{eq.22} parent=0
    #allocation0 [shape = 'u8[4096]{0}', space=vmem, size = 0x1000, scoped, tag = 'scoped mem for output reshape']
    %v2 = vld [vmem:[%s0] sm:$0x1]
    %vm3 = vcmask 130048
    %4 = vst.msk [vmem:[#allocation0] sm:$0x1] %vm3, %v2
    %s5 = scalar_lea.vmem %s0, 7
    %v6 = vld [vmem:[%s5] sm:$0x1]
    %7 = vrot.lane.b32.xlu0 %v6, 112
    %v8 = vpop.permute.xlu0 %7
    %vm9 = vcmask 1048448
    %10 = vst.msk [vmem:[#allocation0] sm:$0x1] %vm9, %v8
    %s11 = scalar_lea.vmem %s0, 6
    %v12 = vld [vmem:[%s11] sm:$0x1]
    %13 = vrot.lane.b32.xlu0 %v12, 96
    %v14 = vpop.permute.xlu0 %13
    %vm15 = vcmask 917248
    %16 = vst.msk [vmem:[#allocation0] sm:$0x1] %vm15, %v14
    %s17 = scalar_lea.vmem %s0, 5
    %v18 = vld [vmem:[%s17] sm:$0x1]
    %19 = vrot.lane.b32.xlu0 %v18, 80
    %v20 = vpop.permute.xlu0 %19
    %vm21 = vcmask 786048
    %22 = vst.msk [vmem:[#allocation0] sm:$0x1] %vm21, %v20
    %s23 = scalar_lea.vmem %s0, 4
    %v24 = vld [vmem:[%s23] sm:$0x1]
    %25 = vrot.lane.b32.xlu0 %v24, 64
    %v26 = vpop.permute.xlu0 %25
    %vm27 = vcmask 654848
    %28 = vst.msk [vmem:[#allocation0] sm:$0x1] %vm27, %v26
    %s29 = scalar_lea.vmem %s0, 3
    %v30 = vld [vmem:[%s29] sm:$0x1]
    %31 = vrot.lane.b32.xlu0 %v30, 48
    %v32 = vpop.permute.xlu0 %31
    %vm33 = vcmask 523648
    %34 = vst.msk [vmem:[#allocation0] sm:$0x1] %vm33, %v32
    %s35 = scalar_lea.vmem %s0, 2
    %v36 = vld [vmem:[%s35] sm:$0x1]
    %37 = vrot.lane.b32.xlu0 %v36, 32
    %v38 = vpop.permute.xlu0 %37
    %vm39 = vcmask 392448
    %40 = vst.msk [vmem:[#allocation0] sm:$0x1] %vm39, %v38
    %s41 = scalar_lea.vmem %s0, 1
    %v42 = vld [vmem:[%s41] sm:$0x1]
    %43 = vrot.lane.b32.xlu0 %v42, 16
    %v44 = vpop.permute.xlu0 %43
    %vm45 = vcmask 261248
    %46 = vst.msk [vmem:[#allocation0] sm:$0x1] %vm45, %v44
    %s48 = sshllo.u32 0, 1
    %v50 = vld [vmem:[#allocation0] sm:%s48]
    %s51 = sshllo.u32 0, 1
    %52 = vst [vmem:[%s1] sm:%s51] %v50

// kernel: st_att_block.1
$region0: #{st_att_block.1}
  #allocation0 [shape = 'u32[]', space=smem, size = 0x4, offset = 0x4, fixed_abs, tag = 'smem constant byte address 0x4 - core index']
  #allocation1 [shape = 'u32[144,128]{1,0:T(1,128)}', space=vmem, size = 0x12000, scoped, tag = 'internal scratch']
  %s0 = inlined_call_operand.vmem [shape: f32[2,128,36], index: 0, kind: input, shape index: {}]
  %s1 = inlined_call_operand.vmem [shape: f32[128,128], index: 1, kind: input, shape index: {}]
  %s2 = inlined_call_operand.vmem [shape: f32[128,128], index: 2, kind: input, shape index: {}]
  %s3 = inlined_call_operand.vmem [shape: bf16[36,96], index: 3, kind: input, shape index: {}]
  %s4 = inlined_call_operand.vmem [shape: f32[1,96], index: 4, kind: input, shape index: {}]
  %s5 = inlined_call_operand.vmem [shape: bf16[32,32], index: 5, kind: input, shape index: {}]
  %s6 = inlined_call_operand.vmem [shape: f32[1,32], index: 6, kind: input, shape index: {}]
  %s7 = inlined_call_operand.vmem [shape: bf16[32,16], index: 7, kind: input, shape index: {}]
  %s8 = inlined_call_operand.vmem [shape: f32[1,16], index: 8, kind: input, shape index: {}]
  %s9 = inlined_call_operand.vmem [shape: bf16[16,16], index: 9, kind: input, shape index: {}]
  %s10 = inlined_call_operand.vmem [shape: f32[1,16], index: 10, kind: input, shape index: {}]
  %s11 = inlined_call_operand.vmem [shape: bf16[16,20], index: 11, kind: input, shape index: {}]
  %s12 = inlined_call_operand.vmem [shape: f32[1,20], index: 12, kind: input, shape index: {}]
  %s13 = inlined_call_operand.hbm [shape: f32[2,128,20], index: 13, kind: output, shape index: {}]
  %s14 = sld [smem:[#allocation0]]
  $region85: #{st_att_block.1} parent=0
    _
  %s16 = ssub.s32 1, %s14
  %s17 = scalar_select 0, %s16, %s14
  $region1: #{st_att_block.1} parent=0
    #allocation2 [shape = 'u8[131072]{0}', space=vmem, size = 0x20000, scoped, tag = 'output window, operand 0']
    #allocation3 [shape = 's32[2]{0}', space=sflag, size = 0x8, scoped, tag = 'scoped memory for st_att_block.1']
    %18 = vsyncpa [#allocation3], 0
    %s19 = scalar_lea.sflag [#allocation3], 1
    %20 = vsyncpa %s19, 0
    loop: start=0, step=1, limit=4
    $region2: #{st_att_block.1} parent=1 // loop_pre_header
      _
    $region3: #{st_att_block.1} parent=1 // loop_header
      %s22 = sphi 0, %s26
      %p23 = scmp.ge.s32.totalorder %s22, 4
      %s32 = sphi 0, %s34
      %s35 = sphi 0, %s32
      %s36 = sphi 0, %s35
      %s52 = sphi 0, %s36
      %s56 = sphi 0, %s56
      %s58 = sphi 0, %s56
      %s59 = sphi 0, %s58
      %s73 = sphi 0, %s59
      %s77 = sphi 0, %s77
      %s79 = sphi 0, %s77
      %s80 = sphi 0, %s79
      %s94 = sphi 0, %s80
      %s98 = sphi 0, %s98
      %s100 = sphi 0, %s98
      %s101 = sphi 0, %s100
      %s115 = sphi 0, %s101
      %s119 = sphi 0, %s119
      %s121 = sphi 0, %s119
      %s122 = sphi 0, %s121
      %s136 = sphi 0, %s122
      %s140 = sphi 0, %s140
      %s142 = sphi 0, %s140
      %s143 = sphi 0, %s142
      %s157 = sphi 0, %s143
      %s161 = sphi 0, %s161
      %s163 = sphi 0, %s161
      %s164 = sphi 0, %s163
      %s178 = sphi 0, %s164
      %s182 = sphi 0, %s182
      %s184 = sphi 0, %s182
      %s185 = sphi 0, %s184
      %s199 = sphi 0, %s185
      %s203 = sphi 0, %s203
      %s205 = sphi 0, %s203
      %s206 = sphi 0, %s205
      %s220 = sphi 0, %s206
      %s224 = sphi 0, %s224
      %s226 = sphi 0, %s224
      %s227 = sphi 0, %s226
      %s241 = sphi 0, %s227
      %s245 = sphi 0, %s245
      %s247 = sphi 0, %s245
      %s248 = sphi 0, %s247
      %s262 = sphi 0, %s248
      %s266 = sphi 0, %s266
      %s268 = sphi 0, %s266
      %s269 = sphi 0, %s268
      %s283 = sphi 0, %s269
      %s287 = sphi 0, %s287
      %s289 = sphi 0, %s287
      %s290 = sphi 0, %s289
      %s304 = sphi 0, %s290
      %s310 = sphi 0, %s312
      %s313 = sphi 0, %s310
      %s314 = sphi 0, %s313
      %s330 = sphi 0, %s314
    $region4: #{st_att_block.1} parent=1 // loop_header_branch
      %25 = sbr.rel (%p23) target = $region8
    $region5: #{st_att_block.1} parent=1 // loop_body
      %s27 = ssub.s32 %s22, 1
      %s28 = ssub.s32 %s22, 2
      %s29 = sadd.s32 %s22, 1
      %s30 = ssub.s32 %s22, %s29
      %p31 = scmp.eq.s32.totalorder %s30, 0
      %s33 = sadd.s32 %s32, 1
      %s34 = scalar_select %p31, %s32, %s33
      %p37 = pneg %p31
      %p38 = scmp.eq.s32.totalorder %s22, 1
      %p39 = por %p37, %p38
      %p40 = scmp.ne.s32.totalorder %s32, %s35
      %p41 = scmp.eq.s32.totalorder %s22, 0
      %p42 = por %p40, %p41
      %p43 = scmp.ne.s32.totalorder %s32, %s35
      %p44 = scmp.eq.s32.totalorder %s27, 1
      %p45 = por %p43, %p44
      %p46 = scmp.ne.s32.totalorder %s35, %s36
      %p47 = scmp.eq.s32.totalorder %s27, 0
      %p48 = por %p46, %p47
      %p49 = scmp.ne.s32.totalorder %s35, %s36
      %p50 = scmp.eq.s32.totalorder %s28, 1
      %p51 = por %p49, %p50
      %p53 = scmp.ne.s32.totalorder %s36, %s52
      %p54 = scmp.eq.s32.totalorder %s28, 0
      %p55 = por %p53, %p54
      %s57 = sadd.s32 %s56, 1
      %p60 = scmp.eq.s32.totalorder %s22, 1
      %p61 = scmp.ne.s32.totalorder %s56, %s58
      %p62 = scmp.eq.s32.totalorder %s22, 0
      %p63 = por %p61, %p62
      %p64 = scmp.ne.s32.totalorder %s56, %s58
      %p65 = scmp.eq.s32.totalorder %s27, 1
      %p66 = por %p64, %p65
      %p67 = scmp.ne.s32.totalorder %s58, %s59
      %p68 = scmp.eq.s32.totalorder %s27, 0
      %p69 = por %p67, %p68
      %p70 = scmp.ne.s32.totalorder %s58, %s59
      %p71 = scmp.eq.s32.totalorder %s28, 1
      %p72 = por %p70, %p71
      %p74 = scmp.ne.s32.totalorder %s59, %s73
      %p75 = scmp.eq.s32.totalorder %s28, 0
      %p76 = por %p74, %p75
      %s78 = sadd.s32 %s77, 1
      %p81 = scmp.eq.s32.totalorder %s22, 1
      %p82 = scmp.ne.s32.totalorder %s77, %s79
      %p83 = scmp.eq.s32.totalorder %s22, 0
      %p84 = por %p82, %p83
      %p85 = scmp.ne.s32.totalorder %s77, %s79
      %p86 = scmp.eq.s32.totalorder %s27, 1
      %p87 = por %p85, %p86
      %p88 = scmp.ne.s32.totalorder %s79, %s80
      %p89 = scmp.eq.s32.totalorder %s27, 0
      %p90 = por %p88, %p89
      %p91 = scmp.ne.s32.totalorder %s79, %s80
      %p92 = scmp.eq.s32.totalorder %s28, 1
      %p93 = por %p91, %p92
      %p95 = scmp.ne.s32.totalorder %s80, %s94
      %p96 = scmp.eq.s32.totalorder %s28, 0
      %p97 = por %p95, %p96
      %s99 = sadd.s32 %s98, 1
      %p102 = scmp.eq.s32.totalorder %s22, 1
      %p103 = scmp.ne.s32.totalorder %s98, %s100
      %p104 = scmp.eq.s32.totalorder %s22, 0
      %p105 = por %p103, %p104
      %p106 = scmp.ne.s32.totalorder %s98, %s100
      %p107 = scmp.eq.s32.totalorder %s27, 1
      %p108 = por %p106, %p107
      %p109 = scmp.ne.s32.totalorder %s100, %s101
      %p110 = scmp.eq.s32.totalorder %s27, 0
      %p111 = por %p109, %p110
      %p112 = scmp.ne.s32.totalorder %s100, %s101
      %p113 = scmp.eq.s32.totalorder %s28, 1
      %p114 = por %p112, %p113
      %p116 = scmp.ne.s32.totalorder %s101, %s115
      %p117 = scmp.eq.s32.totalorder %s28, 0
      %p118 = por %p116, %p117
      %s120 = sadd.s32 %s119, 1
      %p123 = scmp.eq.s32.totalorder %s22, 1
      %p124 = scmp.ne.s32.totalorder %s119, %s121
      %p125 = scmp.eq.s32.totalorder %s22, 0
      %p126 = por %p124, %p125
      %p127 = scmp.ne.s32.totalorder %s119, %s121
      %p128 = scmp.eq.s32.totalorder %s27, 1
      %p129 = por %p127, %p128
      %p130 = scmp.ne.s32.totalorder %s121, %s122
      %p131 = scmp.eq.s32.totalorder %s27, 0
      %p132 = por %p130, %p131
      %p133 = scmp.ne.s32.totalorder %s121, %s122
      %p134 = scmp.eq.s32.totalorder %s28, 1
      %p135 = por %p133, %p134
      %p137 = scmp.ne.s32.totalorder %s122, %s136
      %p138 = scmp.eq.s32.totalorder %s28, 0
      %p139 = por %p137, %p138
      %s141 = sadd.s32 %s140, 1
      %p144 = scmp.eq.s32.totalorder %s22, 1
      %p145 = scmp.ne.s32.totalorder %s140, %s142
      %p146 = scmp.eq.s32.totalorder %s22, 0
      %p147 = por %p145, %p146
      %p148 = scmp.ne.s32.totalorder %s140, %s142
      %p149 = scmp.eq.s32.totalorder %s27, 1
      %p150 = por %p148, %p149
      %p151 = scmp.ne.s32.totalorder %s142, %s143
      %p152 = scmp.eq.s32.totalorder %s27, 0
      %p153 = por %p151, %p152
      %p154 = scmp.ne.s32.totalorder %s142, %s143
      %p155 = scmp.eq.s32.totalorder %s28, 1
      %p156 = por %p154, %p155
      %p158 = scmp.ne.s32.totalorder %s143, %s157
      %p159 = scmp.eq.s32.totalorder %s28, 0
      %p160 = por %p158, %p159
      %s162 = sadd.s32 %s161, 1
      %p165 = scmp.eq.s32.totalorder %s22, 1
      %p166 = scmp.ne.s32.totalorder %s161, %s163
      %p167 = scmp.eq.s32.totalorder %s22, 0
      %p168 = por %p166, %p167
      %p169 = scmp.ne.s32.totalorder %s161, %s163
      %p170 = scmp.eq.s32.totalorder %s27, 1
      %p171 = por %p169, %p170
      %p172 = scmp.ne.s32.totalorder %s163, %s164
      %p173 = scmp.eq.s32.totalorder %s27, 0
      %p174 = por %p172, %p173
      %p175 = scmp.ne.s32.totalorder %s163, %s164
      %p176 = scmp.eq.s32.totalorder %s28, 1
      %p177 = por %p175, %p176
      %p179 = scmp.ne.s32.totalorder %s164, %s178
      %p180 = scmp.eq.s32.totalorder %s28, 0
      %p181 = por %p179, %p180
      %s183 = sadd.s32 %s182, 1
      %p186 = scmp.eq.s32.totalorder %s22, 1
      %p187 = scmp.ne.s32.totalorder %s182, %s184
      %p188 = scmp.eq.s32.totalorder %s22, 0
      %p189 = por %p187, %p188
      %p190 = scmp.ne.s32.totalorder %s182, %s184
      %p191 = scmp.eq.s32.totalorder %s27, 1
      %p192 = por %p190, %p191
      %p193 = scmp.ne.s32.totalorder %s184, %s185
      %p194 = scmp.eq.s32.totalorder %s27, 0
      %p195 = por %p193, %p194
      %p196 = scmp.ne.s32.totalorder %s184, %s185
      %p197 = scmp.eq.s32.totalorder %s28, 1
      %p198 = por %p196, %p197
      %p200 = scmp.ne.s32.totalorder %s185, %s199
      %p201 = scmp.eq.s32.totalorder %s28, 0
      %p202 = por %p200, %p201
      %s204 = sadd.s32 %s203, 1
      %p207 = scmp.eq.s32.totalorder %s22, 1
      %p208 = scmp.ne.s32.totalorder %s203, %s205
      %p209 = scmp.eq.s32.totalorder %s22, 0
      %p210 = por %p208, %p209
      %p211 = scmp.ne.s32.totalorder %s203, %s205
      %p212 = scmp.eq.s32.totalorder %s27, 1
      %p213 = por %p211, %p212
      %p214 = scmp.ne.s32.totalorder %s205, %s206
      %p215 = scmp.eq.s32.totalorder %s27, 0
      %p216 = por %p214, %p215
      %p217 = scmp.ne.s32.totalorder %s205, %s206
      %p218 = scmp.eq.s32.totalorder %s28, 1
      %p219 = por %p217, %p218
      %p221 = scmp.ne.s32.totalorder %s206, %s220
      %p222 = scmp.eq.s32.totalorder %s28, 0
      %p223 = por %p221, %p222
      %s225 = sadd.s32 %s224, 1
      %p228 = scmp.eq.s32.totalorder %s22, 1
      %p229 = scmp.ne.s32.totalorder %s224, %s226
      %p230 = scmp.eq.s32.totalorder %s22, 0
      %p231 = por %p229, %p230
      %p232 = scmp.ne.s32.totalorder %s224, %s226
      %p233 = scmp.eq.s32.totalorder %s27, 1
      %p234 = por %p232, %p233
      %p235 = scmp.ne.s32.totalorder %s226, %s227
      %p236 = scmp.eq.s32.totalorder %s27, 0
      %p237 = por %p235, %p236
      %p238 = scmp.ne.s32.totalorder %s226, %s227
      %p239 = scmp.eq.s32.totalorder %s28, 1
      %p240 = por %p238, %p239
      %p242 = scmp.ne.s32.totalorder %s227, %s241
      %p243 = scmp.eq.s32.totalorder %s28, 0
      %p244 = por %p242, %p243
      %s246 = sadd.s32 %s245, 1
      %p249 = scmp.eq.s32.totalorder %s22, 1
      %p250 = scmp.ne.s32.totalorder %s245, %s247
      %p251 = scmp.eq.s32.totalorder %s22, 0
      %p252 = por %p250, %p251
      %p253 = scmp.ne.s32.totalorder %s245, %s247
      %p254 = scmp.eq.s32.totalorder %s27, 1
      %p255 = por %p253, %p254
      %p256 = scmp.ne.s32.totalorder %s247, %s248
      %p257 = scmp.eq.s32.totalorder %s27, 0
      %p258 = por %p256, %p257
      %p259 = scmp.ne.s32.totalorder %s247, %s248
      %p260 = scmp.eq.s32.totalorder %s28, 1
      %p261 = por %p259, %p260
      %p263 = scmp.ne.s32.totalorder %s248, %s262
      %p264 = scmp.eq.s32.totalorder %s28, 0
      %p265 = por %p263, %p264
      %s267 = sadd.s32 %s266, 1
      %p270 = scmp.eq.s32.totalorder %s22, 1
      %p271 = scmp.ne.s32.totalorder %s266, %s268
      %p272 = scmp.eq.s32.totalorder %s22, 0
      %p273 = por %p271, %p272
      %p274 = scmp.ne.s32.totalorder %s266, %s268
      %p275 = scmp.eq.s32.totalorder %s27, 1
      %p276 = por %p274, %p275
      %p277 = scmp.ne.s32.totalorder %s268, %s269
      %p278 = scmp.eq.s32.totalorder %s27, 0
      %p279 = por %p277, %p278
      %p280 = scmp.ne.s32.totalorder %s268, %s269
      %p281 = scmp.eq.s32.totalorder %s28, 1
      %p282 = por %p280, %p281
      %p284 = scmp.ne.s32.totalorder %s269, %s283
      %p285 = scmp.eq.s32.totalorder %s28, 0
      %p286 = por %p284, %p285
      %s288 = sadd.s32 %s287, 1
      %p291 = scmp.eq.s32.totalorder %s22, 1
      %p292 = scmp.ne.s32.totalorder %s287, %s289
      %p293 = scmp.eq.s32.totalorder %s22, 0
      %p294 = por %p292, %p293
      %p295 = scmp.ne.s32.totalorder %s287, %s289
      %p296 = scmp.eq.s32.totalorder %s27, 1
      %p297 = por %p295, %p296
      %p298 = scmp.ne.s32.totalorder %s289, %s290
      %p299 = scmp.eq.s32.totalorder %s27, 0
      %p300 = por %p298, %p299
      %p301 = scmp.ne.s32.totalorder %s289, %s290
      %p302 = scmp.eq.s32.totalorder %s28, 1
      %p303 = por %p301, %p302
      %p305 = scmp.ne.s32.totalorder %s290, %s304
      %p306 = scmp.eq.s32.totalorder %s28, 0
      %p307 = por %p305, %p306
      %s308 = ssub.s32 %s22, %s29
      %p309 = scmp.eq.s32.totalorder %s308, 0
      %s311 = sadd.s32 %s310, 1
      %s312 = scalar_select %p309, %s310, %s311
      %p315 = pneg %p309
      %p316 = scmp.eq.s32.totalorder %s22, 1
      %p317 = por %p315, %p316
      %p318 = scmp.ne.s32.totalorder %s310, %s313
      %p319 = scmp.eq.s32.totalorder %s22, 0
      %p320 = por %p318, %p319
      %p321 = scmp.ne.s32.totalorder %s310, %s313
      %p322 = scmp.eq.s32.totalorder %s27, 1
      %p323 = por %p321, %p322
      %p324 = scmp.ne.s32.totalorder %s313, %s314
      %p325 = scmp.eq.s32.totalorder %s27, 0
      %p326 = por %p324, %p325
      %p327 = scmp.ne.s32.totalorder %s313, %s314
      %p328 = scmp.eq.s32.totalorder %s28, 1
      %p329 = por %p327, %p328
      %p331 = scmp.ne.s32.totalorder %s314, %s330
      %p332 = scmp.eq.s32.totalorder %s28, 0
      %p333 = por %p331, %p332
      %p334 = scmp.le.s32.totalorder 1, %s22
      %p335 = scmp.lt.s32.totalorder %s22, 3
      %p336 = pnand %p334, %p335
      %p337 = pneg %p336
      // Predicated region
      $region9: #{st_att_block.1} parent=5 // pred_check
        _
      $region10: #{st_att_block.1} parent=5 // pred_check_branch
        %339 = sbr.rel (%p336) target = $region12
      $region11: #{st_att_block.1} parent=5 // pred_region
        %s340 = ssub.s32 %s22, 1
        // Predicated region
        $region13: #{st_att_block.1} parent=11 // pred_check
          %p341 = pneg %p69
        $region14: #{st_att_block.1} parent=11 // pred_check_branch
          %343 = sbr.rel (%p341) target = $region16
        $region15: #{st_att_block.1} parent=11 // pred_region
          _
        $region16: #{st_att_block.1} parent=11 // pred_fallthru
          _
        // Predicated region
        $region17: #{st_att_block.1} parent=11 // pred_check
          %p344 = pneg %p90
        $region18: #{st_att_block.1} parent=11 // pred_check_branch
          %346 = sbr.rel (%p344) target = $region20
        $region19: #{st_att_block.1} parent=11 // pred_region
          _
        $region20: #{st_att_block.1} parent=11 // pred_fallthru
          _
        // Predicated region
        $region21: #{st_att_block.1} parent=11 // pred_check
          %p347 = pneg %p111
        $region22: #{st_att_block.1} parent=11 // pred_check_branch
          %349 = sbr.rel (%p347) target = $region24
        $region23: #{st_att_block.1} parent=11 // pred_region
          _
        $region24: #{st_att_block.1} parent=11 // pred_fallthru
          _
        // Predicated region
        $region25: #{st_att_block.1} parent=11 // pred_check
          %p350 = pneg %p132
        $region26: #{st_att_block.1} parent=11 // pred_check_branch
          %352 = sbr.rel (%p350) target = $region28
        $region27: #{st_att_block.1} parent=11 // pred_region
          _
        $region28: #{st_att_block.1} parent=11 // pred_fallthru
          _
        // Predicated region
        $region29: #{st_att_block.1} parent=11 // pred_check
          %p353 = pneg %p153
        $region30: #{st_att_block.1} parent=11 // pred_check_branch
          %355 = sbr.rel (%p353) target = $region32
        $region31: #{st_att_block.1} parent=11 // pred_region
          _
        $region32: #{st_att_block.1} parent=11 // pred_fallthru
          _
        // Predicated region
        $region33: #{st_att_block.1} parent=11 // pred_check
          %p356 = pneg %p174
        $region34: #{st_att_block.1} parent=11 // pred_check_branch
          %358 = sbr.rel (%p356) target = $region36
        $region35: #{st_att_block.1} parent=11 // pred_region
          _
        $region36: #{st_att_block.1} parent=11 // pred_fallthru
          _
        // Predicated region
        $region37: #{st_att_block.1} parent=11 // pred_check
          %p359 = pneg %p195
        $region38: #{st_att_block.1} parent=11 // pred_check_branch
          %361 = sbr.rel (%p359) target = $region40
        $region39: #{st_att_block.1} parent=11 // pred_region
          _
        $region40: #{st_att_block.1} parent=11 // pred_fallthru
          _
        // Predicated region
        $region41: #{st_att_block.1} parent=11 // pred_check
          %p362 = pneg %p216
        $region42: #{st_att_block.1} parent=11 // pred_check_branch
          %364 = sbr.rel (%p362) target = $region44
        $region43: #{st_att_block.1} parent=11 // pred_region
          _
        $region44: #{st_att_block.1} parent=11 // pred_fallthru
          _
        // Predicated region
        $region45: #{st_att_block.1} parent=11 // pred_check
          %p365 = pneg %p237
        $region46: #{st_att_block.1} parent=11 // pred_check_branch
          %367 = sbr.rel (%p365) target = $region48
        $region47: #{st_att_block.1} parent=11 // pred_region
          _
        $region48: #{st_att_block.1} parent=11 // pred_fallthru
          _
        // Predicated region
        $region49: #{st_att_block.1} parent=11 // pred_check
          %p368 = pneg %p258
        $region50: #{st_att_block.1} parent=11 // pred_check_branch
          %370 = sbr.rel (%p368) target = $region52
        $region51: #{st_att_block.1} parent=11 // pred_region
          _
        $region52: #{st_att_block.1} parent=11 // pred_fallthru
          _
        // Predicated region
        $region53: #{st_att_block.1} parent=11 // pred_check
          %p371 = pneg %p279
        $region54: #{st_att_block.1} parent=11 // pred_check_branch
          %373 = sbr.rel (%p371) target = $region56
        $region55: #{st_att_block.1} parent=11 // pred_region
          _
        $region56: #{st_att_block.1} parent=11 // pred_fallthru
          _
        // Predicated region
        $region57: #{st_att_block.1} parent=11 // pred_check
          %p374 = pneg %p300
        $region58: #{st_att_block.1} parent=11 // pred_check_branch
          %376 = sbr.rel (%p374) target = $region60
        $region59: #{st_att_block.1} parent=11 // pred_region
          _
        $region60: #{st_att_block.1} parent=11 // pred_fallthru
          _
      $region12: #{st_att_block.1} parent=5 // pred_fallthru
        _
      %p377 = scmp.lt.s32.totalorder %s22, 2
      // Predicated region
      $region61: #{st_att_block.1} parent=5 // pred_check
        %p378 = pneg %p377
      $region62: #{st_att_block.1} parent=5 // pred_check_branch
        %380 = sbr.rel (%p378) target = $region64
      $region63: #{st_att_block.1} parent=5 // pred_region
        // Predicated region
        $region65: #{st_att_block.1} parent=63 // pred_check
          %p381 = pneg %p42
        $region66: #{st_att_block.1} parent=63 // pred_check_branch
          %383 = sbr.rel (%p381) target = $region68
        $region67: #{st_att_block.1} parent=63 // pred_region
          %p384 = scmp.lt.s32.totalorder %s22, 1
          %s385 = scalar_select %p384, %s22, 1
          %s386 = smul.addr %s385, 16
          %s387 = smul.addr %s386, 8
          %s388 = scalar_lea.vmem %s0, %s387
        $region68: #{st_att_block.1} parent=63 // pred_fallthru
          _
      $region64: #{st_att_block.1} parent=5 // pred_fallthru
        _
      %p389 = scmp.le.s32.totalorder 1, %s22
      %p390 = scmp.lt.s32.totalorder %s22, 3
      %p391 = pnand %p389, %p390
      %p392 = pneg %p391
      // Predicated region
      $region69: #{st_att_block.1} parent=5 // pred_check
        _
      $region70: #{st_att_block.1} parent=5 // pred_check_branch
        %394 = sbr.rel (%p391) target = $region72
      $region71: #{st_att_block.1} parent=5 // pred_region
        %s395 = ssub.s32 %s22, 1
        %p396 = scmp.lt.s32.totalorder %s27, 1
        %s397 = scalar_select %p396, %s27, 1
        %s398 = smul.addr %s397, 16
        %s399 = smul.addr %s398, 8
        %s400 = scalar_lea.vmem %s0, %s399
        %p401 = pneg %p48
        %p402 = pneg %p45
        %p403 = pneg %p69
        %p404 = pneg %p66
        %p405 = pneg %p90
        %p406 = pneg %p87
        %p407 = pneg %p111
        %p408 = pneg %p108
        %p409 = pneg %p132
        %p410 = pneg %p129
        %p411 = pneg %p153
        %p412 = pneg %p150
        %p413 = pneg %p174
        %p414 = pneg %p171
        %p415 = pneg %p195
        %p416 = pneg %p192
        %p417 = pneg %p216
        %p418 = pneg %p213
        %p419 = pneg %p237
        %p420 = pneg %p234
        %p421 = pneg %p258
        %p422 = pneg %p255
        %p423 = pneg %p279
        %p424 = pneg %p276
        %p425 = pneg %p300
        %p426 = pneg %p297
        %p427 = pneg %p326
        %p428 = pneg %p323
        %s429 = sand.u32 %s313, 1
        %s430 = scalar_lea.sflag [#allocation3], %s429
        %s431 = sand.u32 %s313, 1
        %s432 = smul.addr %s431, 128
        %s433 = scalar_lea.vmem [#allocation2], %s432
        %p434 = scmp.lt.s32.totalorder %s27, 1
        %s435 = scalar_select %p434, %s27, 1
        %s436 = smul.addr %s435, 16
        %s437 = smul.addr %s436, 8
        %s438 = scalar_lea.vmem %s0, %s437
        %v440 = vld [vmem:[%s438] sm:$0xff]
        %v441 = vld [vmem:[%s438 + $0x8] sm:$0xff]
        %v442 = vld [vmem:[%s438 + $0x10] sm:$0xff]
        %v443 = vld [vmem:[%s438 + $0x18] sm:$0xff]
        %v444 = vld [vmem:[%s438 + $0x20] sm:$0xff]
        %v445 = vld [vmem:[%s438 + $0x28] sm:$0xff]
        %v446 = vld [vmem:[%s438 + $0x30] sm:$0xff]
        %v447 = vld [vmem:[%s438 + $0x38] sm:$0xff]
        %v448 = vld [vmem:[%s438 + $0x40] sm:$0xff]
        %v449 = vld [vmem:[%s438 + $0x48] sm:$0xff]
        %v450 = vld [vmem:[%s438 + $0x50] sm:$0xff]
        %v451 = vld [vmem:[%s438 + $0x58] sm:$0xff]
        %v452 = vld [vmem:[%s438 + $0x60] sm:$0xff]
        %v453 = vld [vmem:[%s438 + $0x68] sm:$0xff]
        %v454 = vld [vmem:[%s438 + $0x70] sm:$0xff]
        %v455 = vld [vmem:[%s438 + $0x78] sm:$0xff]
        %v456 = vld [vmem:[%s1] sm:$0xff]
        %v457 = vld [vmem:[%s1 + $0x8] sm:$0xff]
        %v458 = vld [vmem:[%s1 + $0x10] sm:$0xff]
        %v459 = vld [vmem:[%s1 + $0x18] sm:$0xff]
        %v460 = vld [vmem:[%s1 + $0x20] sm:$0xff]
        %v461 = vld [vmem:[%s1 + $0x28] sm:$0xff]
        %v462 = vld [vmem:[%s1 + $0x30] sm:$0xff]
        %v463 = vld [vmem:[%s1 + $0x38] sm:$0xff]
        %v464 = vld [vmem:[%s1 + $0x40] sm:$0xff]
        %v465 = vld [vmem:[%s1 + $0x48] sm:$0xff]
        %v466 = vld [vmem:[%s1 + $0x50] sm:$0xff]
        %v467 = vld [vmem:[%s1 + $0x58] sm:$0xff]
        %v468 = vld [vmem:[%s1 + $0x60] sm:$0xff]
        %v469 = vld [vmem:[%s1 + $0x68] sm:$0xff]
        %v470 = vld [vmem:[%s1 + $0x70] sm:$0xff]
        %v471 = vld [vmem:[%s1 + $0x78] sm:$0xff]
        %v472 = vld [vmem:[%s2] sm:$0xff]
        %v473 = vld [vmem:[%s2 + $0x8] sm:$0xff]
        %v474 = vld [vmem:[%s2 + $0x10] sm:$0xff]
        %v475 = vld [vmem:[%s2 + $0x18] sm:$0xff]
        %v476 = vld [vmem:[%s2 + $0x20] sm:$0xff]
        %v477 = vld [vmem:[%s2 + $0x28] sm:$0xff]
        %v478 = vld [vmem:[%s2 + $0x30] sm:$0xff]
        %v479 = vld [vmem:[%s2 + $0x38] sm:$0xff]
        %v480 = vld [vmem:[%s2 + $0x40] sm:$0xff]
        %v481 = vld [vmem:[%s2 + $0x48] sm:$0xff]
        %v482 = vld [vmem:[%s2 + $0x50] sm:$0xff]
        %v483 = vld [vmem:[%s2 + $0x58] sm:$0xff]
        %v484 = vld [vmem:[%s2 + $0x60] sm:$0xff]
        %v485 = vld [vmem:[%s2 + $0x68] sm:$0xff]
        %v486 = vld [vmem:[%s2 + $0x70] sm:$0xff]
        %v487 = vld [vmem:[%s2 + $0x78] sm:$0xff]
        %v488 = vpack.c.bf16 %v441, %v440
        %v489 = vpack.c.bf16 %v443, %v442
        %v490 = vpack.c.bf16 %v445, %v444
        %v491 = vpack.c.bf16 %v447, %v446
        %v492 = vpack.c.bf16 %v449, %v448
        %v493 = vpack.c.bf16 %v451, %v450
        %v494 = vpack.c.bf16 %v453, %v452
        %v495 = vpack.c.bf16 %v455, %v454
        %v496 = vld [vmem:[%s3] sm:$0xf]
        %v497 = vld [vmem:[%s3 + $0x4] sm:$0xf]
        %v498 = vld [vmem:[%s3 + $0x8] sm:$0xf]
        %v499 = vld [vmem:[%s3 + $0xc] sm:$0xf]
        %v500 = vld [vmem:[%s3 + $0x10] sm:$0x3]
        %v501 = vld [vmem:[%s4] sm:$0x1]
        %v503 = vlaneseq
        %v504 = vshrl.u32 %v503, 7
        %v505 = vsub.s32 0, %v504
        %v506 = vrot.slane %v501, %v505
        %v513 = vunpack.c.l.b16 %v496
        %v514 = vunpack.c.l.b16 %v497
        %v515 = vunpack.c.l.b16 %v498
        %v516 = vunpack.c.l.b16 %v499
        %v517 = vunpack.c.l.b16 %v500
        %v518 = vpack.c.b16 %v514, %v513
        %v519 = vpack.c.b16 %v516, %v515
        %v520 = vpack.c.b16 %v517, %v517
        %vm523 = vcmask 293888
        %v525 = vsel %vm523, %v488, 0
        %v528 = vsel %vm523, %v489, 0
        %v531 = vsel %vm523, %v490, 0
        %v534 = vsel %vm523, %v491, 0
        %v537 = vsel %vm523, %v492, 0
        %v540 = vsel %vm523, %v493, 0
        %v543 = vsel %vm523, %v494, 0
        %v546 = vsel %vm523, %v495, 0
        %vm548 = vcmask 1041408
        %v550 = vsel %vm548, %v520, 0
        %552 = vmatprep.subr.bf16.mxu0 0
        %553 = vmatpush1.bf16.msra.mxu0 %v518
        %554 = vmatprep.subr.bf16.mxu0 0
        %555 = vmatpush1.bf16.msra.mxu0 %v519
        %556 = vmatprep.subr.bf16.mxu0 0
        %557 = vmatpush1.bf16.msra.mxu0 %v550
        %558 = vmatprep.subr.bf16.mxu0 0
        %559 = vmatpush1.bf16.msra.mxu0 0
        %560 = vmatprep.subr.bf16.mxu0 0
        %561 = vmatpush1.bf16.msra.mxu0 0
        %562 = vmatprep.subr.bf16.mxu0 0
        %563 = vmatpush1.bf16.msra.mxu0 0
        %564 = vmatprep.subr.bf16.mxu0 0
        %565 = vmatpush1.bf16.msra.mxu0 0
        %566 = vmatprep.subr.bf16.mxu0 0
        %567 = vmatpush1.bf16.msra.mxu0 0
        %568 = vmatprep.subr.bf16.mxu0 0
        %569 = vmatpush1.bf16.msra.mxu0 0
        %570 = vmatprep.subr.bf16.mxu0 0
        %571 = vmatpush1.bf16.msra.mxu0 0
        %572 = vmatprep.subr.bf16.mxu0 0
        %573 = vmatpush1.bf16.msra.mxu0 0
        %574 = vmatprep.subr.bf16.mxu0 0
        %575 = vmatpush1.bf16.msra.mxu0 0
        %576 = vmatprep.subr.bf16.mxu0 0
        %577 = vmatpush1.bf16.msra.mxu0 0
        %578 = vmatprep.subr.bf16.mxu0 0
        %579 = vmatpush1.bf16.msra.mxu0 0
        %580 = vmatprep.subr.bf16.mxu0 0
        %581 = vmatpush1.bf16.msra.mxu0 0
        %582 = vmatprep.subr.bf16.mxu0 0
        %583 = vmatpush1.bf16.msra.mxu0 0
        %584 = vmatprep.mubr.bf16.mxu0 0
        %585 = vmatmul.mubr.bf16.gmra.mrb[0].mxu0 %v525
        %v586 = vpop.f32.mrb[0].mxu0
        %v587 = vadd.f32 %v506, %v586
        %v588 = vpop.f32.mrb[0].mxu0
        %v589 = vpop.f32.mrb[0].mxu0
        %v590 = vadd.f32 %v506, %v589
        %v591 = vpop.f32.mrb[0].mxu0
        %592 = vmatprep.mubr.bf16.mxu0 0
        %593 = vmatmul.mubr.bf16.gmra.mrb[0].mxu0 %v528
        %v594 = vpop.f32.mrb[0].mxu0
        %v595 = vadd.f32 %v506, %v594
        %v596 = vpop.f32.mrb[0].mxu0
        %v597 = vpop.f32.mrb[0].mxu0
        %v598 = vadd.f32 %v506, %v597
        %v599 = vpop.f32.mrb[0].mxu0
        %600 = vmatprep.mubr.bf16.mxu0 0
        %601 = vmatmul.mubr.bf16.gmra.mrb[0].mxu0 %v531
        %v602 = vpop.f32.mrb[0].mxu0
        %v603 = vadd.f32 %v506, %v602
        %v604 = vpop.f32.mrb[0].mxu0
        %v605 = vpop.f32.mrb[0].mxu0
        %v606 = vadd.f32 %v506, %v605
        %v607 = vpop.f32.mrb[0].mxu0
        %608 = vmatprep.mubr.bf16.mxu0 0
        %609 = vmatmul.mubr.bf16.gmra.mrb[0].mxu0 %v534
        %v610 = vpop.f32.mrb[0].mxu0
        %v611 = vadd.f32 %v506, %v610
        %v612 = vpop.f32.mrb[0].mxu0
        %v613 = vpop.f32.mrb[0].mxu0
        %v614 = vadd.f32 %v506, %v613
        %v615 = vpop.f32.mrb[0].mxu0
        %616 = vmatprep.mubr.bf16.mxu0 0
        %617 = vmatmul.mubr.bf16.gmra.mrb[0].mxu0 %v537
        %v618 = vpop.f32.mrb[0].mxu0
        %v619 = vadd.f32 %v506, %v618
        %v620 = vpop.f32.mrb[0].mxu0
        %v621 = vpop.f32.mrb[0].mxu0
        %v622 = vadd.f32 %v506, %v621
        %v623 = vpop.f32.mrb[0].mxu0
        %624 = vmatprep.mubr.bf16.mxu0 0
        %625 = vmatmul.mubr.bf16.gmra.mrb[0].mxu0 %v540
        %v626 = vpop.f32.mrb[0].mxu0
        %v627 = vadd.f32 %v506, %v626
        %v628 = vpop.f32.mrb[0].mxu0
        %v629 = vpop.f32.mrb[0].mxu0
        %v630 = vadd.f32 %v506, %v629
        %v631 = vpop.f32.mrb[0].mxu0
        %632 = vmatprep.mubr.bf16.mxu0 0
        %633 = vmatmul.mubr.bf16.gmra.mrb[0].mxu0 %v543
        %v634 = vpop.f32.mrb[0].mxu0
        %v635 = vadd.f32 %v506, %v634
        %v636 = vpop.f32.mrb[0].mxu0
        %v637 = vpop.f32.mrb[0].mxu0
        %v638 = vadd.f32 %v506, %v637
        %v639 = vpop.f32.mrb[0].mxu0
        %640 = vmatprep.mubr.bf16.mxu0 0
        %641 = vmatmul.mubr.bf16.gmra.mrb[0].mxu0 %v546
        %v642 = vpop.f32.mrb[0].mxu0
        %v643 = vadd.f32 %v506, %v642
        %v644 = vpop.f32.mrb[0].mxu0
        %v645 = vpop.f32.mrb[0].mxu0
        %v646 = vadd.f32 %v506, %v645
        %v647 = vpop.f32.mrb[0].mxu0
        %648 = vdwg.mxu0
        %v649 = vmax.f32 %v587, 0.0
        %v650 = vmax.f32 %v590, 0.0
        %v651 = vmax.f32 %v595, 0.0
        %v652 = vmax.f32 %v598, 0.0
        %v653 = vmax.f32 %v603, 0.0
        %v654 = vmax.f32 %v606, 0.0
        %v655 = vmax.f32 %v611, 0.0
        %v656 = vmax.f32 %v614, 0.0
        %v657 = vmax.f32 %v619, 0.0
        %v658 = vmax.f32 %v622, 0.0
        %v659 = vmax.f32 %v627, 0.0
        %v660 = vmax.f32 %v630, 0.0
        %v661 = vmax.f32 %v635, 0.0
        %v662 = vmax.f32 %v638, 0.0
        %v663 = vmax.f32 %v643, 0.0
        %v664 = vmax.f32 %v646, 0.0
        %v665 = vpack.c.bf16 %v650, %v649
        %v666 = vpack.c.bf16 %v652, %v651
        %v667 = vpack.c.bf16 %v654, %v653
        %v668 = vpack.c.bf16 %v656, %v655
        %v669 = vpack.c.bf16 %v658, %v657
        %v670 = vpack.c.bf16 %v660, %v659
        %v671 = vpack.c.bf16 %v662, %v661
        %v672 = vpack.c.bf16 %v664, %v663
        %681 = vrot.lane.b32.xlu0 %v665, 112
        %v682 = vpop.permute.xlu0 %681
        %683 = vrot.lane.b32.xlu0 %v666, 112
        %v684 = vpop.permute.xlu0 %683
        %685 = vrot.lane.b32.xlu0 %v667, 112
        %v686 = vpop.permute.xlu0 %685
        %687 = vrot.lane.b32.xlu0 %v668, 112
        %v688 = vpop.permute.xlu0 %687
        %689 = vrot.lane.b32.xlu0 %v669, 112
        %v690 = vpop.permute.xlu0 %689
        %691 = vrot.lane.b32.xlu0 %v670, 112
        %v692 = vpop.permute.xlu0 %691
        %693 = vrot.lane.b32.xlu0 %v671, 112
        %v694 = vpop.permute.xlu0 %693
        %695 = vrot.lane.b32.xlu0 %v672, 112
        %v696 = vpop.permute.xlu0 %695
        %vm697 = vcmask 64512
        %v699 = vsel %vm697, %v665, 0
        %v702 = vsel %vm697, %v666, 0
        %v705 = vsel %vm697, %v667, 0
        %v708 = vsel %vm697, %v668, 0
        %v711 = vsel %vm697, %v669, 0
        %v714 = vsel %vm697, %v670, 0
        %v717 = vsel %vm697, %v671, 0
        %v720 = vsel %vm697, %v672, 0
        %v723 = vsel %vm697, %v682, 0
        %v726 = vsel %vm697, %v684, 0
        %v729 = vsel %vm697, %v686, 0
        %v732 = vsel %vm697, %v688, 0
        %v735 = vsel %vm697, %v690, 0
        %v738 = vsel %vm697, %v692, 0
        %v741 = vsel %vm697, %v694, 0
        %v744 = vsel %vm697, %v696, 0
        %746 = vmatprep.subr.bf16.mxu0 0
        %747 = vmatpush1.bf16.xpose.msra.mxu0 %v723
        %748 = vmatprep.subr.bf16.mxu0 0
        %749 = vmatpush1.bf16.xpose.msra.mxu0 %v726
        %750 = vmatprep.subr.bf16.mxu0 0
        %751 = vmatpush1.bf16.xpose.msra.mxu0 %v729
        %752 = vmatprep.subr.bf16.mxu0 0
        %753 = vmatpush1.bf16.xpose.msra.mxu0 %v732
        %754 = vmatprep.subr.bf16.mxu0 0
        %755 = vmatpush1.bf16.xpose.msra.mxu0 %v735
        %756 = vmatprep.subr.bf16.mxu0 0
        %757 = vmatpush1.bf16.xpose.msra.mxu0 %v738
        %758 = vmatprep.subr.bf16.mxu0 0
        %759 = vmatpush1.bf16.xpose.msra.mxu0 %v741
        %760 = vmatprep.subr.bf16.mxu0 0
        %761 = vmatpush1.bf16.xpose.msra.mxu0 %v744
        %762 = vmatprep.subr.bf16.mxu0 0
        %763 = vmatpush1.bf16.xpose.msra.mxu0 0
        %764 = vmatprep.subr.bf16.mxu0 0
        %765 = vmatpush1.bf16.xpose.msra.mxu0 0
        %766 = vmatprep.subr.bf16.mxu0 0
        %767 = vmatpush1.bf16.xpose.msra.mxu0 0
        %768 = vmatprep.subr.bf16.mxu0 0
        %769 = vmatpush1.bf16.xpose.msra.mxu0 0
        %770 = vmatprep.subr.bf16.mxu0 0
        %771 = vmatpush1.bf16.xpose.msra.mxu0 0
        %772 = vmatprep.subr.bf16.mxu0 0
        %773 = vmatpush1.bf16.xpose.msra.mxu0 0
        %774 = vmatprep.subr.bf16.mxu0 0
        %775 = vmatpush1.bf16.xpose.msra.mxu0 0
        %776 = vmatprep.subr.bf16.mxu0 0
        %777 = vmatpush1.bf16.xpose.msra.mxu0 0
        %778 = vmatprep.mubr.bf16.mxu0 0
        %779 = vmatmul.mubr.bf16.gmra.mrb[0].mxu0 %v699
        %v780 = vpop.f32.mrb[0].mxu0
        %v781 = vadd.f32 0.0, %v780
        %v782 = vpop.f32.mrb[0].mxu0
        %v783 = vpop.f32.mrb[0].mxu0
        %v784 = vadd.f32 0.0, %v783
        %v785 = vpop.f32.mrb[0].mxu0
        %786 = vmatprep.mubr.bf16.mxu0 0
        %787 = vmatmul.mubr.bf16.gmra.mrb[0].mxu0 %v702
        %v788 = vpop.f32.mrb[0].mxu0
        %v789 = vadd.f32 0.0, %v788
        %v790 = vpop.f32.mrb[0].mxu0
        %v791 = vpop.f32.mrb[0].mxu0
        %v792 = vadd.f32 0.0, %v791
        %v793 = vpop.f32.mrb[0].mxu0
        %794 = vmatprep.mubr.bf16.mxu0 0
        %795 = vmatmul.mubr.bf16.gmra.mrb[0].mxu0 %v705
        %v796 = vpop.f32.mrb[0].mxu0
        %v797 = vadd.f32 0.0, %v796
        %v798 = vpop.f32.mrb[0].mxu0
        %v799 = vpop.f32.mrb[0].mxu0
        %v800 = vadd.f32 0.0, %v799
        %v801 = vpop.f32.mrb[0].mxu0
        %802 = vmatprep.mubr.bf16.mxu0 0
        %803 = vmatmul.mubr.bf16.gmra.mrb[0].mxu0 %v708
        %v804 = vpop.f32.mrb[0].mxu0
        %v805 = vadd.f32 0.0, %v804
        %v806 = vpop.f32.mrb[0].mxu0
        %v807 = vpop.f32.mrb[0].mxu0
        %v808 = vadd.f32 0.0, %v807
        %v809 = vpop.f32.mrb[0].mxu0
        %810 = vmatprep.mubr.bf16.mxu0 0
        %811 = vmatmul.mubr.bf16.gmra.mrb[0].mxu0 %v711
        %v812 = vpop.f32.mrb[0].mxu0
        %v813 = vadd.f32 0.0, %v812
        %v814 = vpop.f32.mrb[0].mxu0
        %v815 = vpop.f32.mrb[0].mxu0
        %v816 = vadd.f32 0.0, %v815
        %v817 = vpop.f32.mrb[0].mxu0
        %818 = vmatprep.mubr.bf16.mxu0 0
        %819 = vmatmul.mubr.bf16.gmra.mrb[0].mxu0 %v714
        %v820 = vpop.f32.mrb[0].mxu0
        %v821 = vadd.f32 0.0, %v820
        %v822 = vpop.f32.mrb[0].mxu0
        %v823 = vpop.f32.mrb[0].mxu0
        %v824 = vadd.f32 0.0, %v823
        %v825 = vpop.f32.mrb[0].mxu0
        %826 = vmatprep.mubr.bf16.mxu0 0
        %827 = vmatmul.mubr.bf16.gmra.mrb[0].mxu0 %v717
        %v828 = vpop.f32.mrb[0].mxu0
        %v829 = vadd.f32 0.0, %v828
        %v830 = vpop.f32.mrb[0].mxu0
        %v831 = vpop.f32.mrb[0].mxu0
        %v832 = vadd.f32 0.0, %v831
        %v833 = vpop.f32.mrb[0].mxu0
        %834 = vmatprep.mubr.bf16.mxu0 0
        %835 = vmatmul.mubr.bf16.gmra.mrb[0].mxu0 %v720
        %v836 = vpop.f32.mrb[0].mxu0
        %v837 = vadd.f32 0.0, %v836
        %v838 = vpop.f32.mrb[0].mxu0
        %v839 = vpop.f32.mrb[0].mxu0
        %v840 = vadd.f32 0.0, %v839
        %v841 = vpop.f32.mrb[0].mxu0
        %842 = vdwg.mxu0
        %v843 = vmul.f32 %v781, 0.35355338
        %v844 = vmul.f32 %v784, 0.35355338
        %v845 = vmul.f32 %v789, 0.35355338
        %v846 = vmul.f32 %v792, 0.35355338
        %v847 = vmul.f32 %v797, 0.35355338
        %v848 = vmul.f32 %v800, 0.35355338
        %v849 = vmul.f32 %v805, 0.35355338
        %v850 = vmul.f32 %v808, 0.35355338
        %v851 = vmul.f32 %v813, 0.35355338
        %v852 = vmul.f32 %v816, 0.35355338
        %v853 = vmul.f32 %v821, 0.35355338
        %v854 = vmul.f32 %v824, 0.35355338
        %v855 = vmul.f32 %v829, 0.35355338
        %v856 = vmul.f32 %v832, 0.35355338
        %v857 = vmul.f32 %v837, 0.35355338
        %v858 = vmul.f32 %v840, 0.35355338
        %v859 = vadd.f32 %v843, %v456
        %v860 = vadd.f32 %v844, %v457
        %v861 = vadd.f32 %v845, %v458
        %v862 = vadd.f32 %v846, %v459
        %v863 = vadd.f32 %v847, %v460
        %v864 = vadd.f32 %v848, %v461
        %v865 = vadd.f32 %v849, %v462
        %v866 = vadd.f32 %v850, %v463
        %v867 = vadd.f32 %v851, %v464
        %v868 = vadd.f32 %v852, %v465
        %v869 = vadd.f32 %v853, %v466
        %v870 = vadd.f32 %v854, %v467
        %v871 = vadd.f32 %v855, %v468
        %v872 = vadd.f32 %v856, %v469
        %v873 = vadd.f32 %v857, %v470
        %v874 = vadd.f32 %v858, %v471
        %875 = vmax.xlane.f32.xlu0 %v859
        %v876 = vpop.xlane.xlu0 %875
        %877 = vmax.xlane.f32.xlu0 %v860
        %v878 = vpop.xlane.xlu0 %877
        %879 = vmax.xlane.f32.xlu0 %v861
        %v880 = vpop.xlane.xlu0 %879
        %881 = vmax.xlane.f32.xlu0 %v862
        %v882 = vpop.xlane.xlu0 %881
        %883 = vmax.xlane.f32.xlu0 %v863
        %v884 = vpop.xlane.xlu0 %883
        %885 = vmax.xlane.f32.xlu0 %v864
        %v886 = vpop.xlane.xlu0 %885
        %887 = vmax.xlane.f32.xlu0 %v865
        %v888 = vpop.xlane.xlu0 %887
        %889 = vmax.xlane.f32.xlu0 %v866
        %v890 = vpop.xlane.xlu0 %889
        %891 = vmax.xlane.f32.xlu0 %v867
        %v892 = vpop.xlane.xlu0 %891
        %893 = vmax.xlane.f32.xlu0 %v868
        %v894 = vpop.xlane.xlu0 %893
        %895 = vmax.xlane.f32.xlu0 %v869
        %v896 = vpop.xlane.xlu0 %895
        %897 = vmax.xlane.f32.xlu0 %v870
        %v898 = vpop.xlane.xlu0 %897
        %899 = vmax.xlane.f32.xlu0 %v871
        %v900 = vpop.xlane.xlu0 %899
        %901 = vmax.xlane.f32.xlu0 %v872
        %v902 = vpop.xlane.xlu0 %901
        %903 = vmax.xlane.f32.xlu0 %v873
        %v904 = vpop.xlane.xlu0 %903
        %905 = vmax.xlane.f32.xlu0 %v874
        %v906 = vpop.xlane.xlu0 %905
        %v907 = vsub.f32 %v859, %v876
        %v908 = vsub.f32 %v860, %v878
        %v909 = vsub.f32 %v861, %v880
        %v910 = vsub.f32 %v862, %v882
        %v911 = vsub.f32 %v863, %v884
        %v912 = vsub.f32 %v864, %v886
        %v913 = vsub.f32 %v865, %v888
        %v914 = vsub.f32 %v866, %v890
        %v915 = vsub.f32 %v867, %v892
        %v916 = vsub.f32 %v868, %v894
        %v917 = vsub.f32 %v869, %v896
        %v918 = vsub.f32 %v870, %v898
        %v919 = vsub.f32 %v871, %v900
        %v920 = vsub.f32 %v872, %v902
        %v921 = vsub.f32 %v873, %v904
        %v922 = vsub.f32 %v874, %v906
        %v923 = vmul.f32 %v907, 1.442695
        %v924 = vpow.pop %v923
        %v925 = vmul.f32 %v908, 1.442695
        %v926 = vpow.pop %v925
        %v927 = vmul.f32 %v909, 1.442695
        %v928 = vpow.pop %v927
        %v929 = vmul.f32 %v910, 1.442695
        %v930 = vpow.pop %v929
        %v931 = vmul.f32 %v911, 1.442695
        %v932 = vpow.pop %v931
        %v933 = vmul.f32 %v912, 1.442695
        %v934 = vpow.pop %v933
        %v935 = vmul.f32 %v913, 1.442695
        %v936 = vpow.pop %v935
        %v937 = vmul.f32 %v914, 1.442695
        %v938 = vpow.pop %v937
        %v939 = vmul.f32 %v915, 1.442695
        %v940 = vpow.pop %v939
        %v941 = vmul.f32 %v916, 1.442695
        %v942 = vpow.pop %v941
        %v943 = vmul.f32 %v917, 1.442695
        %v944 = vpow.pop %v943
        %v945 = vmul.f32 %v918, 1.442695
        %v946 = vpow.pop %v945
        %v947 = vmul.f32 %v919, 1.442695
        %v948 = vpow.pop %v947
        %v949 = vmul.f32 %v920, 1.442695
        %v950 = vpow.pop %v949
        %v951 = vmul.f32 %v921, 1.442695
        %v952 = vpow.pop %v951
        %v953 = vmul.f32 %v922, 1.442695
        %v954 = vpow.pop %v953
        %955 = vadd.xlane.f32.xlu0 %v924
        %v956 = vpop.xlane.xlu0 %955
        %957 = vadd.xlane.f32.xlu0 %v926
        %v958 = vpop.xlane.xlu0 %957
        %959 = vadd.xlane.f32.xlu0 %v928
        %v960 = vpop.xlane.xlu0 %959
        %961 = vadd.xlane.f32.xlu0 %v930
        %v962 = vpop.xlane.xlu0 %961
        %963 = vadd.xlane.f32.xlu0 %v932
        %v964 = vpop.xlane.xlu0 %963
        %965 = vadd.xlane.f32.xlu0 %v934
        %v966 = vpop.xlane.xlu0 %965
        %967 = vadd.xlane.f32.xlu0 %v936
        %v968 = vpop.xlane.xlu0 %967
        %969 = vadd.xlane.f32.xlu0 %v938
        %v970 = vpop.xlane.xlu0 %969
        %971 = vadd.xlane.f32.xlu0 %v940
        %v972 = vpop.xlane.xlu0 %971
        %973 = vadd.xlane.f32.xlu0 %v942
        %v974 = vpop.xlane.xlu0 %973
        %975 = vadd.xlane.f32.xlu0 %v944
        %v976 = vpop.xlane.xlu0 %975
        %977 = vadd.xlane.f32.xlu0 %v946
        %v978 = vpop.xlane.xlu0 %977
        %979 = vadd.xlane.f32.xlu0 %v948
        %v980 = vpop.xlane.xlu0 %979
        %981 = vadd.xlane.f32.xlu0 %v950
        %v982 = vpop.xlane.xlu0 %981
        %983 = vadd.xlane.f32.xlu0 %v952
        %v984 = vpop.xlane.xlu0 %983
        %985 = vadd.xlane.f32.xlu0 %v954
        %v986 = vpop.xlane.xlu0 %985
        %v987 = vrcp.pop %v956
        %v988 = vrcp.pop %v958
        %v989 = vrcp.pop %v960
        %v990 = vrcp.pop %v962
        %v991 = vrcp.pop %v964
        %v992 = vrcp.pop %v966
        %v993 = vrcp.pop %v968
        %v994 = vrcp.pop %v970
        %v995 = vrcp.pop %v972
        %v996 = vrcp.pop %v974
        %v997 = vrcp.pop %v976
        %v998 = vrcp.pop %v978
        %v999 = vrcp.pop %v980
        %v1000 = vrcp.pop %v982
        %v1001 = vrcp.pop %v984
        %v1002 = vrcp.pop %v986
        %v1003 = vmul.f32 %v924, %v987
        %v1004 = vmul.f32 %v926, %v988
        %v1005 = vmul.f32 %v928, %v989
        %v1006 = vmul.f32 %v930, %v990
        %v1007 = vmul.f32 %v932, %v991
        %v1008 = vmul.f32 %v934, %v992
        %v1009 = vmul.f32 %v936, %v993
        %v1010 = vmul.f32 %v938, %v994
        %v1011 = vmul.f32 %v940, %v995
        %v1012 = vmul.f32 %v942, %v996
        %v1013 = vmul.f32 %v944, %v997
        %v1014 = vmul.f32 %v946, %v998
        %v1015 = vmul.f32 %v948, %v999
        %v1016 = vmul.f32 %v950, %v1000
        %v1017 = vmul.f32 %v952, %v1001
        %v1018 = vmul.f32 %v954, %v1002
        %v1019 = vpack.c.bf16 %v1004, %v1003
        %v1020 = vpack.c.bf16 %v1006, %v1005
        %v1021 = vpack.c.bf16 %v1008, %v1007
        %v1022 = vpack.c.bf16 %v1010, %v1009
        %v1023 = vpack.c.bf16 %v1012, %v1011
        %v1024 = vpack.c.bf16 %v1014, %v1013
        %v1025 = vpack.c.bf16 %v1016, %v1015
        %v1026 = vpack.c.bf16 %v1018, %v1017
        %1027 = vrot.lane.b32.xlu0 %v665, 96
        %v1028 = vpop.permute.xlu0 %1027
        %1029 = vrot.lane.b32.xlu0 %v666, 96
        %v1030 = vpop.permute.xlu0 %1029
        %1031 = vrot.lane.b32.xlu0 %v667, 96
        %v1032 = vpop.permute.xlu0 %1031
        %1033 = vrot.lane.b32.xlu0 %v668, 96
        %v1034 = vpop.permute.xlu0 %1033
        %1035 = vrot.lane.b32.xlu0 %v669, 96
        %v1036 = vpop.permute.xlu0 %1035
        %1037 = vrot.lane.b32.xlu0 %v670, 96
        %v1038 = vpop.permute.xlu0 %1037
        %1039 = vrot.lane.b32.xlu0 %v671, 96
        %v1040 = vpop.permute.xlu0 %1039
        %1041 = vrot.lane.b32.xlu0 %v672, 96
        %v1042 = vpop.permute.xlu0 %1041
        %1051 = vmatprep.subr.bf16.mxu0 0
        %1052 = vmatpush1.bf16.msra.mxu0 %v1028
        %1053 = vmatprep.subr.bf16.mxu0 0
        %1054 = vmatpush1.bf16.msra.mxu0 %v1030
        %1055 = vmatprep.subr.bf16.mxu0 0
        %1056 = vmatpush1.bf16.msra.mxu0 %v1032
        %1057 = vmatprep.subr.bf16.mxu0 0
        %1058 = vmatpush1.bf16.msra.mxu0 %v1034
        %1059 = vmatprep.subr.bf16.mxu0 0
        %1060 = vmatpush1.bf16.msra.mxu0 %v1036
        %1061 = vmatprep.subr.bf16.mxu0 0
        %1062 = vmatpush1.bf16.msra.mxu0 %v1038
        %1063 = vmatprep.subr.bf16.mxu0 0
        %1064 = vmatpush1.bf16.msra.mxu0 %v1040
        %1065 = vmatprep.subr.bf16.mxu0 0
        %1066 = vmatpush1.bf16.msra.mxu0 %v1042
        %1067 = vmatprep.subr.bf16.mxu0 0
        %1068 = vmatpush1.bf16.msra.mxu0 0
        %1069 = vmatprep.subr.bf16.mxu0 0
        %1070 = vmatpush1.bf16.msra.mxu0 0
        %1071 = vmatprep.subr.bf16.mxu0 0
        %1072 = vmatpush1.bf16.msra.mxu0 0
        %1073 = vmatprep.subr.bf16.mxu0 0
        %1074 = vmatpush1.bf16.msra.mxu0 0
        %1075 = vmatprep.subr.bf16.mxu0 0
        %1076 = vmatpush1.bf16.msra.mxu0 0
        %1077 = vmatprep.subr.bf16.mxu0 0
        %1078 = vmatpush1.bf16.msra.mxu0 0
        %1079 = vmatprep.subr.bf16.mxu0 0
        %1080 = vmatpush1.bf16.msra.mxu0 0
        %1081 = vmatprep.subr.bf16.mxu0 0
        %1082 = vmatpush1.bf16.msra.mxu0 0
        %1083 = vmatprep.mubr.bf16.mxu0 0
        %1084 = vmatmul.mubr.bf16.gmra.mrb[0].mxu0 %v1019
        %v1085 = vpop.f32.mrb[0].mxu0
        %v1086 = vadd.f32 0.0, %v1085
        %v1087 = vpop.f32.mrb[0].mxu0
        %v1088 = vpop.f32.mrb[0].mxu0
        %v1089 = vadd.f32 0.0, %v1088
        %v1090 = vpop.f32.mrb[0].mxu0
        %1091 = vmatprep.mubr.bf16.mxu0 0
        %1092 = vmatmul.mubr.bf16.gmra.mrb[0].mxu0 %v1020
        %v1093 = vpop.f32.mrb[0].mxu0
        %v1094 = vadd.f32 0.0, %v1093
        %v1095 = vpop.f32.mrb[0].mxu0
        %v1096 = vpop.f32.mrb[0].mxu0
        %v1097 = vadd.f32 0.0, %v1096
        %v1098 = vpop.f32.mrb[0].mxu0
        %1099 = vmatprep.mubr.bf16.mxu0 0
        %1100 = vmatmul.mubr.bf16.gmra.mrb[0].mxu0 %v1021
        %v1101 = vpop.f32.mrb[0].mxu0
        %v1102 = vadd.f32 0.0, %v1101
        %v1103 = vpop.f32.mrb[0].mxu0
        %v1104 = vpop.f32.mrb[0].mxu0
        %v1105 = vadd.f32 0.0, %v1104
        %v1106 = vpop.f32.mrb[0].mxu0
        %1107 = vmatprep.mubr.bf16.mxu0 0
        %1108 = vmatmul.mubr.bf16.gmra.mrb[0].mxu0 %v1022
        %v1109 = vpop.f32.mrb[0].mxu0
        %v1110 = vadd.f32 0.0, %v1109
        %v1111 = vpop.f32.mrb[0].mxu0
        %v1112 = vpop.f32.mrb[0].mxu0
        %v1113 = vadd.f32 0.0, %v1112
        %v1114 = vpop.f32.mrb[0].mxu0
        %1115 = vmatprep.mubr.bf16.mxu0 0
        %1116 = vmatmul.mubr.bf16.gmra.mrb[0].mxu0 %v1023
        %v1117 = vpop.f32.mrb[0].mxu0
        %v1118 = vadd.f32 0.0, %v1117
        %v1119 = vpop.f32.mrb[0].mxu0
        %v1120 = vpop.f32.mrb[0].mxu0
        %v1121 = vadd.f32 0.0, %v1120
        %v1122 = vpop.f32.mrb[0].mxu0
        %1123 = vmatprep.mubr.bf16.mxu0 0
        %1124 = vmatmul.mubr.bf16.gmra.mrb[0].mxu0 %v1024
        %v1125 = vpop.f32.mrb[0].mxu0
        %v1126 = vadd.f32 0.0, %v1125
        %v1127 = vpop.f32.mrb[0].mxu0
        %v1128 = vpop.f32.mrb[0].mxu0
        %v1129 = vadd.f32 0.0, %v1128
        %v1130 = vpop.f32.mrb[0].mxu0
        %1131 = vmatprep.mubr.bf16.mxu0 0
        %1132 = vmatmul.mubr.bf16.gmra.mrb[0].mxu0 %v1025
        %v1133 = vpop.f32.mrb[0].mxu0
        %v1134 = vadd.f32 0.0, %v1133
        %v1135 = vpop.f32.mrb[0].mxu0
        %v1136 = vpop.f32.mrb[0].mxu0
        %v1137 = vadd.f32 0.0, %v1136
        %v1138 = vpop.f32.mrb[0].mxu0
        %1139 = vmatprep.mubr.bf16.mxu0 0
        %1140 = vmatmul.mubr.bf16.gmra.mrb[0].mxu0 %v1026
        %v1141 = vpop.f32.mrb[0].mxu0
        %v1142 = vadd.f32 0.0, %v1141
        %v1143 = vpop.f32.mrb[0].mxu0
        %v1144 = vpop.f32.mrb[0].mxu0
        %v1145 = vadd.f32 0.0, %v1144
        %v1146 = vpop.f32.mrb[0].mxu0
        %1147 = vdwg.mxu0
        %1148 = vrot.lane.b32.xlu0 %v665, 80
        %v1149 = vpop.permute.xlu0 %1148
        %1150 = vrot.lane.b32.xlu0 %v666, 80
        %v1151 = vpop.permute.xlu0 %1150
        %1152 = vrot.lane.b32.xlu0 %v667, 80
        %v1153 = vpop.permute.xlu0 %1152
        %1154 = vrot.lane.b32.xlu0 %v668, 80
        %v1155 = vpop.permute.xlu0 %1154
        %1156 = vrot.lane.b32.xlu0 %v669, 80
        %v1157 = vpop.permute.xlu0 %1156
        %1158 = vrot.lane.b32.xlu0 %v670, 80
        %v1159 = vpop.permute.xlu0 %1158
        %1160 = vrot.lane.b32.xlu0 %v671, 80
        %v1161 = vpop.permute.xlu0 %1160
        %1162 = vrot.lane.b32.xlu0 %v672, 80
        %v1163 = vpop.permute.xlu0 %1162
        %1164 = vrot.lane.b32.xlu0 %v665, 64
        %v1165 = vpop.permute.xlu0 %1164
        %1166 = vrot.lane.b32.xlu0 %v666, 64
        %v1167 = vpop.permute.xlu0 %1166
        %1168 = vrot.lane.b32.xlu0 %v667, 64
        %v1169 = vpop.permute.xlu0 %1168
        %1170 = vrot.lane.b32.xlu0 %v668, 64
        %v1171 = vpop.permute.xlu0 %1170
        %1172 = vrot.lane.b32.xlu0 %v669, 64
        %v1173 = vpop.permute.xlu0 %1172
        %1174 = vrot.lane.b32.xlu0 %v670, 64
        %v1175 = vpop.permute.xlu0 %1174
        %1176 = vrot.lane.b32.xlu0 %v671, 64
        %v1177 = vpop.permute.xlu0 %1176
        %1178 = vrot.lane.b32.xlu0 %v672, 64
        %v1179 = vpop.permute.xlu0 %1178
        %v1181 = vsel %vm697, %v1149, 0
        %v1184 = vsel %vm697, %v1151, 0
        %v1187 = vsel %vm697, %v1153, 0
        %v1190 = vsel %vm697, %v1155, 0
        %v1193 = vsel %vm697, %v1157, 0
        %v1196 = vsel %vm697, %v1159, 0
        %v1199 = vsel %vm697, %v1161, 0
        %v1202 = vsel %vm697, %v1163, 0
        %v1205 = vsel %vm697, %v1165, 0
        %v1208 = vsel %vm697, %v1167, 0
        %v1211 = vsel %vm697, %v1169, 0
        %v1214 = vsel %vm697, %v1171, 0
        %v1217 = vsel %vm697, %v1173, 0
        %v1220 = vsel %vm697, %v1175, 0
        %v1223 = vsel %vm697, %v1177, 0
        %v1226 = vsel %vm697, %v1179, 0
        %1228 = vmatprep.subr.bf16.mxu0 0
        %1229 = vmatpush1.bf16.xpose.msra.mxu0 %v1205
        %1230 = vmatprep.subr.bf16.mxu0 0
        %1231 = vmatpush1.bf16.xpose.msra.mxu0 %v1208
        %1232 = vmatprep.subr.bf16.mxu0 0
        %1233 = vmatpush1.bf16.xpose.msra.mxu0 %v1211
        %1234 = vmatprep.subr.bf16.mxu0 0
        %1235 = vmatpush1.bf16.xpose.msra.mxu0 %v1214
        %1236 = vmatprep.subr.bf16.mxu0 0
        %1237 = vmatpush1.bf16.xpose.msra.mxu0 %v1217
        %1238 = vmatprep.subr.bf16.mxu0 0
        %1239 = vmatpush1.bf16.xpose.msra.mxu0 %v1220
        %1240 = vmatprep.subr.bf16.mxu0 0
        %1241 = vmatpush1.bf16.xpose.msra.mxu0 %v1223
        %1242 = vmatprep.subr.bf16.mxu0 0
        %1243 = vmatpush1.bf16.xpose.msra.mxu0 %v1226
        %1244 = vmatprep.subr.bf16.mxu0 0
        %1245 = vmatpush1.bf16.xpose.msra.mxu0 0
        %1246 = vmatprep.subr.bf16.mxu0 0
        %1247 = vmatpush1.bf16.xpose.msra.mxu0 0
        %1248 = vmatprep.subr.bf16.mxu0 0
        %1249 = vmatpush1.bf16.xpose.msra.mxu0 0
        %1250 = vmatprep.subr.bf16.mxu0 0
        %1251 = vmatpush1.bf16.xpose.msra.mxu0 0
        %1252 = vmatprep.subr.bf16.mxu0 0
        %1253 = vmatpush1.bf16.xpose.msra.mxu0 0
        %1254 = vmatprep.subr.bf16.mxu0 0
        %1255 = vmatpush1.bf16.xpose.msra.mxu0 0
        %1256 = vmatprep.subr.bf16.mxu0 0
        %1257 = vmatpush1.bf16.xpose.msra.mxu0 0
        %1258 = vmatprep.subr.bf16.mxu0 0
        %1259 = vmatpush1.bf16.xpose.msra.mxu0 0
        %1260 = vmatprep.mubr.bf16.mxu0 0
        %1261 = vmatmul.mubr.bf16.gmra.mrb[0].mxu0 %v1181
        %v1262 = vpop.f32.mrb[0].mxu0
        %v1263 = vadd.f32 0.0, %v1262
        %v1264 = vpop.f32.mrb[0].mxu0
        %v1265 = vpop.f32.mrb[0].mxu0
        %v1266 = vadd.f32 0.0, %v1265
        %v1267 = vpop.f32.mrb[0].mxu0
        %1268 = vmatprep.mubr.bf16.mxu0 0
        %1269 = vmatmul.mubr.bf16.gmra.mrb[0].mxu0 %v1184
        %v1270 = vpop.f32.mrb[0].mxu0
        %v1271 = vadd.f32 0.0, %v1270
        %v1272 = vpop.f32.mrb[0].mxu0
        %v1273 = vpop.f32.mrb[0].mxu0
        %v1274 = vadd.f32 0.0, %v1273
        %v1275 = vpop.f32.mrb[0].mxu0
        %1276 = vmatprep.mubr.bf16.mxu0 0
        %1277 = vmatmul.mubr.bf16.gmra.mrb[0].mxu0 %v1187
        %v1278 = vpop.f32.mrb[0].mxu0
        %v1279 = vadd.f32 0.0, %v1278
        %v1280 = vpop.f32.mrb[0].mxu0
        %v1281 = vpop.f32.mrb[0].mxu0
        %v1282 = vadd.f32 0.0, %v1281
        %v1283 = vpop.f32.mrb[0].mxu0
        %1284 = vmatprep.mubr.bf16.mxu0 0
        %1285 = vmatmul.mubr.bf16.gmra.mrb[0].mxu0 %v1190
        %v1286 = vpop.f32.mrb[0].mxu0
        %v1287 = vadd.f32 0.0, %v1286
        %v1288 = vpop.f32.mrb[0].mxu0
        %v1289 = vpop.f32.mrb[0].mxu0
        %v1290 = vadd.f32 0.0, %v1289
        %v1291 = vpop.f32.mrb[0].mxu0
        %1292 = vmatprep.mubr.bf16.mxu0 0
        %1293 = vmatmul.mubr.bf16.gmra.mrb[0].mxu0 %v1193
        %v1294 = vpop.f32.mrb[0].mxu0
        %v1295 = vadd.f32 0.0, %v1294
        %v1296 = vpop.f32.mrb[0].mxu0
        %v1297 = vpop.f32.mrb[0].mxu0
        %v1298 = vadd.f32 0.0, %v1297
        %v1299 = vpop.f32.mrb[0].mxu0
        %1300 = vmatprep.mubr.bf16.mxu0 0
        %1301 = vmatmul.mubr.bf16.gmra.mrb[0].mxu0 %v1196
        %v1302 = vpop.f32.mrb[0].mxu0
        %v1303 = vadd.f32 0.0, %v1302
        %v1304 = vpop.f32.mrb[0].mxu0
        %v1305 = vpop.f32.mrb[0].mxu0
        %v1306 = vadd.f32 0.0, %v1305
        %v1307 = vpop.f32.mrb[0].mxu0
        %1308 = vmatprep.mubr.bf16.mxu0 0
        %1309 = vmatmul.mubr.bf16.gmra.mrb[0].mxu0 %v1199
        %v1310 = vpop.f32.mrb[0].mxu0
        %v1311 = vadd.f32 0.0, %v1310
        %v1312 = vpop.f32.mrb[0].mxu0
        %v1313 = vpop.f32.mrb[0].mxu0
        %v1314 = vadd.f32 0.0, %v1313
        %v1315 = vpop.f32.mrb[0].mxu0
        %1316 = vmatprep.mubr.bf16.mxu0 0
        %1317 = vmatmul.mubr.bf16.gmra.mrb[0].mxu0 %v1202
        %v1318 = vpop.f32.mrb[0].mxu0
        %v1319 = vadd.f32 0.0, %v1318
        %v1320 = vpop.f32.mrb[0].mxu0
        %v1321 = vpop.f32.mrb[0].mxu0
        %v1322 = vadd.f32 0.0, %v1321
        %v1323 = vpop.f32.mrb[0].mxu0
        %1324 = vdwg.mxu0
        %v1325 = vmul.f32 %v1263, 0.35355338
        %v1326 = vmul.f32 %v1266, 0.35355338
        %v1327 = vmul.f32 %v1271, 0.35355338
        %v1328 = vmul.f32 %v1274, 0.35355338
        %v1329 = vmul.f32 %v1279, 0.35355338
        %v1330 = vmul.f32 %v1282, 0.35355338
        %v1331 = vmul.f32 %v1287, 0.35355338
        %v1332 = vmul.f32 %v1290, 0.35355338
        %v1333 = vmul.f32 %v1295, 0.35355338
        %v1334 = vmul.f32 %v1298, 0.35355338
        %v1335 = vmul.f32 %v1303, 0.35355338
        %v1336 = vmul.f32 %v1306, 0.35355338
        %v1337 = vmul.f32 %v1311, 0.35355338
        %v1338 = vmul.f32 %v1314, 0.35355338
        %v1339 = vmul.f32 %v1319, 0.35355338
        %v1340 = vmul.f32 %v1322, 0.35355338
        %v1341 = vadd.f32 %v1325, %v472
        %v1342 = vadd.f32 %v1326, %v473
        %v1343 = vadd.f32 %v1327, %v474
        %v1344 = vadd.f32 %v1328, %v475
        %v1345 = vadd.f32 %v1329, %v476
        %v1346 = vadd.f32 %v1330, %v477
        %v1347 = vadd.f32 %v1331, %v478
        %v1348 = vadd.f32 %v1332, %v479
        %v1349 = vadd.f32 %v1333, %v480
        %v1350 = vadd.f32 %v1334, %v481
        %v1351 = vadd.f32 %v1335, %v482
        %v1352 = vadd.f32 %v1336, %v483
        %v1353 = vadd.f32 %v1337, %v484
        %v1354 = vadd.f32 %v1338, %v485
        %v1355 = vadd.f32 %v1339, %v486
        %v1356 = vadd.f32 %v1340, %v487
        %1357 = vmax.xlane.f32.xlu0 %v1341
        %v1358 = vpop.xlane.xlu0 %1357
        %1359 = vmax.xlane.f32.xlu0 %v1342
        %v1360 = vpop.xlane.xlu0 %1359
        %1361 = vmax.xlane.f32.xlu0 %v1343
        %v1362 = vpop.xlane.xlu0 %1361
        %1363 = vmax.xlane.f32.xlu0 %v1344
        %v1364 = vpop.xlane.xlu0 %1363
        %1365 = vmax.xlane.f32.xlu0 %v1345
        %v1366 = vpop.xlane.xlu0 %1365
        %1367 = vmax.xlane.f32.xlu0 %v1346
        %v1368 = vpop.xlane.xlu0 %1367
        %1369 = vmax.xlane.f32.xlu0 %v1347
        %v1370 = vpop.xlane.xlu0 %1369
        %1371 = vmax.xlane.f32.xlu0 %v1348
        %v1372 = vpop.xlane.xlu0 %1371
        %1373 = vmax.xlane.f32.xlu0 %v1349
        %v1374 = vpop.xlane.xlu0 %1373
        %1375 = vmax.xlane.f32.xlu0 %v1350
        %v1376 = vpop.xlane.xlu0 %1375
        %1377 = vmax.xlane.f32.xlu0 %v1351
        %v1378 = vpop.xlane.xlu0 %1377
        %1379 = vmax.xlane.f32.xlu0 %v1352
        %v1380 = vpop.xlane.xlu0 %1379
        %1381 = vmax.xlane.f32.xlu0 %v1353
        %v1382 = vpop.xlane.xlu0 %1381
        %1383 = vmax.xlane.f32.xlu0 %v1354
        %v1384 = vpop.xlane.xlu0 %1383
        %1385 = vmax.xlane.f32.xlu0 %v1355
        %v1386 = vpop.xlane.xlu0 %1385
        %1387 = vmax.xlane.f32.xlu0 %v1356
        %v1388 = vpop.xlane.xlu0 %1387
        %v1389 = vsub.f32 %v1341, %v1358
        %v1390 = vsub.f32 %v1342, %v1360
        %v1391 = vsub.f32 %v1343, %v1362
        %v1392 = vsub.f32 %v1344, %v1364
        %v1393 = vsub.f32 %v1345, %v1366
        %v1394 = vsub.f32 %v1346, %v1368
        %v1395 = vsub.f32 %v1347, %v1370
        %v1396 = vsub.f32 %v1348, %v1372
        %v1397 = vsub.f32 %v1349, %v1374
        %v1398 = vsub.f32 %v1350, %v1376
        %v1399 = vsub.f32 %v1351, %v1378
        %v1400 = vsub.f32 %v1352, %v1380
        %v1401 = vsub.f32 %v1353, %v1382
        %v1402 = vsub.f32 %v1354, %v1384
        %v1403 = vsub.f32 %v1355, %v1386
        %v1404 = vsub.f32 %v1356, %v1388
        %v1405 = vmul.f32 %v1389, 1.442695
        %v1406 = vpow.pop %v1405
        %v1407 = vmul.f32 %v1390, 1.442695
        %v1408 = vpow.pop %v1407
        %v1409 = vmul.f32 %v1391, 1.442695
        %v1410 = vpow.pop %v1409
        %v1411 = vmul.f32 %v1392, 1.442695
        %v1412 = vpow.pop %v1411
        %v1413 = vmul.f32 %v1393, 1.442695
        %v1414 = vpow.pop %v1413
        %v1415 = vmul.f32 %v1394, 1.442695
        %v1416 = vpow.pop %v1415
        %v1417 = vmul.f32 %v1395, 1.442695
        %v1418 = vpow.pop %v1417
        %v1419 = vmul.f32 %v1396, 1.442695
        %v1420 = vpow.pop %v1419
        %v1421 = vmul.f32 %v1397, 1.442695
        %v1422 = vpow.pop %v1421
        %v1423 = vmul.f32 %v1398, 1.442695
        %v1424 = vpow.pop %v1423
        %v1425 = vmul.f32 %v1399, 1.442695
        %v1426 = vpow.pop %v1425
        %v1427 = vmul.f32 %v1400, 1.442695
        %v1428 = vpow.pop %v1427
        %v1429 = vmul.f32 %v1401, 1.442695
        %v1430 = vpow.pop %v1429
        %v1431 = vmul.f32 %v1402, 1.442695
        %v1432 = vpow.pop %v1431
        %v1433 = vmul.f32 %v1403, 1.442695
        %v1434 = vpow.pop %v1433
        %v1435 = vmul.f32 %v1404, 1.442695
        %v1436 = vpow.pop %v1435
        %1437 = vadd.xlane.f32.xlu0 %v1406
        %v1438 = vpop.xlane.xlu0 %1437
        %1439 = vadd.xlane.f32.xlu0 %v1408
        %v1440 = vpop.xlane.xlu0 %1439
        %1441 = vadd.xlane.f32.xlu0 %v1410
        %v1442 = vpop.xlane.xlu0 %1441
        %1443 = vadd.xlane.f32.xlu0 %v1412
        %v1444 = vpop.xlane.xlu0 %1443
        %1445 = vadd.xlane.f32.xlu0 %v1414
        %v1446 = vpop.xlane.xlu0 %1445
        %1447 = vadd.xlane.f32.xlu0 %v1416
        %v1448 = vpop.xlane.xlu0 %1447
        %1449 = vadd.xlane.f32.xlu0 %v1418
        %v1450 = vpop.xlane.xlu0 %1449
        %1451 = vadd.xlane.f32.xlu0 %v1420
        %v1452 = vpop.xlane.xlu0 %1451
        %1453 = vadd.xlane.f32.xlu0 %v1422
        %v1454 = vpop.xlane.xlu0 %1453
        %1455 = vadd.xlane.f32.xlu0 %v1424
        %v1456 = vpop.xlane.xlu0 %1455
        %1457 = vadd.xlane.f32.xlu0 %v1426
        %v1458 = vpop.xlane.xlu0 %1457
        %1459 = vadd.xlane.f32.xlu0 %v1428
        %v1460 = vpop.xlane.xlu0 %1459
        %1461 = vadd.xlane.f32.xlu0 %v1430
        %v1462 = vpop.xlane.xlu0 %1461
        %1463 = vadd.xlane.f32.xlu0 %v1432
        %v1464 = vpop.xlane.xlu0 %1463
        %1465 = vadd.xlane.f32.xlu0 %v1434
        %v1466 = vpop.xlane.xlu0 %1465
        %1467 = vadd.xlane.f32.xlu0 %v1436
        %v1468 = vpop.xlane.xlu0 %1467
        %v1469 = vrcp.pop %v1438
        %v1470 = vrcp.pop %v1440
        %v1471 = vrcp.pop %v1442
        %v1472 = vrcp.pop %v1444
        %v1473 = vrcp.pop %v1446
        %v1474 = vrcp.pop %v1448
        %v1475 = vrcp.pop %v1450
        %v1476 = vrcp.pop %v1452
        %v1477 = vrcp.pop %v1454
        %v1478 = vrcp.pop %v1456
        %v1479 = vrcp.pop %v1458
        %v1480 = vrcp.pop %v1460
        %v1481 = vrcp.pop %v1462
        %v1482 = vrcp.pop %v1464
        %v1483 = vrcp.pop %v1466
        %v1484 = vrcp.pop %v1468
        %v1485 = vmul.f32 %v1406, %v1469
        %v1486 = vmul.f32 %v1408, %v1470
        %v1487 = vmul.f32 %v1410, %v1471
        %v1488 = vmul.f32 %v1412, %v1472
        %v1489 = vmul.f32 %v1414, %v1473
        %v1490 = vmul.f32 %v1416, %v1474
        %v1491 = vmul.f32 %v1418, %v1475
        %v1492 = vmul.f32 %v1420, %v1476
        %v1493 = vmul.f32 %v1422, %v1477
        %v1494 = vmul.f32 %v1424, %v1478
        %v1495 = vmul.f32 %v1426, %v1479
        %v1496 = vmul.f32 %v1428, %v1480
        %v1497 = vmul.f32 %v1430, %v1481
        %v1498 = vmul.f32 %v1432, %v1482
        %v1499 = vmul.f32 %v1434, %v1483
        %v1500 = vmul.f32 %v1436, %v1484
        %v1501 = vpack.c.bf16 %v1486, %v1485
        %v1502 = vpack.c.bf16 %v1488, %v1487
        %v1503 = vpack.c.bf16 %v1490, %v1489
        %v1504 = vpack.c.bf16 %v1492, %v1491
        %v1505 = vpack.c.bf16 %v1494, %v1493
        %v1506 = vpack.c.bf16 %v1496, %v1495
        %v1507 = vpack.c.bf16 %v1498, %v1497
        %v1508 = vpack.c.bf16 %v1500, %v1499
        %1509 = vrot.lane.b32.xlu0 %v665, 48
        %v1510 = vpop.permute.xlu0 %1509
        %1511 = vrot.lane.b32.xlu0 %v666, 48
        %v1512 = vpop.permute.xlu0 %1511
        %1513 = vrot.lane.b32.xlu0 %v667, 48
        %v1514 = vpop.permute.xlu0 %1513
        %1515 = vrot.lane.b32.xlu0 %v668, 48
        %v1516 = vpop.permute.xlu0 %1515
        %1517 = vrot.lane.b32.xlu0 %v669, 48
        %v1518 = vpop.permute.xlu0 %1517
        %1519 = vrot.lane.b32.xlu0 %v670, 48
        %v1520 = vpop.permute.xlu0 %1519
        %1521 = vrot.lane.b32.xlu0 %v671, 48
        %v1522 = vpop.permute.xlu0 %1521
        %1523 = vrot.lane.b32.xlu0 %v672, 48
        %v1524 = vpop.permute.xlu0 %1523
        %1533 = vmatprep.subr.bf16.mxu0 0
        %1534 = vmatpush1.bf16.msra.mxu0 %v1510
        %1535 = vmatprep.subr.bf16.mxu0 0
        %1536 = vmatpush1.bf16.msra.mxu0 %v1512
        %1537 = vmatprep.subr.bf16.mxu0 0
        %1538 = vmatpush1.bf16.msra.mxu0 %v1514
        %1539 = vmatprep.subr.bf16.mxu0 0
        %1540 = vmatpush1.bf16.msra.mxu0 %v1516
        %1541 = vmatprep.subr.bf16.mxu0 0
        %1542 = vmatpush1.bf16.msra.mxu0 %v1518
        %1543 = vmatprep.subr.bf16.mxu0 0
        %1544 = vmatpush1.bf16.msra.mxu0 %v1520
        %1545 = vmatprep.subr.bf16.mxu0 0
        %1546 = vmatpush1.bf16.msra.mxu0 %v1522
        %1547 = vmatprep.subr.bf16.mxu0 0
        %1548 = vmatpush1.bf16.msra.mxu0 %v1524
        %1549 = vmatprep.subr.bf16.mxu0 0
        %1550 = vmatpush1.bf16.msra.mxu0 0
        %1551 = vmatprep.subr.bf16.mxu0 0
        %1552 = vmatpush1.bf16.msra.mxu0 0
        %1553 = vmatprep.subr.bf16.mxu0 0
        %1554 = vmatpush1.bf16.msra.mxu0 0
        %1555 = vmatprep.subr.bf16.mxu0 0
        %1556 = vmatpush1.bf16.msra.mxu0 0
        %1557 = vmatprep.subr.bf16.mxu0 0
        %1558 = vmatpush1.bf16.msra.mxu0 0
        %1559 = vmatprep.subr.bf16.mxu0 0
        %1560 = vmatpush1.bf16.msra.mxu0 0
        %1561 = vmatprep.subr.bf16.mxu0 0
        %1562 = vmatpush1.bf16.msra.mxu0 0
        %1563 = vmatprep.subr.bf16.mxu0 0
        %1564 = vmatpush1.bf16.msra.mxu0 0
        %1565 = vmatprep.mubr.bf16.mxu0 0
        %1566 = vmatmul.mubr.bf16.gmra.mrb[0].mxu0 %v1501
        %v1567 = vpop.f32.mrb[0].mxu0
        %v1568 = vadd.f32 0.0, %v1567
        %v1569 = vpop.f32.mrb[0].mxu0
        %v1570 = vpop.f32.mrb[0].mxu0
        %v1571 = vadd.f32 0.0, %v1570
        %v1572 = vpop.f32.mrb[0].mxu0
        %1573 = vmatprep.mubr.bf16.mxu0 0
        %1574 = vmatmul.mubr.bf16.gmra.mrb[0].mxu0 %v1502
        %v1575 = vpop.f32.mrb[0].mxu0
        %v1576 = vadd.f32 0.0, %v1575
        %v1577 = vpop.f32.mrb[0].mxu0
        %v1578 = vpop.f32.mrb[0].mxu0
        %v1579 = vadd.f32 0.0, %v1578
        %v1580 = vpop.f32.mrb[0].mxu0
        %1581 = vmatprep.mubr.bf16.mxu0 0
        %1582 = vmatmul.mubr.bf16.gmra.mrb[0].mxu0 %v1503
        %v1583 = vpop.f32.mrb[0].mxu0
        %v1584 = vadd.f32 0.0, %v1583
        %v1585 = vpop.f32.mrb[0].mxu0
        %v1586 = vpop.f32.mrb[0].mxu0
        %v1587 = vadd.f32 0.0, %v1586
        %v1588 = vpop.f32.mrb[0].mxu0
        %1589 = vmatprep.mubr.bf16.mxu0 0
        %1590 = vmatmul.mubr.bf16.gmra.mrb[0].mxu0 %v1504
        %v1591 = vpop.f32.mrb[0].mxu0
        %v1592 = vadd.f32 0.0, %v1591
        %v1593 = vpop.f32.mrb[0].mxu0
        %v1594 = vpop.f32.mrb[0].mxu0
        %v1595 = vadd.f32 0.0, %v1594
        %v1596 = vpop.f32.mrb[0].mxu0
        %1597 = vmatprep.mubr.bf16.mxu0 0
        %1598 = vmatmul.mubr.bf16.gmra.mrb[0].mxu0 %v1505
        %v1599 = vpop.f32.mrb[0].mxu0
        %v1600 = vadd.f32 0.0, %v1599
        %v1601 = vpop.f32.mrb[0].mxu0
        %v1602 = vpop.f32.mrb[0].mxu0
        %v1603 = vadd.f32 0.0, %v1602
        %v1604 = vpop.f32.mrb[0].mxu0
        %1605 = vmatprep.mubr.bf16.mxu0 0
        %1606 = vmatmul.mubr.bf16.gmra.mrb[0].mxu0 %v1506
        %v1607 = vpop.f32.mrb[0].mxu0
        %v1608 = vadd.f32 0.0, %v1607
        %v1609 = vpop.f32.mrb[0].mxu0
        %v1610 = vpop.f32.mrb[0].mxu0
        %v1611 = vadd.f32 0.0, %v1610
        %v1612 = vpop.f32.mrb[0].mxu0
        %1613 = vmatprep.mubr.bf16.mxu0 0
        %1614 = vmatmul.mubr.bf16.gmra.mrb[0].mxu0 %v1507
        %v1615 = vpop.f32.mrb[0].mxu0
        %v1616 = vadd.f32 0.0, %v1615
        %v1617 = vpop.f32.mrb[0].mxu0
        %v1618 = vpop.f32.mrb[0].mxu0
        %v1619 = vadd.f32 0.0, %v1618
        %v1620 = vpop.f32.mrb[0].mxu0
        %1621 = vmatprep.mubr.bf16.mxu0 0
        %1622 = vmatmul.mubr.bf16.gmra.mrb[0].mxu0 %v1508
        %v1623 = vpop.f32.mrb[0].mxu0
        %v1624 = vadd.f32 0.0, %v1623
        %v1625 = vpop.f32.mrb[0].mxu0
        %v1626 = vpop.f32.mrb[0].mxu0
        %v1627 = vadd.f32 0.0, %v1626
        %v1628 = vpop.f32.mrb[0].mxu0
        %1629 = vdwg.mxu0
        %1630 = vrot.lane.b32.xlu0 %v665, 120
        %v1631 = vpop.permute.xlu0 %1630
        %1632 = vrot.lane.b32.xlu0 %v666, 120
        %v1633 = vpop.permute.xlu0 %1632
        %1634 = vrot.lane.b32.xlu0 %v667, 120
        %v1635 = vpop.permute.xlu0 %1634
        %1636 = vrot.lane.b32.xlu0 %v668, 120
        %v1637 = vpop.permute.xlu0 %1636
        %1638 = vrot.lane.b32.xlu0 %v669, 120
        %v1639 = vpop.permute.xlu0 %1638
        %1640 = vrot.lane.b32.xlu0 %v670, 120
        %v1641 = vpop.permute.xlu0 %1640
        %1642 = vrot.lane.b32.xlu0 %v671, 120
        %v1643 = vpop.permute.xlu0 %1642
        %1644 = vrot.lane.b32.xlu0 %v672, 120
        %v1645 = vpop.permute.xlu0 %1644
        %1646 = vrot.lane.b32.xlu0 %v665, 104
        %v1647 = vpop.permute.xlu0 %1646
        %1648 = vrot.lane.b32.xlu0 %v666, 104
        %v1649 = vpop.permute.xlu0 %1648
        %1650 = vrot.lane.b32.xlu0 %v667, 104
        %v1651 = vpop.permute.xlu0 %1650
        %1652 = vrot.lane.b32.xlu0 %v668, 104
        %v1653 = vpop.permute.xlu0 %1652
        %1654 = vrot.lane.b32.xlu0 %v669, 104
        %v1655 = vpop.permute.xlu0 %1654
        %1656 = vrot.lane.b32.xlu0 %v670, 104
        %v1657 = vpop.permute.xlu0 %1656
        %1658 = vrot.lane.b32.xlu0 %v671, 104
        %v1659 = vpop.permute.xlu0 %1658
        %1660 = vrot.lane.b32.xlu0 %v672, 104
        %v1661 = vpop.permute.xlu0 %1660
        %v1663 = vsel %vm697, %v1631, 0
        %v1666 = vsel %vm697, %v1633, 0
        %v1669 = vsel %vm697, %v1635, 0
        %v1672 = vsel %vm697, %v1637, 0
        %v1675 = vsel %vm697, %v1639, 0
        %v1678 = vsel %vm697, %v1641, 0
        %v1681 = vsel %vm697, %v1643, 0
        %v1684 = vsel %vm697, %v1645, 0
        %v1687 = vsel %vm697, %v1647, 0
        %v1690 = vsel %vm697, %v1649, 0
        %v1693 = vsel %vm697, %v1651, 0
        %v1696 = vsel %vm697, %v1653, 0
        %v1699 = vsel %vm697, %v1655, 0
        %v1702 = vsel %vm697, %v1657, 0
        %v1705 = vsel %vm697, %v1659, 0
        %v1708 = vsel %vm697, %v1661, 0
        %1710 = vmatprep.subr.bf16.mxu0 0
        %1711 = vmatpush1.bf16.xpose.msra.mxu0 %v1687
        %1712 = vmatprep.subr.bf16.mxu0 0
        %1713 = vmatpush1.bf16.xpose.msra.mxu0 %v1690
        %1714 = vmatprep.subr.bf16.mxu0 0
        %1715 = vmatpush1.bf16.xpose.msra.mxu0 %v1693
        %1716 = vmatprep.subr.bf16.mxu0 0
        %1717 = vmatpush1.bf16.xpose.msra.mxu0 %v1696
        %1718 = vmatprep.subr.bf16.mxu0 0
        %1719 = vmatpush1.bf16.xpose.msra.mxu0 %v1699
        %1720 = vmatprep.subr.bf16.mxu0 0
        %1721 = vmatpush1.bf16.xpose.msra.mxu0 %v1702
        %1722 = vmatprep.subr.bf16.mxu0 0
        %1723 = vmatpush1.bf16.xpose.msra.mxu0 %v1705
        %1724 = vmatprep.subr.bf16.mxu0 0
        %1725 = vmatpush1.bf16.xpose.msra.mxu0 %v1708
        %1726 = vmatprep.subr.bf16.mxu0 0
        %1727 = vmatpush1.bf16.xpose.msra.mxu0 0
        %1728 = vmatprep.subr.bf16.mxu0 0
        %1729 = vmatpush1.bf16.xpose.msra.mxu0 0
        %1730 = vmatprep.subr.bf16.mxu0 0
        %1731 = vmatpush1.bf16.xpose.msra.mxu0 0
        %1732 = vmatprep.subr.bf16.mxu0 0
        %1733 = vmatpush1.bf16.xpose.msra.mxu0 0
        %1734 = vmatprep.subr.bf16.mxu0 0
        %1735 = vmatpush1.bf16.xpose.msra.mxu0 0
        %1736 = vmatprep.subr.bf16.mxu0 0
        %1737 = vmatpush1.bf16.xpose.msra.mxu0 0
        %1738 = vmatprep.subr.bf16.mxu0 0
        %1739 = vmatpush1.bf16.xpose.msra.mxu0 0
        %1740 = vmatprep.subr.bf16.mxu0 0
        %1741 = vmatpush1.bf16.xpose.msra.mxu0 0
        %1742 = vmatprep.mubr.bf16.mxu0 0
        %1743 = vmatmul.mubr.bf16.gmra.mrb[0].mxu0 %v1663
        %v1744 = vpop.f32.mrb[0].mxu0
        %v1745 = vadd.f32 0.0, %v1744
        %v1746 = vpop.f32.mrb[0].mxu0
        %v1747 = vpop.f32.mrb[0].mxu0
        %v1748 = vadd.f32 0.0, %v1747
        %v1749 = vpop.f32.mrb[0].mxu0
        %1750 = vmatprep.mubr.bf16.mxu0 0
        %1751 = vmatmul.mubr.bf16.gmra.mrb[0].mxu0 %v1666
        %v1752 = vpop.f32.mrb[0].mxu0
        %v1753 = vadd.f32 0.0, %v1752
        %v1754 = vpop.f32.mrb[0].mxu0
        %v1755 = vpop.f32.mrb[0].mxu0
        %v1756 = vadd.f32 0.0, %v1755
        %v1757 = vpop.f32.mrb[0].mxu0
        %1758 = vmatprep.mubr.bf16.mxu0 0
        %1759 = vmatmul.mubr.bf16.gmra.mrb[0].mxu0 %v1669
        %v1760 = vpop.f32.mrb[0].mxu0
        %v1761 = vadd.f32 0.0, %v1760
        %v1762 = vpop.f32.mrb[0].mxu0
        %v1763 = vpop.f32.mrb[0].mxu0
        %v1764 = vadd.f32 0.0, %v1763
        %v1765 = vpop.f32.mrb[0].mxu0
        %1766 = vmatprep.mubr.bf16.mxu0 0
        %1767 = vmatmul.mubr.bf16.gmra.mrb[0].mxu0 %v1672
        %v1768 = vpop.f32.mrb[0].mxu0
        %v1769 = vadd.f32 0.0, %v1768
        %v1770 = vpop.f32.mrb[0].mxu0
        %v1771 = vpop.f32.mrb[0].mxu0
        %v1772 = vadd.f32 0.0, %v1771
        %v1773 = vpop.f32.mrb[0].mxu0
        %1774 = vmatprep.mubr.bf16.mxu0 0
        %1775 = vmatmul.mubr.bf16.gmra.mrb[0].mxu0 %v1675
        %v1776 = vpop.f32.mrb[0].mxu0
        %v1777 = vadd.f32 0.0, %v1776
        %v1778 = vpop.f32.mrb[0].mxu0
        %v1779 = vpop.f32.mrb[0].mxu0
        %v1780 = vadd.f32 0.0, %v1779
        %v1781 = vpop.f32.mrb[0].mxu0
        %1782 = vmatprep.mubr.bf16.mxu0 0
        %1783 = vmatmul.mubr.bf16.gmra.mrb[0].mxu0 %v1678
        %v1784 = vpop.f32.mrb[0].mxu0
        %v1785 = vadd.f32 0.0, %v1784
        %v1786 = vpop.f32.mrb[0].mxu0
        %v1787 = vpop.f32.mrb[0].mxu0
        %v1788 = vadd.f32 0.0, %v1787
        %v1789 = vpop.f32.mrb[0].mxu0
        %1790 = vmatprep.mubr.bf16.mxu0 0
        %1791 = vmatmul.mubr.bf16.gmra.mrb[0].mxu0 %v1681
        %v1792 = vpop.f32.mrb[0].mxu0
        %v1793 = vadd.f32 0.0, %v1792
        %v1794 = vpop.f32.mrb[0].mxu0
        %v1795 = vpop.f32.mrb[0].mxu0
        %v1796 = vadd.f32 0.0, %v1795
        %v1797 = vpop.f32.mrb[0].mxu0
        %1798 = vmatprep.mubr.bf16.mxu0 0
        %1799 = vmatmul.mubr.bf16.gmra.mrb[0].mxu0 %v1684
        %v1800 = vpop.f32.mrb[0].mxu0
        %v1801 = vadd.f32 0.0, %v1800
        %v1802 = vpop.f32.mrb[0].mxu0
        %v1803 = vpop.f32.mrb[0].mxu0
        %v1804 = vadd.f32 0.0, %v1803
        %v1805 = vpop.f32.mrb[0].mxu0
        %1806 = vdwg.mxu0
        %v1807 = vmul.f32 %v1745, 0.35355338
        %v1808 = vmul.f32 %v1748, 0.35355338
        %v1809 = vmul.f32 %v1753, 0.35355338
        %v1810 = vmul.f32 %v1756, 0.35355338
        %v1811 = vmul.f32 %v1761, 0.35355338
        %v1812 = vmul.f32 %v1764, 0.35355338
        %v1813 = vmul.f32 %v1769, 0.35355338
        %v1814 = vmul.f32 %v1772, 0.35355338
        %v1815 = vmul.f32 %v1777, 0.35355338
        %v1816 = vmul.f32 %v1780, 0.35355338
        %v1817 = vmul.f32 %v1785, 0.35355338
        %v1818 = vmul.f32 %v1788, 0.35355338
        %v1819 = vmul.f32 %v1793, 0.35355338
        %v1820 = vmul.f32 %v1796, 0.35355338
        %v1821 = vmul.f32 %v1801, 0.35355338
        %v1822 = vmul.f32 %v1804, 0.35355338
        %v1823 = vadd.f32 %v1807, %v456
        %v1824 = vadd.f32 %v1808, %v457
        %v1825 = vadd.f32 %v1809, %v458
        %v1826 = vadd.f32 %v1810, %v459
        %v1827 = vadd.f32 %v1811, %v460
        %v1828 = vadd.f32 %v1812, %v461
        %v1829 = vadd.f32 %v1813, %v462
        %v1830 = vadd.f32 %v1814, %v463
        %v1831 = vadd.f32 %v1815, %v464
        %v1832 = vadd.f32 %v1816, %v465
        %v1833 = vadd.f32 %v1817, %v466
        %v1834 = vadd.f32 %v1818, %v467
        %v1835 = vadd.f32 %v1819, %v468
        %v1836 = vadd.f32 %v1820, %v469
        %v1837 = vadd.f32 %v1821, %v470
        %v1838 = vadd.f32 %v1822, %v471
        %1839 = vmax.xlane.f32.xlu0 %v1823
        %v1840 = vpop.xlane.xlu0 %1839
        %1841 = vmax.xlane.f32.xlu0 %v1824
        %v1842 = vpop.xlane.xlu0 %1841
        %1843 = vmax.xlane.f32.xlu0 %v1825
        %v1844 = vpop.xlane.xlu0 %1843
        %1845 = vmax.xlane.f32.xlu0 %v1826
        %v1846 = vpop.xlane.xlu0 %1845
        %1847 = vmax.xlane.f32.xlu0 %v1827
        %v1848 = vpop.xlane.xlu0 %1847
        %1849 = vmax.xlane.f32.xlu0 %v1828
        %v1850 = vpop.xlane.xlu0 %1849
        %1851 = vmax.xlane.f32.xlu0 %v1829
        %v1852 = vpop.xlane.xlu0 %1851
        %1853 = vmax.xlane.f32.xlu0 %v1830
        %v1854 = vpop.xlane.xlu0 %1853
        %1855 = vmax.xlane.f32.xlu0 %v1831
        %v1856 = vpop.xlane.xlu0 %1855
        %1857 = vmax.xlane.f32.xlu0 %v1832
        %v1858 = vpop.xlane.xlu0 %1857
        %1859 = vmax.xlane.f32.xlu0 %v1833
        %v1860 = vpop.xlane.xlu0 %1859
        %1861 = vmax.xlane.f32.xlu0 %v1834
        %v1862 = vpop.xlane.xlu0 %1861
        %1863 = vmax.xlane.f32.xlu0 %v1835
        %v1864 = vpop.xlane.xlu0 %1863
        %1865 = vmax.xlane.f32.xlu0 %v1836
        %v1866 = vpop.xlane.xlu0 %1865
        %1867 = vmax.xlane.f32.xlu0 %v1837
        %v1868 = vpop.xlane.xlu0 %1867
        %1869 = vmax.xlane.f32.xlu0 %v1838
        %v1870 = vpop.xlane.xlu0 %1869
        %v1871 = vsub.f32 %v1823, %v1840
        %v1872 = vsub.f32 %v1824, %v1842
        %v1873 = vsub.f32 %v1825, %v1844
        %v1874 = vsub.f32 %v1826, %v1846
        %v1875 = vsub.f32 %v1827, %v1848
        %v1876 = vsub.f32 %v1828, %v1850
        %v1877 = vsub.f32 %v1829, %v1852
        %v1878 = vsub.f32 %v1830, %v1854
        %v1879 = vsub.f32 %v1831, %v1856
        %v1880 = vsub.f32 %v1832, %v1858
        %v1881 = vsub.f32 %v1833, %v1860
        %v1882 = vsub.f32 %v1834, %v1862
        %v1883 = vsub.f32 %v1835, %v1864
        %v1884 = vsub.f32 %v1836, %v1866
        %v1885 = vsub.f32 %v1837, %v1868
        %v1886 = vsub.f32 %v1838, %v1870
        %v1887 = vmul.f32 %v1871, 1.442695
        %v1888 = vpow.pop %v1887
        %v1889 = vmul.f32 %v1872, 1.442695
        %v1890 = vpow.pop %v1889
        %v1891 = vmul.f32 %v1873, 1.442695
        %v1892 = vpow.pop %v1891
        %v1893 = vmul.f32 %v1874, 1.442695
        %v1894 = vpow.pop %v1893
        %v1895 = vmul.f32 %v1875, 1.442695
        %v1896 = vpow.pop %v1895
        %v1897 = vmul.f32 %v1876, 1.442695
        %v1898 = vpow.pop %v1897
        %v1899 = vmul.f32 %v1877, 1.442695
        %v1900 = vpow.pop %v1899
        %v1901 = vmul.f32 %v1878, 1.442695
        %v1902 = vpow.pop %v1901
        %v1903 = vmul.f32 %v1879, 1.442695
        %v1904 = vpow.pop %v1903
        %v1905 = vmul.f32 %v1880, 1.442695
        %v1906 = vpow.pop %v1905
        %v1907 = vmul.f32 %v1881, 1.442695
        %v1908 = vpow.pop %v1907
        %v1909 = vmul.f32 %v1882, 1.442695
        %v1910 = vpow.pop %v1909
        %v1911 = vmul.f32 %v1883, 1.442695
        %v1912 = vpow.pop %v1911
        %v1913 = vmul.f32 %v1884, 1.442695
        %v1914 = vpow.pop %v1913
        %v1915 = vmul.f32 %v1885, 1.442695
        %v1916 = vpow.pop %v1915
        %v1917 = vmul.f32 %v1886, 1.442695
        %v1918 = vpow.pop %v1917
        %1919 = vadd.xlane.f32.xlu0 %v1888
        %v1920 = vpop.xlane.xlu0 %1919
        %1921 = vadd.xlane.f32.xlu0 %v1890
        %v1922 = vpop.xlane.xlu0 %1921
        %1923 = vadd.xlane.f32.xlu0 %v1892
        %v1924 = vpop.xlane.xlu0 %1923
        %1925 = vadd.xlane.f32.xlu0 %v1894
        %v1926 = vpop.xlane.xlu0 %1925
        %1927 = vadd.xlane.f32.xlu0 %v1896
        %v1928 = vpop.xlane.xlu0 %1927
        %1929 = vadd.xlane.f32.xlu0 %v1898
        %v1930 = vpop.xlane.xlu0 %1929
        %1931 = vadd.xlane.f32.xlu0 %v1900
        %v1932 = vpop.xlane.xlu0 %1931
        %1933 = vadd.xlane.f32.xlu0 %v1902
        %v1934 = vpop.xlane.xlu0 %1933
        %1935 = vadd.xlane.f32.xlu0 %v1904
        %v1936 = vpop.xlane.xlu0 %1935
        %1937 = vadd.xlane.f32.xlu0 %v1906
        %v1938 = vpop.xlane.xlu0 %1937
        %1939 = vadd.xlane.f32.xlu0 %v1908
        %v1940 = vpop.xlane.xlu0 %1939
        %1941 = vadd.xlane.f32.xlu0 %v1910
        %v1942 = vpop.xlane.xlu0 %1941
        %1943 = vadd.xlane.f32.xlu0 %v1912
        %v1944 = vpop.xlane.xlu0 %1943
        %1945 = vadd.xlane.f32.xlu0 %v1914
        %v1946 = vpop.xlane.xlu0 %1945
        %1947 = vadd.xlane.f32.xlu0 %v1916
        %v1948 = vpop.xlane.xlu0 %1947
        %1949 = vadd.xlane.f32.xlu0 %v1918
        %v1950 = vpop.xlane.xlu0 %1949
        %v1951 = vrcp.pop %v1920
        %v1952 = vrcp.pop %v1922
        %v1953 = vrcp.pop %v1924
        %v1954 = vrcp.pop %v1926
        %v1955 = vrcp.pop %v1928
        %v1956 = vrcp.pop %v1930
        %v1957 = vrcp.pop %v1932
        %v1958 = vrcp.pop %v1934
        %v1959 = vrcp.pop %v1936
        %v1960 = vrcp.pop %v1938
        %v1961 = vrcp.pop %v1940
        %v1962 = vrcp.pop %v1942
        %v1963 = vrcp.pop %v1944
        %v1964 = vrcp.pop %v1946
        %v1965 = vrcp.pop %v1948
        %v1966 = vrcp.pop %v1950
        %v1967 = vmul.f32 %v1888, %v1951
        %v1968 = vmul.f32 %v1890, %v1952
        %v1969 = vmul.f32 %v1892, %v1953
        %v1970 = vmul.f32 %v1894, %v1954
        %v1971 = vmul.f32 %v1896, %v1955
        %v1972 = vmul.f32 %v1898, %v1956
        %v1973 = vmul.f32 %v1900, %v1957
        %v1974 = vmul.f32 %v1902, %v1958
        %v1975 = vmul.f32 %v1904, %v1959
        %v1976 = vmul.f32 %v1906, %v1960
        %v1977 = vmul.f32 %v1908, %v1961
        %v1978 = vmul.f32 %v1910, %v1962
        %v1979 = vmul.f32 %v1912, %v1963
        %v1980 = vmul.f32 %v1914, %v1964
        %v1981 = vmul.f32 %v1916, %v1965
        %v1982 = vmul.f32 %v1918, %v1966
        %v1983 = vpack.c.bf16 %v1968, %v1967
        %v1984 = vpack.c.bf16 %v1970, %v1969
        %v1985 = vpack.c.bf16 %v1972, %v1971
        %v1986 = vpack.c.bf16 %v1974, %v1973
        %v1987 = vpack.c.bf16 %v1976, %v1975
        %v1988 = vpack.c.bf16 %v1978, %v1977
        %v1989 = vpack.c.bf16 %v1980, %v1979
        %v1990 = vpack.c.bf16 %v1982, %v1981
        %1991 = vrot.lane.b32.xlu0 %v665, 88
        %v1992 = vpop.permute.xlu0 %1991
        %1993 = vrot.lane.b32.xlu0 %v666, 88
        %v1994 = vpop.permute.xlu0 %1993
        %1995 = vrot.lane.b32.xlu0 %v667, 88
        %v1996 = vpop.permute.xlu0 %1995
        %1997 = vrot.lane.b32.xlu0 %v668, 88
        %v1998 = vpop.permute.xlu0 %1997
        %1999 = vrot.lane.b32.xlu0 %v669, 88
        %v2000 = vpop.permute.xlu0 %1999
        %2001 = vrot.lane.b32.xlu0 %v670, 88
        %v2002 = vpop.permute.xlu0 %2001
        %2003 = vrot.lane.b32.xlu0 %v671, 88
        %v2004 = vpop.permute.xlu0 %2003
        %2005 = vrot.lane.b32.xlu0 %v672, 88
        %v2006 = vpop.permute.xlu0 %2005
        %2015 = vmatprep.subr.bf16.mxu0 0
        %2016 = vmatpush1.bf16.msra.mxu0 %v1992
        %2017 = vmatprep.subr.bf16.mxu0 0
        %2018 = vmatpush1.bf16.msra.mxu0 %v1994
        %2019 = vmatprep.subr.bf16.mxu0 0
        %2020 = vmatpush1.bf16.msra.mxu0 %v1996
        %2021 = vmatprep.subr.bf16.mxu0 0
        %2022 = vmatpush1.bf16.msra.mxu0 %v1998
        %2023 = vmatprep.subr.bf16.mxu0 0
        %2024 = vmatpush1.bf16.msra.mxu0 %v2000
        %2025 = vmatprep.subr.bf16.mxu0 0
        %2026 = vmatpush1.bf16.msra.mxu0 %v2002
        %2027 = vmatprep.subr.bf16.mxu0 0
        %2028 = vmatpush1.bf16.msra.mxu0 %v2004
        %2029 = vmatprep.subr.bf16.mxu0 0
        %2030 = vmatpush1.bf16.msra.mxu0 %v2006
        %2031 = vmatprep.subr.bf16.mxu0 0
        %2032 = vmatpush1.bf16.msra.mxu0 0
        %2033 = vmatprep.subr.bf16.mxu0 0
        %2034 = vmatpush1.bf16.msra.mxu0 0
        %2035 = vmatprep.subr.bf16.mxu0 0
        %2036 = vmatpush1.bf16.msra.mxu0 0
        %2037 = vmatprep.subr.bf16.mxu0 0
        %2038 = vmatpush1.bf16.msra.mxu0 0
        %2039 = vmatprep.subr.bf16.mxu0 0
        %2040 = vmatpush1.bf16.msra.mxu0 0
        %2041 = vmatprep.subr.bf16.mxu0 0
        %2042 = vmatpush1.bf16.msra.mxu0 0
        %2043 = vmatprep.subr.bf16.mxu0 0
        %2044 = vmatpush1.bf16.msra.mxu0 0
        %2045 = vmatprep.subr.bf16.mxu0 0
        %2046 = vmatpush1.bf16.msra.mxu0 0
        %2047 = vmatprep.mubr.bf16.mxu0 0
        %2048 = vmatmul.mubr.bf16.gmra.mrb[0].mxu0 %v1983
        %v2049 = vpop.f32.mrb[0].mxu0
        %v2050 = vadd.f32 0.0, %v2049
        %v2051 = vpop.f32.mrb[0].mxu0
        %v2052 = vpop.f32.mrb[0].mxu0
        %v2053 = vadd.f32 0.0, %v2052
        %v2054 = vpop.f32.mrb[0].mxu0
        %2055 = vmatprep.mubr.bf16.mxu0 0
        %2056 = vmatmul.mubr.bf16.gmra.mrb[0].mxu0 %v1984
        %v2057 = vpop.f32.mrb[0].mxu0
        %v2058 = vadd.f32 0.0, %v2057
        %v2059 = vpop.f32.mrb[0].mxu0
        %v2060 = vpop.f32.mrb[0].mxu0
        %v2061 = vadd.f32 0.0, %v2060
        %v2062 = vpop.f32.mrb[0].mxu0
        %2063 = vmatprep.mubr.bf16.mxu0 0
        %2064 = vmatmul.mubr.bf16.gmra.mrb[0].mxu0 %v1985
        %v2065 = vpop.f32.mrb[0].mxu0
        %v2066 = vadd.f32 0.0, %v2065
        %v2067 = vpop.f32.mrb[0].mxu0
        %v2068 = vpop.f32.mrb[0].mxu0
        %v2069 = vadd.f32 0.0, %v2068
        %v2070 = vpop.f32.mrb[0].mxu0
        %2071 = vmatprep.mubr.bf16.mxu0 0
        %2072 = vmatmul.mubr.bf16.gmra.mrb[0].mxu0 %v1986
        %v2073 = vpop.f32.mrb[0].mxu0
        %v2074 = vadd.f32 0.0, %v2073
        %v2075 = vpop.f32.mrb[0].mxu0
        %v2076 = vpop.f32.mrb[0].mxu0
        %v2077 = vadd.f32 0.0, %v2076
        %v2078 = vpop.f32.mrb[0].mxu0
        %2079 = vmatprep.mubr.bf16.mxu0 0
        %2080 = vmatmul.mubr.bf16.gmra.mrb[0].mxu0 %v1987
        %v2081 = vpop.f32.mrb[0].mxu0
        %v2082 = vadd.f32 0.0, %v2081
        %v2083 = vpop.f32.mrb[0].mxu0
        %v2084 = vpop.f32.mrb[0].mxu0
        %v2085 = vadd.f32 0.0, %v2084
        %v2086 = vpop.f32.mrb[0].mxu0
        %2087 = vmatprep.mubr.bf16.mxu0 0
        %2088 = vmatmul.mubr.bf16.gmra.mrb[0].mxu0 %v1988
        %v2089 = vpop.f32.mrb[0].mxu0
        %v2090 = vadd.f32 0.0, %v2089
        %v2091 = vpop.f32.mrb[0].mxu0
        %v2092 = vpop.f32.mrb[0].mxu0
        %v2093 = vadd.f32 0.0, %v2092
        %v2094 = vpop.f32.mrb[0].mxu0
        %2095 = vmatprep.mubr.bf16.mxu0 0
        %2096 = vmatmul.mubr.bf16.gmra.mrb[0].mxu0 %v1989
        %v2097 = vpop.f32.mrb[0].mxu0
        %v2098 = vadd.f32 0.0, %v2097
        %v2099 = vpop.f32.mrb[0].mxu0
        %v2100 = vpop.f32.mrb[0].mxu0
        %v2101 = vadd.f32 0.0, %v2100
        %v2102 = vpop.f32.mrb[0].mxu0
        %2103 = vmatprep.mubr.bf16.mxu0 0
        %2104 = vmatmul.mubr.bf16.gmra.mrb[0].mxu0 %v1990
        %v2105 = vpop.f32.mrb[0].mxu0
        %v2106 = vadd.f32 0.0, %v2105
        %v2107 = vpop.f32.mrb[0].mxu0
        %v2108 = vpop.f32.mrb[0].mxu0
        %v2109 = vadd.f32 0.0, %v2108
        %v2110 = vpop.f32.mrb[0].mxu0
        %2111 = vdwg.mxu0
        %2112 = vrot.lane.b32.xlu0 %v665, 72
        %v2113 = vpop.permute.xlu0 %2112
        %2114 = vrot.lane.b32.xlu0 %v666, 72
        %v2115 = vpop.permute.xlu0 %2114
        %2116 = vrot.lane.b32.xlu0 %v667, 72
        %v2117 = vpop.permute.xlu0 %2116
        %2118 = vrot.lane.b32.xlu0 %v668, 72
        %v2119 = vpop.permute.xlu0 %2118
        %2120 = vrot.lane.b32.xlu0 %v669, 72
        %v2121 = vpop.permute.xlu0 %2120
        %2122 = vrot.lane.b32.xlu0 %v670, 72
        %v2123 = vpop.permute.xlu0 %2122
        %2124 = vrot.lane.b32.xlu0 %v671, 72
        %v2125 = vpop.permute.xlu0 %2124
        %2126 = vrot.lane.b32.xlu0 %v672, 72
        %v2127 = vpop.permute.xlu0 %2126
        %2128 = vrot.lane.b32.xlu0 %v665, 56
        %v2129 = vpop.permute.xlu0 %2128
        %2130 = vrot.lane.b32.xlu0 %v666, 56
        %v2131 = vpop.permute.xlu0 %2130
        %2132 = vrot.lane.b32.xlu0 %v667, 56
        %v2133 = vpop.permute.xlu0 %2132
        %2134 = vrot.lane.b32.xlu0 %v668, 56
        %v2135 = vpop.permute.xlu0 %2134
        %2136 = vrot.lane.b32.xlu0 %v669, 56
        %v2137 = vpop.permute.xlu0 %2136
        %2138 = vrot.lane.b32.xlu0 %v670, 56
        %v2139 = vpop.permute.xlu0 %2138
        %2140 = vrot.lane.b32.xlu0 %v671, 56
        %v2141 = vpop.permute.xlu0 %2140
        %2142 = vrot.lane.b32.xlu0 %v672, 56
        %v2143 = vpop.permute.xlu0 %2142
        %v2145 = vsel %vm697, %v2113, 0
        %v2148 = vsel %vm697, %v2115, 0
        %v2151 = vsel %vm697, %v2117, 0
        %v2154 = vsel %vm697, %v2119, 0
        %v2157 = vsel %vm697, %v2121, 0
        %v2160 = vsel %vm697, %v2123, 0
        %v2163 = vsel %vm697, %v2125, 0
        %v2166 = vsel %vm697, %v2127, 0
        %v2169 = vsel %vm697, %v2129, 0
        %v2172 = vsel %vm697, %v2131, 0
        %v2175 = vsel %vm697, %v2133, 0
        %v2178 = vsel %vm697, %v2135, 0
        %v2181 = vsel %vm697, %v2137, 0
        %v2184 = vsel %vm697, %v2139, 0
        %v2187 = vsel %vm697, %v2141, 0
        %v2190 = vsel %vm697, %v2143, 0
        %2192 = vmatprep.subr.bf16.mxu0 0
        %2193 = vmatpush1.bf16.xpose.msra.mxu0 %v2169
        %2194 = vmatprep.subr.bf16.mxu0 0
        %2195 = vmatpush1.bf16.xpose.msra.mxu0 %v2172
        %2196 = vmatprep.subr.bf16.mxu0 0
        %2197 = vmatpush1.bf16.xpose.msra.mxu0 %v2175
        %2198 = vmatprep.subr.bf16.mxu0 0
        %2199 = vmatpush1.bf16.xpose.msra.mxu0 %v2178
        %2200 = vmatprep.subr.bf16.mxu0 0
        %2201 = vmatpush1.bf16.xpose.msra.mxu0 %v2181
        %2202 = vmatprep.subr.bf16.mxu0 0
        %2203 = vmatpush1.bf16.xpose.msra.mxu0 %v2184
        %2204 = vmatprep.subr.bf16.mxu0 0
        %2205 = vmatpush1.bf16.xpose.msra.mxu0 %v2187
        %2206 = vmatprep.subr.bf16.mxu0 0
        %2207 = vmatpush1.bf16.xpose.msra.mxu0 %v2190
        %2208 = vmatprep.subr.bf16.mxu0 0
        %2209 = vmatpush1.bf16.xpose.msra.mxu0 0
        %2210 = vmatprep.subr.bf16.mxu0 0
        %2211 = vmatpush1.bf16.xpose.msra.mxu0 0
        %2212 = vmatprep.subr.bf16.mxu0 0
        %2213 = vmatpush1.bf16.xpose.msra.mxu0 0
        %2214 = vmatprep.subr.bf16.mxu0 0
        %2215 = vmatpush1.bf16.xpose.msra.mxu0 0
        %2216 = vmatprep.subr.bf16.mxu0 0
        %2217 = vmatpush1.bf16.xpose.msra.mxu0 0
        %2218 = vmatprep.subr.bf16.mxu0 0
        %2219 = vmatpush1.bf16.xpose.msra.mxu0 0
        %2220 = vmatprep.subr.bf16.mxu0 0
        %2221 = vmatpush1.bf16.xpose.msra.mxu0 0
        %2222 = vmatprep.subr.bf16.mxu0 0
        %2223 = vmatpush1.bf16.xpose.msra.mxu0 0
        %2224 = vmatprep.mubr.bf16.mxu0 0
        %2225 = vmatmul.mubr.bf16.gmra.mrb[0].mxu0 %v2145
        %v2226 = vpop.f32.mrb[0].mxu0
        %v2227 = vadd.f32 0.0, %v2226
        %v2228 = vpop.f32.mrb[0].mxu0
        %v2229 = vpop.f32.mrb[0].mxu0
        %v2230 = vadd.f32 0.0, %v2229
        %v2231 = vpop.f32.mrb[0].mxu0
        %2232 = vmatprep.mubr.bf16.mxu0 0
        %2233 = vmatmul.mubr.bf16.gmra.mrb[0].mxu0 %v2148
        %v2234 = vpop.f32.mrb[0].mxu0
        %v2235 = vadd.f32 0.0, %v2234
        %v2236 = vpop.f32.mrb[0].mxu0
        %v2237 = vpop.f32.mrb[0].mxu0
        %v2238 = vadd.f32 0.0, %v2237
        %v2239 = vpop.f32.mrb[0].mxu0
        %2240 = vmatprep.mubr.bf16.mxu0 0
        %2241 = vmatmul.mubr.bf16.gmra.mrb[0].mxu0 %v2151
        %v2242 = vpop.f32.mrb[0].mxu0
        %v2243 = vadd.f32 0.0, %v2242
        %v2244 = vpop.f32.mrb[0].mxu0
        %v2245 = vpop.f32.mrb[0].mxu0
        %v2246 = vadd.f32 0.0, %v2245
        %v2247 = vpop.f32.mrb[0].mxu0
        %2248 = vmatprep.mubr.bf16.mxu0 0
        %2249 = vmatmul.mubr.bf16.gmra.mrb[0].mxu0 %v2154
        %v2250 = vpop.f32.mrb[0].mxu0
        %v2251 = vadd.f32 0.0, %v2250
        %v2252 = vpop.f32.mrb[0].mxu0
        %v2253 = vpop.f32.mrb[0].mxu0
        %v2254 = vadd.f32 0.0, %v2253
        %v2255 = vpop.f32.mrb[0].mxu0
        %2256 = vmatprep.mubr.bf16.mxu0 0
        %2257 = vmatmul.mubr.bf16.gmra.mrb[0].mxu0 %v2157
        %v2258 = vpop.f32.mrb[0].mxu0
        %v2259 = vadd.f32 0.0, %v2258
        %v2260 = vpop.f32.mrb[0].mxu0
        %v2261 = vpop.f32.mrb[0].mxu0
        %v2262 = vadd.f32 0.0, %v2261
        %v2263 = vpop.f32.mrb[0].mxu0
        %2264 = vmatprep.mubr.bf16.mxu0 0
        %2265 = vmatmul.mubr.bf16.gmra.mrb[0].mxu0 %v2160
        %v2266 = vpop.f32.mrb[0].mxu0
        %v2267 = vadd.f32 0.0, %v2266
        %v2268 = vpop.f32.mrb[0].mxu0
        %v2269 = vpop.f32.mrb[0].mxu0
        %v2270 = vadd.f32 0.0, %v2269
        %v2271 = vpop.f32.mrb[0].mxu0
        %2272 = vmatprep.mubr.bf16.mxu0 0
        %2273 = vmatmul.mubr.bf16.gmra.mrb[0].mxu0 %v2163
        %v2274 = vpop.f32.mrb[0].mxu0
        %v2275 = vadd.f32 0.0, %v2274
        %v2276 = vpop.f32.mrb[0].mxu0
        %v2277 = vpop.f32.mrb[0].mxu0
        %v2278 = vadd.f32 0.0, %v2277
        %v2279 = vpop.f32.mrb[0].mxu0
        %2280 = vmatprep.mubr.bf16.mxu0 0
        %2281 = vmatmul.mubr.bf16.gmra.mrb[0].mxu0 %v2166
        %v2282 = vpop.f32.mrb[0].mxu0
        %v2283 = vadd.f32 0.0, %v2282
        %v2284 = vpop.f32.mrb[0].mxu0
        %v2285 = vpop.f32.mrb[0].mxu0
        %v2286 = vadd.f32 0.0, %v2285
        %v2287 = vpop.f32.mrb[0].mxu0
        %2288 = vdwg.mxu0
        %v2289 = vmul.f32 %v2227, 0.35355338
        %v2290 = vmul.f32 %v2230, 0.35355338
        %v2291 = vmul.f32 %v2235, 0.35355338
        %v2292 = vmul.f32 %v2238, 0.35355338
        %v2293 = vmul.f32 %v2243, 0.35355338
        %v2294 = vmul.f32 %v2246, 0.35355338
        %v2295 = vmul.f32 %v2251, 0.35355338
        %v2296 = vmul.f32 %v2254, 0.35355338
        %v2297 = vmul.f32 %v2259, 0.35355338
        %v2298 = vmul.f32 %v2262, 0.35355338
        %v2299 = vmul.f32 %v2267, 0.35355338
        %v2300 = vmul.f32 %v2270, 0.35355338
        %v2301 = vmul.f32 %v2275, 0.35355338
        %v2302 = vmul.f32 %v2278, 0.35355338
        %v2303 = vmul.f32 %v2283, 0.35355338
        %v2304 = vmul.f32 %v2286, 0.35355338
        %v2305 = vadd.f32 %v2289, %v472
        %v2306 = vadd.f32 %v2290, %v473
        %v2307 = vadd.f32 %v2291, %v474
        %v2308 = vadd.f32 %v2292, %v475
        %v2309 = vadd.f32 %v2293, %v476
        %v2310 = vadd.f32 %v2294, %v477
        %v2311 = vadd.f32 %v2295, %v478
        %v2312 = vadd.f32 %v2296, %v479
        %v2313 = vadd.f32 %v2297, %v480
        %v2314 = vadd.f32 %v2298, %v481
        %v2315 = vadd.f32 %v2299, %v482
        %v2316 = vadd.f32 %v2300, %v483
        %v2317 = vadd.f32 %v2301, %v484
        %v2318 = vadd.f32 %v2302, %v485
        %v2319 = vadd.f32 %v2303, %v486
        %v2320 = vadd.f32 %v2304, %v487
        %2321 = vmax.xlane.f32.xlu0 %v2305
        %v2322 = vpop.xlane.xlu0 %2321
        %2323 = vmax.xlane.f32.xlu0 %v2306
        %v2324 = vpop.xlane.xlu0 %2323
        %2325 = vmax.xlane.f32.xlu0 %v2307
        %v2326 = vpop.xlane.xlu0 %2325
        %2327 = vmax.xlane.f32.xlu0 %v2308
        %v2328 = vpop.xlane.xlu0 %2327
        %2329 = vmax.xlane.f32.xlu0 %v2309
        %v2330 = vpop.xlane.xlu0 %2329
        %2331 = vmax.xlane.f32.xlu0 %v2310
        %v2332 = vpop.xlane.xlu0 %2331
        %2333 = vmax.xlane.f32.xlu0 %v2311
        %v2334 = vpop.xlane.xlu0 %2333
        %2335 = vmax.xlane.f32.xlu0 %v2312
        %v2336 = vpop.xlane.xlu0 %2335
        %2337 = vmax.xlane.f32.xlu0 %v2313
        %v2338 = vpop.xlane.xlu0 %2337
        %2339 = vmax.xlane.f32.xlu0 %v2314
        %v2340 = vpop.xlane.xlu0 %2339
        %2341 = vmax.xlane.f32.xlu0 %v2315
        %v2342 = vpop.xlane.xlu0 %2341
        %2343 = vmax.xlane.f32.xlu0 %v2316
        %v2344 = vpop.xlane.xlu0 %2343
        %2345 = vmax.xlane.f32.xlu0 %v2317
        %v2346 = vpop.xlane.xlu0 %2345
        %2347 = vmax.xlane.f32.xlu0 %v2318
        %v2348 = vpop.xlane.xlu0 %2347
        %2349 = vmax.xlane.f32.xlu0 %v2319
        %v2350 = vpop.xlane.xlu0 %2349
        %2351 = vmax.xlane.f32.xlu0 %v2320
        %v2352 = vpop.xlane.xlu0 %2351
        %v2353 = vsub.f32 %v2305, %v2322
        %v2354 = vsub.f32 %v2306, %v2324
        %v2355 = vsub.f32 %v2307, %v2326
        %v2356 = vsub.f32 %v2308, %v2328
        %v2357 = vsub.f32 %v2309, %v2330
        %v2358 = vsub.f32 %v2310, %v2332
        %v2359 = vsub.f32 %v2311, %v2334
        %v2360 = vsub.f32 %v2312, %v2336
        %v2361 = vsub.f32 %v2313, %v2338
        %v2362 = vsub.f32 %v2314, %v2340
        %v2363 = vsub.f32 %v2315, %v2342
        %v2364 = vsub.f32 %v2316, %v2344
        %v2365 = vsub.f32 %v2317, %v2346
        %v2366 = vsub.f32 %v2318, %v2348
        %v2367 = vsub.f32 %v2319, %v2350
        %v2368 = vsub.f32 %v2320, %v2352
        %v2369 = vmul.f32 %v2353, 1.442695
        %v2370 = vpow.pop %v2369
        %v2371 = vmul.f32 %v2354, 1.442695
        %v2372 = vpow.pop %v2371
        %v2373 = vmul.f32 %v2355, 1.442695
        %v2374 = vpow.pop %v2373
        %v2375 = vmul.f32 %v2356, 1.442695
        %v2376 = vpow.pop %v2375
        %v2377 = vmul.f32 %v2357, 1.442695
        %v2378 = vpow.pop %v2377
        %v2379 = vmul.f32 %v2358, 1.442695
        %v2380 = vpow.pop %v2379
        %v2381 = vmul.f32 %v2359, 1.442695
        %v2382 = vpow.pop %v2381
        %v2383 = vmul.f32 %v2360, 1.442695
        %v2384 = vpow.pop %v2383
        %v2385 = vmul.f32 %v2361, 1.442695
        %v2386 = vpow.pop %v2385
        %v2387 = vmul.f32 %v2362, 1.442695
        %v2388 = vpow.pop %v2387
        %v2389 = vmul.f32 %v2363, 1.442695
        %v2390 = vpow.pop %v2389
        %v2391 = vmul.f32 %v2364, 1.442695
        %v2392 = vpow.pop %v2391
        %v2393 = vmul.f32 %v2365, 1.442695
        %v2394 = vpow.pop %v2393
        %v2395 = vmul.f32 %v2366, 1.442695
        %v2396 = vpow.pop %v2395
        %v2397 = vmul.f32 %v2367, 1.442695
        %v2398 = vpow.pop %v2397
        %v2399 = vmul.f32 %v2368, 1.442695
        %v2400 = vpow.pop %v2399
        %2401 = vadd.xlane.f32.xlu0 %v2370
        %v2402 = vpop.xlane.xlu0 %2401
        %2403 = vadd.xlane.f32.xlu0 %v2372
        %v2404 = vpop.xlane.xlu0 %2403
        %2405 = vadd.xlane.f32.xlu0 %v2374
        %v2406 = vpop.xlane.xlu0 %2405
        %2407 = vadd.xlane.f32.xlu0 %v2376
        %v2408 = vpop.xlane.xlu0 %2407
        %2409 = vadd.xlane.f32.xlu0 %v2378
        %v2410 = vpop.xlane.xlu0 %2409
        %2411 = vadd.xlane.f32.xlu0 %v2380
        %v2412 = vpop.xlane.xlu0 %2411
        %2413 = vadd.xlane.f32.xlu0 %v2382
        %v2414 = vpop.xlane.xlu0 %2413
        %2415 = vadd.xlane.f32.xlu0 %v2384
        %v2416 = vpop.xlane.xlu0 %2415
        %2417 = vadd.xlane.f32.xlu0 %v2386
        %v2418 = vpop.xlane.xlu0 %2417
        %2419 = vadd.xlane.f32.xlu0 %v2388
        %v2420 = vpop.xlane.xlu0 %2419
        %2421 = vadd.xlane.f32.xlu0 %v2390
        %v2422 = vpop.xlane.xlu0 %2421
        %2423 = vadd.xlane.f32.xlu0 %v2392
        %v2424 = vpop.xlane.xlu0 %2423
        %2425 = vadd.xlane.f32.xlu0 %v2394
        %v2426 = vpop.xlane.xlu0 %2425
        %2427 = vadd.xlane.f32.xlu0 %v2396
        %v2428 = vpop.xlane.xlu0 %2427
        %2429 = vadd.xlane.f32.xlu0 %v2398
        %v2430 = vpop.xlane.xlu0 %2429
        %2431 = vadd.xlane.f32.xlu0 %v2400
        %v2432 = vpop.xlane.xlu0 %2431
        %v2433 = vrcp.pop %v2402
        %v2434 = vrcp.pop %v2404
        %v2435 = vrcp.pop %v2406
        %v2436 = vrcp.pop %v2408
        %v2437 = vrcp.pop %v2410
        %v2438 = vrcp.pop %v2412
        %v2439 = vrcp.pop %v2414
        %v2440 = vrcp.pop %v2416
        %v2441 = vrcp.pop %v2418
        %v2442 = vrcp.pop %v2420
        %v2443 = vrcp.pop %v2422
        %v2444 = vrcp.pop %v2424
        %v2445 = vrcp.pop %v2426
        %v2446 = vrcp.pop %v2428
        %v2447 = vrcp.pop %v2430
        %v2448 = vrcp.pop %v2432
        %v2449 = vmul.f32 %v2370, %v2433
        %v2450 = vmul.f32 %v2372, %v2434
        %v2451 = vmul.f32 %v2374, %v2435
        %v2452 = vmul.f32 %v2376, %v2436
        %v2453 = vmul.f32 %v2378, %v2437
        %v2454 = vmul.f32 %v2380, %v2438
        %v2455 = vmul.f32 %v2382, %v2439
        %v2456 = vmul.f32 %v2384, %v2440
        %v2457 = vmul.f32 %v2386, %v2441
        %v2458 = vmul.f32 %v2388, %v2442
        %v2459 = vmul.f32 %v2390, %v2443
        %v2460 = vmul.f32 %v2392, %v2444
        %v2461 = vmul.f32 %v2394, %v2445
        %v2462 = vmul.f32 %v2396, %v2446
        %v2463 = vmul.f32 %v2398, %v2447
        %v2464 = vmul.f32 %v2400, %v2448
        %v2465 = vpack.c.bf16 %v2450, %v2449
        %v2466 = vpack.c.bf16 %v2452, %v2451
        %v2467 = vpack.c.bf16 %v2454, %v2453
        %v2468 = vpack.c.bf16 %v2456, %v2455
        %v2469 = vpack.c.bf16 %v2458, %v2457
        %v2470 = vpack.c.bf16 %v2460, %v2459
        %v2471 = vpack.c.bf16 %v2462, %v2461
        %v2472 = vpack.c.bf16 %v2464, %v2463
        %2473 = vrot.lane.b32.xlu0 %v665, 40
        %v2474 = vpop.permute.xlu0 %2473
        %2475 = vrot.lane.b32.xlu0 %v666, 40
        %v2476 = vpop.permute.xlu0 %2475
        %2477 = vrot.lane.b32.xlu0 %v667, 40
        %v2478 = vpop.permute.xlu0 %2477
        %2479 = vrot.lane.b32.xlu0 %v668, 40
        %v2480 = vpop.permute.xlu0 %2479
        %2481 = vrot.lane.b32.xlu0 %v669, 40
        %v2482 = vpop.permute.xlu0 %2481
        %2483 = vrot.lane.b32.xlu0 %v670, 40
        %v2484 = vpop.permute.xlu0 %2483
        %2485 = vrot.lane.b32.xlu0 %v671, 40
        %v2486 = vpop.permute.xlu0 %2485
        %2487 = vrot.lane.b32.xlu0 %v672, 40
        %v2488 = vpop.permute.xlu0 %2487
        %2497 = vmatprep.subr.bf16.mxu0 0
        %2498 = vmatpush1.bf16.msra.mxu0 %v2474
        %2499 = vmatprep.subr.bf16.mxu0 0
        %2500 = vmatpush1.bf16.msra.mxu0 %v2476
        %2501 = vmatprep.subr.bf16.mxu0 0
        %2502 = vmatpush1.bf16.msra.mxu0 %v2478
        %2503 = vmatprep.subr.bf16.mxu0 0
        %2504 = vmatpush1.bf16.msra.mxu0 %v2480
        %2505 = vmatprep.subr.bf16.mxu0 0
        %2506 = vmatpush1.bf16.msra.mxu0 %v2482
        %2507 = vmatprep.subr.bf16.mxu0 0
        %2508 = vmatpush1.bf16.msra.mxu0 %v2484
        %2509 = vmatprep.subr.bf16.mxu0 0
        %2510 = vmatpush1.bf16.msra.mxu0 %v2486
        %2511 = vmatprep.subr.bf16.mxu0 0
        %2512 = vmatpush1.bf16.msra.mxu0 %v2488
        %2513 = vmatprep.subr.bf16.mxu0 0
        %2514 = vmatpush1.bf16.msra.mxu0 0
        %2515 = vmatprep.subr.bf16.mxu0 0
        %2516 = vmatpush1.bf16.msra.mxu0 0
        %2517 = vmatprep.subr.bf16.mxu0 0
        %2518 = vmatpush1.bf16.msra.mxu0 0
        %2519 = vmatprep.subr.bf16.mxu0 0
        %2520 = vmatpush1.bf16.msra.mxu0 0
        %2521 = vmatprep.subr.bf16.mxu0 0
        %2522 = vmatpush1.bf16.msra.mxu0 0
        %2523 = vmatprep.subr.bf16.mxu0 0
        %2524 = vmatpush1.bf16.msra.mxu0 0
        %2525 = vmatprep.subr.bf16.mxu0 0
        %2526 = vmatpush1.bf16.msra.mxu0 0
        %2527 = vmatprep.subr.bf16.mxu0 0
        %2528 = vmatpush1.bf16.msra.mxu0 0
        %2529 = vmatprep.mubr.bf16.mxu0 0
        %2530 = vmatmul.mubr.bf16.gmra.mrb[0].mxu0 %v2465
        %v2531 = vpop.f32.mrb[0].mxu0
        %v2532 = vadd.f32 0.0, %v2531
        %v2533 = vpop.f32.mrb[0].mxu0
        %v2534 = vpop.f32.mrb[0].mxu0
        %v2535 = vadd.f32 0.0, %v2534
        %v2536 = vpop.f32.mrb[0].mxu0
        %2537 = vmatprep.mubr.bf16.mxu0 0
        %2538 = vmatmul.mubr.bf16.gmra.mrb[0].mxu0 %v2466
        %v2539 = vpop.f32.mrb[0].mxu0
        %v2540 = vadd.f32 0.0, %v2539
        %v2541 = vpop.f32.mrb[0].mxu0
        %v2542 = vpop.f32.mrb[0].mxu0
        %v2543 = vadd.f32 0.0, %v2542
        %v2544 = vpop.f32.mrb[0].mxu0
        %2545 = vmatprep.mubr.bf16.mxu0 0
        %2546 = vmatmul.mubr.bf16.gmra.mrb[0].mxu0 %v2467
        %v2547 = vpop.f32.mrb[0].mxu0
        %v2548 = vadd.f32 0.0, %v2547
        %v2549 = vpop.f32.mrb[0].mxu0
        %v2550 = vpop.f32.mrb[0].mxu0
        %v2551 = vadd.f32 0.0, %v2550
        %v2552 = vpop.f32.mrb[0].mxu0
        %2553 = vmatprep.mubr.bf16.mxu0 0
        %2554 = vmatmul.mubr.bf16.gmra.mrb[0].mxu0 %v2468
        %v2555 = vpop.f32.mrb[0].mxu0
        %v2556 = vadd.f32 0.0, %v2555
        %v2557 = vpop.f32.mrb[0].mxu0
        %v2558 = vpop.f32.mrb[0].mxu0
        %v2559 = vadd.f32 0.0, %v2558
        %v2560 = vpop.f32.mrb[0].mxu0
        %2561 = vmatprep.mubr.bf16.mxu0 0
        %2562 = vmatmul.mubr.bf16.gmra.mrb[0].mxu0 %v2469
        %v2563 = vpop.f32.mrb[0].mxu0
        %v2564 = vadd.f32 0.0, %v2563
        %v2565 = vpop.f32.mrb[0].mxu0
        %v2566 = vpop.f32.mrb[0].mxu0
        %v2567 = vadd.f32 0.0, %v2566
        %v2568 = vpop.f32.mrb[0].mxu0
        %2569 = vmatprep.mubr.bf16.mxu0 0
        %2570 = vmatmul.mubr.bf16.gmra.mrb[0].mxu0 %v2470
        %v2571 = vpop.f32.mrb[0].mxu0
        %v2572 = vadd.f32 0.0, %v2571
        %v2573 = vpop.f32.mrb[0].mxu0
        %v2574 = vpop.f32.mrb[0].mxu0
        %v2575 = vadd.f32 0.0, %v2574
        %v2576 = vpop.f32.mrb[0].mxu0
        %2577 = vmatprep.mubr.bf16.mxu0 0
        %2578 = vmatmul.mubr.bf16.gmra.mrb[0].mxu0 %v2471
        %v2579 = vpop.f32.mrb[0].mxu0
        %v2580 = vadd.f32 0.0, %v2579
        %v2581 = vpop.f32.mrb[0].mxu0
        %v2582 = vpop.f32.mrb[0].mxu0
        %v2583 = vadd.f32 0.0, %v2582
        %v2584 = vpop.f32.mrb[0].mxu0
        %2585 = vmatprep.mubr.bf16.mxu0 0
        %2586 = vmatmul.mubr.bf16.gmra.mrb[0].mxu0 %v2472
        %v2587 = vpop.f32.mrb[0].mxu0
        %v2588 = vadd.f32 0.0, %v2587
        %v2589 = vpop.f32.mrb[0].mxu0
        %v2590 = vpop.f32.mrb[0].mxu0
        %v2591 = vadd.f32 0.0, %v2590
        %v2592 = vpop.f32.mrb[0].mxu0
        %2593 = vdwg.mxu0
        %2610 = vrot.lane.b32.xlu0 %v2050, 8
        %v2611 = vpop.permute.xlu0 %2610
        %2612 = vrot.lane.b32.xlu0 %v2053, 8
        %v2613 = vpop.permute.xlu0 %2612
        %2614 = vrot.lane.b32.xlu0 %v2058, 8
        %v2615 = vpop.permute.xlu0 %2614
        %2616 = vrot.lane.b32.xlu0 %v2061, 8
        %v2617 = vpop.permute.xlu0 %2616
        %2618 = vrot.lane.b32.xlu0 %v2066, 8
        %v2619 = vpop.permute.xlu0 %2618
        %2620 = vrot.lane.b32.xlu0 %v2069, 8
        %v2621 = vpop.permute.xlu0 %2620
        %2622 = vrot.lane.b32.xlu0 %v2074, 8
        %v2623 = vpop.permute.xlu0 %2622
        %2624 = vrot.lane.b32.xlu0 %v2077, 8
        %v2625 = vpop.permute.xlu0 %2624
        %2626 = vrot.lane.b32.xlu0 %v2082, 8
        %v2627 = vpop.permute.xlu0 %2626
        %2628 = vrot.lane.b32.xlu0 %v2085, 8
        %v2629 = vpop.permute.xlu0 %2628
        %2630 = vrot.lane.b32.xlu0 %v2090, 8
        %v2631 = vpop.permute.xlu0 %2630
        %2632 = vrot.lane.b32.xlu0 %v2093, 8
        %v2633 = vpop.permute.xlu0 %2632
        %2634 = vrot.lane.b32.xlu0 %v2098, 8
        %v2635 = vpop.permute.xlu0 %2634
        %2636 = vrot.lane.b32.xlu0 %v2101, 8
        %v2637 = vpop.permute.xlu0 %2636
        %2638 = vrot.lane.b32.xlu0 %v2106, 8
        %v2639 = vpop.permute.xlu0 %2638
        %2640 = vrot.lane.b32.xlu0 %v2109, 8
        %v2641 = vpop.permute.xlu0 %2640
        %2674 = vrot.lane.b32.xlu0 %v1568, 16
        %v2675 = vpop.permute.xlu0 %2674
        %2676 = vrot.lane.b32.xlu0 %v1571, 16
        %v2677 = vpop.permute.xlu0 %2676
        %2678 = vrot.lane.b32.xlu0 %v1576, 16
        %v2679 = vpop.permute.xlu0 %2678
        %2680 = vrot.lane.b32.xlu0 %v1579, 16
        %v2681 = vpop.permute.xlu0 %2680
        %2682 = vrot.lane.b32.xlu0 %v1584, 16
        %v2683 = vpop.permute.xlu0 %2682
        %2684 = vrot.lane.b32.xlu0 %v1587, 16
        %v2685 = vpop.permute.xlu0 %2684
        %2686 = vrot.lane.b32.xlu0 %v1592, 16
        %v2687 = vpop.permute.xlu0 %2686
        %2688 = vrot.lane.b32.xlu0 %v1595, 16
        %v2689 = vpop.permute.xlu0 %2688
        %2690 = vrot.lane.b32.xlu0 %v1600, 16
        %v2691 = vpop.permute.xlu0 %2690
        %2692 = vrot.lane.b32.xlu0 %v1603, 16
        %v2693 = vpop.permute.xlu0 %2692
        %2694 = vrot.lane.b32.xlu0 %v1608, 16
        %v2695 = vpop.permute.xlu0 %2694
        %2696 = vrot.lane.b32.xlu0 %v1611, 16
        %v2697 = vpop.permute.xlu0 %2696
        %2698 = vrot.lane.b32.xlu0 %v1616, 16
        %v2699 = vpop.permute.xlu0 %2698
        %2700 = vrot.lane.b32.xlu0 %v1619, 16
        %v2701 = vpop.permute.xlu0 %2700
        %2702 = vrot.lane.b32.xlu0 %v1624, 16
        %v2703 = vpop.permute.xlu0 %2702
        %2704 = vrot.lane.b32.xlu0 %v1627, 16
        %v2705 = vpop.permute.xlu0 %2704
        %2738 = vrot.lane.b32.xlu0 %v2532, 24
        %v2739 = vpop.permute.xlu0 %2738
        %2740 = vrot.lane.b32.xlu0 %v2535, 24
        %v2741 = vpop.permute.xlu0 %2740
        %2742 = vrot.lane.b32.xlu0 %v2540, 24
        %v2743 = vpop.permute.xlu0 %2742
        %2744 = vrot.lane.b32.xlu0 %v2543, 24
        %v2745 = vpop.permute.xlu0 %2744
        %2746 = vrot.lane.b32.xlu0 %v2548, 24
        %v2747 = vpop.permute.xlu0 %2746
        %2748 = vrot.lane.b32.xlu0 %v2551, 24
        %v2749 = vpop.permute.xlu0 %2748
        %2750 = vrot.lane.b32.xlu0 %v2556, 24
        %v2751 = vpop.permute.xlu0 %2750
        %2752 = vrot.lane.b32.xlu0 %v2559, 24
        %v2753 = vpop.permute.xlu0 %2752
        %2754 = vrot.lane.b32.xlu0 %v2564, 24
        %v2755 = vpop.permute.xlu0 %2754
        %2756 = vrot.lane.b32.xlu0 %v2567, 24
        %v2757 = vpop.permute.xlu0 %2756
        %2758 = vrot.lane.b32.xlu0 %v2572, 24
        %v2759 = vpop.permute.xlu0 %2758
        %2760 = vrot.lane.b32.xlu0 %v2575, 24
        %v2761 = vpop.permute.xlu0 %2760
        %2762 = vrot.lane.b32.xlu0 %v2580, 24
        %v2763 = vpop.permute.xlu0 %2762
        %2764 = vrot.lane.b32.xlu0 %v2583, 24
        %v2765 = vpop.permute.xlu0 %2764
        %2766 = vrot.lane.b32.xlu0 %v2588, 24
        %v2767 = vpop.permute.xlu0 %2766
        %2768 = vrot.lane.b32.xlu0 %v2591, 24
        %v2769 = vpop.permute.xlu0 %2768
        %v2786 = vsel %vm697, %v1086, %v2611
        %v2787 = vsel %vm697, %v1089, %v2613
        %v2788 = vsel %vm697, %v1094, %v2615
        %v2789 = vsel %vm697, %v1097, %v2617
        %v2790 = vsel %vm697, %v1102, %v2619
        %v2791 = vsel %vm697, %v1105, %v2621
        %v2792 = vsel %vm697, %v1110, %v2623
        %v2793 = vsel %vm697, %v1113, %v2625
        %v2794 = vsel %vm697, %v1118, %v2627
        %v2795 = vsel %vm697, %v1121, %v2629
        %v2796 = vsel %vm697, %v1126, %v2631
        %v2797 = vsel %vm697, %v1129, %v2633
        %v2798 = vsel %vm697, %v1134, %v2635
        %v2799 = vsel %vm697, %v1137, %v2637
        %v2800 = vsel %vm697, %v1142, %v2639
        %v2801 = vsel %vm697, %v1145, %v2641
        %vm2802 = vcmask 130048
        %v2803 = vsel %vm2802, %v2786, %v2675
        %v2804 = vsel %vm2802, %v2787, %v2677
        %v2805 = vsel %vm2802, %v2788, %v2679
        %v2806 = vsel %vm2802, %v2789, %v2681
        %v2807 = vsel %vm2802, %v2790, %v2683
        %v2808 = vsel %vm2802, %v2791, %v2685
        %v2809 = vsel %vm2802, %v2792, %v2687
        %v2810 = vsel %vm2802, %v2793, %v2689
        %v2811 = vsel %vm2802, %v2794, %v2691
        %v2812 = vsel %vm2802, %v2795, %v2693
        %v2813 = vsel %vm2802, %v2796, %v2695
        %v2814 = vsel %vm2802, %v2797, %v2697
        %v2815 = vsel %vm2802, %v2798, %v2699
        %v2816 = vsel %vm2802, %v2799, %v2701
        %v2817 = vsel %vm2802, %v2800, %v2703
        %v2818 = vsel %vm2802, %v2801, %v2705
        %vm2819 = vcmask 195584
        %v2820 = vsel %vm2819, %v2803, %v2739
        %v2821 = vsel %vm2819, %v2804, %v2741
        %v2822 = vsel %vm2819, %v2805, %v2743
        %v2823 = vsel %vm2819, %v2806, %v2745
        %v2824 = vsel %vm2819, %v2807, %v2747
        %v2825 = vsel %vm2819, %v2808, %v2749
        %v2826 = vsel %vm2819, %v2809, %v2751
        %v2827 = vsel %vm2819, %v2810, %v2753
        %v2828 = vsel %vm2819, %v2811, %v2755
        %v2829 = vsel %vm2819, %v2812, %v2757
        %v2830 = vsel %vm2819, %v2813, %v2759
        %v2831 = vsel %vm2819, %v2814, %v2761
        %v2832 = vsel %vm2819, %v2815, %v2763
        %v2833 = vsel %vm2819, %v2816, %v2765
        %v2834 = vsel %vm2819, %v2817, %v2767
        %v2835 = vsel %vm2819, %v2818, %v2769
        %v2836 = vpack.c.bf16 %v2821, %v2820
        %v2837 = vpack.c.bf16 %v2823, %v2822
        %v2838 = vpack.c.bf16 %v2825, %v2824
        %v2839 = vpack.c.bf16 %v2827, %v2826
        %v2840 = vpack.c.bf16 %v2829, %v2828
        %v2841 = vpack.c.bf16 %v2831, %v2830
        %v2842 = vpack.c.bf16 %v2833, %v2832
        %v2843 = vpack.c.bf16 %v2835, %v2834
        %v2844 = vld [vmem:[%s5] sm:$0xf]
        %v2845 = vld [vmem:[%s5 + $0x4] sm:$0xf]
        %v2846 = vld [vmem:[%s5 + $0x8] sm:$0xf]
        %v2847 = vld [vmem:[%s5 + $0xc] sm:$0xf]
        %v2848 = vld [vmem:[%s6] sm:$0x1]
        %v2850 = vlaneseq
        %v2851 = vshrl.u32 %v2850, 7
        %v2852 = vsub.s32 0, %v2851
        %v2853 = vrot.slane %v2848, %v2852
        %v2859 = vunpack.c.l.b16 %v2844
        %v2860 = vunpack.c.l.b16 %v2845
        %v2861 = vunpack.c.l.b16 %v2846
        %v2862 = vunpack.c.l.b16 %v2847
        %v2863 = vpack.c.b16 %v2860, %v2859
        %v2864 = vpack.c.b16 %v2862, %v2861
        %vm2867 = vcmask 261120
        %v2869 = vsel %vm2867, %v2836, 0
        %v2872 = vsel %vm2867, %v2837, 0
        %v2875 = vsel %vm2867, %v2838, 0
        %v2878 = vsel %vm2867, %v2839, 0
        %v2881 = vsel %vm2867, %v2840, 0
        %v2884 = vsel %vm2867, %v2841, 0
        %v2887 = vsel %vm2867, %v2842, 0
        %v2890 = vsel %vm2867, %v2843, 0
        %2892 = vmatprep.subr.bf16.mxu0 0
        %2893 = vmatpush1.bf16.msra.mxu0 %v2863
        %2894 = vmatprep.subr.bf16.mxu0 0
        %2895 = vmatpush1.bf16.msra.mxu0 %v2864
        %2896 = vmatprep.subr.bf16.mxu0 0
        %2897 = vmatpush1.bf16.msra.mxu0 0
        %2898 = vmatprep.subr.bf16.mxu0 0
        %2899 = vmatpush1.bf16.msra.mxu0 0
        %2900 = vmatprep.subr.bf16.mxu0 0
        %2901 = vmatpush1.bf16.msra.mxu0 0
        %2902 = vmatprep.subr.bf16.mxu0 0
        %2903 = vmatpush1.bf16.msra.mxu0 0
        %2904 = vmatprep.subr.bf16.mxu0 0
        %2905 = vmatpush1.bf16.msra.mxu0 0
        %2906 = vmatprep.subr.bf16.mxu0 0
        %2907 = vmatpush1.bf16.msra.mxu0 0
        %2908 = vmatprep.subr.bf16.mxu0 0
        %2909 = vmatpush1.bf16.msra.mxu0 0
        %2910 = vmatprep.subr.bf16.mxu0 0
        %2911 = vmatpush1.bf16.msra.mxu0 0
        %2912 = vmatprep.subr.bf16.mxu0 0
        %2913 = vmatpush1.bf16.msra.mxu0 0
        %2914 = vmatprep.subr.bf16.mxu0 0
        %2915 = vmatpush1.bf16.msra.mxu0 0
        %2916 = vmatprep.subr.bf16.mxu0 0
        %2917 = vmatpush1.bf16.msra.mxu0 0
        %2918 = vmatprep.subr.bf16.mxu0 0
        %2919 = vmatpush1.bf16.msra.mxu0 0
        %2920 = vmatprep.subr.bf16.mxu0 0
        %2921 = vmatpush1.bf16.msra.mxu0 0
        %2922 = vmatprep.subr.bf16.mxu0 0
        %2923 = vmatpush1.bf16.msra.mxu0 0
        %2924 = vmatprep.mubr.bf16.mxu0 0
        %2925 = vmatmul.mubr.bf16.gmra.mrb[0].mxu0 %v2869
        %v2926 = vpop.f32.mrb[0].mxu0
        %v2927 = vadd.f32 %v2853, %v2926
        %v2928 = vpop.f32.mrb[0].mxu0
        %v2929 = vpop.f32.mrb[0].mxu0
        %v2930 = vadd.f32 %v2853, %v2929
        %v2931 = vpop.f32.mrb[0].mxu0
        %2932 = vmatprep.mubr.bf16.mxu0 0
        %2933 = vmatmul.mubr.bf16.gmra.mrb[0].mxu0 %v2872
        %v2934 = vpop.f32.mrb[0].mxu0
        %v2935 = vadd.f32 %v2853, %v2934
        %v2936 = vpop.f32.mrb[0].mxu0
        %v2937 = vpop.f32.mrb[0].mxu0
        %v2938 = vadd.f32 %v2853, %v2937
        %v2939 = vpop.f32.mrb[0].mxu0
        %2940 = vmatprep.mubr.bf16.mxu0 0
        %2941 = vmatmul.mubr.bf16.gmra.mrb[0].mxu0 %v2875
        %v2942 = vpop.f32.mrb[0].mxu0
        %v2943 = vadd.f32 %v2853, %v2942
        %v2944 = vpop.f32.mrb[0].mxu0
        %v2945 = vpop.f32.mrb[0].mxu0
        %v2946 = vadd.f32 %v2853, %v2945
        %v2947 = vpop.f32.mrb[0].mxu0
        %2948 = vmatprep.mubr.bf16.mxu0 0
        %2949 = vmatmul.mubr.bf16.gmra.mrb[0].mxu0 %v2878
        %v2950 = vpop.f32.mrb[0].mxu0
        %v2951 = vadd.f32 %v2853, %v2950
        %v2952 = vpop.f32.mrb[0].mxu0
        %v2953 = vpop.f32.mrb[0].mxu0
        %v2954 = vadd.f32 %v2853, %v2953
        %v2955 = vpop.f32.mrb[0].mxu0
        %2956 = vmatprep.mubr.bf16.mxu0 0
        %2957 = vmatmul.mubr.bf16.gmra.mrb[0].mxu0 %v2881
        %v2958 = vpop.f32.mrb[0].mxu0
        %v2959 = vadd.f32 %v2853, %v2958
        %v2960 = vpop.f32.mrb[0].mxu0
        %v2961 = vpop.f32.mrb[0].mxu0
        %v2962 = vadd.f32 %v2853, %v2961
        %v2963 = vpop.f32.mrb[0].mxu0
        %2964 = vmatprep.mubr.bf16.mxu0 0
        %2965 = vmatmul.mubr.bf16.gmra.mrb[0].mxu0 %v2884
        %v2966 = vpop.f32.mrb[0].mxu0
        %v2967 = vadd.f32 %v2853, %v2966
        %v2968 = vpop.f32.mrb[0].mxu0
        %v2969 = vpop.f32.mrb[0].mxu0
        %v2970 = vadd.f32 %v2853, %v2969
        %v2971 = vpop.f32.mrb[0].mxu0
        %2972 = vmatprep.mubr.bf16.mxu0 0
        %2973 = vmatmul.mubr.bf16.gmra.mrb[0].mxu0 %v2887
        %v2974 = vpop.f32.mrb[0].mxu0
        %v2975 = vadd.f32 %v2853, %v2974
        %v2976 = vpop.f32.mrb[0].mxu0
        %v2977 = vpop.f32.mrb[0].mxu0
        %v2978 = vadd.f32 %v2853, %v2977
        %v2979 = vpop.f32.mrb[0].mxu0
        %2980 = vmatprep.mubr.bf16.mxu0 0
        %2981 = vmatmul.mubr.bf16.gmra.mrb[0].mxu0 %v2890
        %v2982 = vpop.f32.mrb[0].mxu0
        %v2983 = vadd.f32 %v2853, %v2982
        %v2984 = vpop.f32.mrb[0].mxu0
        %v2985 = vpop.f32.mrb[0].mxu0
        %v2986 = vadd.f32 %v2853, %v2985
        %v2987 = vpop.f32.mrb[0].mxu0
        %2988 = vdwg.mxu0
        %v2989 = vmax.f32 %v2927, 0.0
        %v2990 = vmax.f32 %v2930, 0.0
        %v2991 = vmax.f32 %v2935, 0.0
        %v2992 = vmax.f32 %v2938, 0.0
        %v2993 = vmax.f32 %v2943, 0.0
        %v2994 = vmax.f32 %v2946, 0.0
        %v2995 = vmax.f32 %v2951, 0.0
        %v2996 = vmax.f32 %v2954, 0.0
        %v2997 = vmax.f32 %v2959, 0.0
        %v2998 = vmax.f32 %v2962, 0.0
        %v2999 = vmax.f32 %v2967, 0.0
        %v3000 = vmax.f32 %v2970, 0.0
        %v3001 = vmax.f32 %v2975, 0.0
        %v3002 = vmax.f32 %v2978, 0.0
        %v3003 = vmax.f32 %v2983, 0.0
        %v3004 = vmax.f32 %v2986, 0.0
        %v3005 = vpack.c.bf16 %v2990, %v2989
        %v3006 = vpack.c.bf16 %v2992, %v2991
        %v3007 = vpack.c.bf16 %v2994, %v2993
        %v3008 = vpack.c.bf16 %v2996, %v2995
        %v3009 = vpack.c.bf16 %v2998, %v2997
        %v3010 = vpack.c.bf16 %v3000, %v2999
        %v3011 = vpack.c.bf16 %v3002, %v3001
        %v3012 = vpack.c.bf16 %v3004, %v3003
        %v3013 = vld [vmem:[%s7] sm:$0xf]
        %v3014 = vld [vmem:[%s7 + $0x4] sm:$0xf]
        %v3015 = vld [vmem:[%s7 + $0x8] sm:$0xf]
        %v3016 = vld [vmem:[%s7 + $0xc] sm:$0xf]
        %v3017 = vld [vmem:[%s8] sm:$0x1]
        %v3019 = vlaneseq
        %v3020 = vshrl.u32 %v3019, 7
        %v3021 = vsub.s32 0, %v3020
        %v3022 = vrot.slane %v3017, %v3021
        %v3028 = vunpack.c.l.b16 %v3013
        %v3029 = vunpack.c.l.b16 %v3014
        %v3030 = vunpack.c.l.b16 %v3015
        %v3031 = vunpack.c.l.b16 %v3016
        %v3032 = vpack.c.b16 %v3029, %v3028
        %v3033 = vpack.c.b16 %v3031, %v3030
        %v3037 = vsel %vm2867, %v3005, 0
        %v3040 = vsel %vm2867, %v3006, 0
        %v3043 = vsel %vm2867, %v3007, 0
        %v3046 = vsel %vm2867, %v3008, 0
        %v3049 = vsel %vm2867, %v3009, 0
        %v3052 = vsel %vm2867, %v3010, 0
        %v3055 = vsel %vm2867, %v3011, 0
        %v3058 = vsel %vm2867, %v3012, 0
        %3060 = vmatprep.subr.bf16.mxu0 0
        %3061 = vmatpush1.bf16.msra.mxu0 %v3032
        %3062 = vmatprep.subr.bf16.mxu0 0
        %3063 = vmatpush1.bf16.msra.mxu0 %v3033
        %3064 = vmatprep.subr.bf16.mxu0 0
        %3065 = vmatpush1.bf16.msra.mxu0 0
        %3066 = vmatprep.subr.bf16.mxu0 0
        %3067 = vmatpush1.bf16.msra.mxu0 0
        %3068 = vmatprep.subr.bf16.mxu0 0
        %3069 = vmatpush1.bf16.msra.mxu0 0
        %3070 = vmatprep.subr.bf16.mxu0 0
        %3071 = vmatpush1.bf16.msra.mxu0 0
        %3072 = vmatprep.subr.bf16.mxu0 0
        %3073 = vmatpush1.bf16.msra.mxu0 0
        %3074 = vmatprep.subr.bf16.mxu0 0
        %3075 = vmatpush1.bf16.msra.mxu0 0
        %3076 = vmatprep.subr.bf16.mxu0 0
        %3077 = vmatpush1.bf16.msra.mxu0 0
        %3078 = vmatprep.subr.bf16.mxu0 0
        %3079 = vmatpush1.bf16.msra.mxu0 0
        %3080 = vmatprep.subr.bf16.mxu0 0
        %3081 = vmatpush1.bf16.msra.mxu0 0
        %3082 = vmatprep.subr.bf16.mxu0 0
        %3083 = vmatpush1.bf16.msra.mxu0 0
        %3084 = vmatprep.subr.bf16.mxu0 0
        %3085 = vmatpush1.bf16.msra.mxu0 0
        %3086 = vmatprep.subr.bf16.mxu0 0
        %3087 = vmatpush1.bf16.msra.mxu0 0
        %3088 = vmatprep.subr.bf16.mxu0 0
        %3089 = vmatpush1.bf16.msra.mxu0 0
        %3090 = vmatprep.subr.bf16.mxu0 0
        %3091 = vmatpush1.bf16.msra.mxu0 0
        %3092 = vmatprep.mubr.bf16.mxu0 0
        %3093 = vmatmul.mubr.bf16.gmra.mrb[0].mxu0 %v3037
        %v3094 = vpop.f32.mrb[0].mxu0
        %v3095 = vadd.f32 %v3022, %v3094
        %v3096 = vpop.f32.mrb[0].mxu0
        %v3097 = vpop.f32.mrb[0].mxu0
        %v3098 = vadd.f32 %v3022, %v3097
        %v3099 = vpop.f32.mrb[0].mxu0
        %3100 = vmatprep.mubr.bf16.mxu0 0
        %3101 = vmatmul.mubr.bf16.gmra.mrb[0].mxu0 %v3040
        %v3102 = vpop.f32.mrb[0].mxu0
        %v3103 = vadd.f32 %v3022, %v3102
        %v3104 = vpop.f32.mrb[0].mxu0
        %v3105 = vpop.f32.mrb[0].mxu0
        %v3106 = vadd.f32 %v3022, %v3105
        %v3107 = vpop.f32.mrb[0].mxu0
        %3108 = vmatprep.mubr.bf16.mxu0 0
        %3109 = vmatmul.mubr.bf16.gmra.mrb[0].mxu0 %v3043
        %v3110 = vpop.f32.mrb[0].mxu0
        %v3111 = vadd.f32 %v3022, %v3110
        %v3112 = vpop.f32.mrb[0].mxu0
        %v3113 = vpop.f32.mrb[0].mxu0
        %v3114 = vadd.f32 %v3022, %v3113
        %v3115 = vpop.f32.mrb[0].mxu0
        %3116 = vmatprep.mubr.bf16.mxu0 0
        %3117 = vmatmul.mubr.bf16.gmra.mrb[0].mxu0 %v3046
        %v3118 = vpop.f32.mrb[0].mxu0
        %v3119 = vadd.f32 %v3022, %v3118
        %v3120 = vpop.f32.mrb[0].mxu0
        %v3121 = vpop.f32.mrb[0].mxu0
        %v3122 = vadd.f32 %v3022, %v3121
        %v3123 = vpop.f32.mrb[0].mxu0
        %3124 = vmatprep.mubr.bf16.mxu0 0
        %3125 = vmatmul.mubr.bf16.gmra.mrb[0].mxu0 %v3049
        %v3126 = vpop.f32.mrb[0].mxu0
        %v3127 = vadd.f32 %v3022, %v3126
        %v3128 = vpop.f32.mrb[0].mxu0
        %v3129 = vpop.f32.mrb[0].mxu0
        %v3130 = vadd.f32 %v3022, %v3129
        %v3131 = vpop.f32.mrb[0].mxu0
        %3132 = vmatprep.mubr.bf16.mxu0 0
        %3133 = vmatmul.mubr.bf16.gmra.mrb[0].mxu0 %v3052
        %v3134 = vpop.f32.mrb[0].mxu0
        %v3135 = vadd.f32 %v3022, %v3134
        %v3136 = vpop.f32.mrb[0].mxu0
        %v3137 = vpop.f32.mrb[0].mxu0
        %v3138 = vadd.f32 %v3022, %v3137
        %v3139 = vpop.f32.mrb[0].mxu0
        %3140 = vmatprep.mubr.bf16.mxu0 0
        %3141 = vmatmul.mubr.bf16.gmra.mrb[0].mxu0 %v3055
        %v3142 = vpop.f32.mrb[0].mxu0
        %v3143 = vadd.f32 %v3022, %v3142
        %v3144 = vpop.f32.mrb[0].mxu0
        %v3145 = vpop.f32.mrb[0].mxu0
        %v3146 = vadd.f32 %v3022, %v3145
        %v3147 = vpop.f32.mrb[0].mxu0
        %3148 = vmatprep.mubr.bf16.mxu0 0
        %3149 = vmatmul.mubr.bf16.gmra.mrb[0].mxu0 %v3058
        %v3150 = vpop.f32.mrb[0].mxu0
        %v3151 = vadd.f32 %v3022, %v3150
        %v3152 = vpop.f32.mrb[0].mxu0
        %v3153 = vpop.f32.mrb[0].mxu0
        %v3154 = vadd.f32 %v3022, %v3153
        %v3155 = vpop.f32.mrb[0].mxu0
        %3156 = vdwg.mxu0
        %v3157 = vsub.f32 0.0, %v3095
        %v3158 = vsub.f32 0.0, %v3098
        %v3159 = vsub.f32 0.0, %v3103
        %v3160 = vsub.f32 0.0, %v3106
        %v3161 = vsub.f32 0.0, %v3111
        %v3162 = vsub.f32 0.0, %v3114
        %v3163 = vsub.f32 0.0, %v3119
        %v3164 = vsub.f32 0.0, %v3122
        %v3165 = vsub.f32 0.0, %v3127
        %v3166 = vsub.f32 0.0, %v3130
        %v3167 = vsub.f32 0.0, %v3135
        %v3168 = vsub.f32 0.0, %v3138
        %v3169 = vsub.f32 0.0, %v3143
        %v3170 = vsub.f32 0.0, %v3146
        %v3171 = vsub.f32 0.0, %v3151
        %v3172 = vsub.f32 0.0, %v3154
        %v3173 = vmul.f32 %v3157, 1.442695
        %v3174 = vpow.pop %v3173
        %v3175 = vmul.f32 %v3158, 1.442695
        %v3176 = vpow.pop %v3175
        %v3177 = vmul.f32 %v3159, 1.442695
        %v3178 = vpow.pop %v3177
        %v3179 = vmul.f32 %v3160, 1.442695
        %v3180 = vpow.pop %v3179
        %v3181 = vmul.f32 %v3161, 1.442695
        %v3182 = vpow.pop %v3181
        %v3183 = vmul.f32 %v3162, 1.442695
        %v3184 = vpow.pop %v3183
        %v3185 = vmul.f32 %v3163, 1.442695
        %v3186 = vpow.pop %v3185
        %v3187 = vmul.f32 %v3164, 1.442695
        %v3188 = vpow.pop %v3187
        %v3189 = vmul.f32 %v3165, 1.442695
        %v3190 = vpow.pop %v3189
        %v3191 = vmul.f32 %v3166, 1.442695
        %v3192 = vpow.pop %v3191
        %v3193 = vmul.f32 %v3167, 1.442695
        %v3194 = vpow.pop %v3193
        %v3195 = vmul.f32 %v3168, 1.442695
        %v3196 = vpow.pop %v3195
        %v3197 = vmul.f32 %v3169, 1.442695
        %v3198 = vpow.pop %v3197
        %v3199 = vmul.f32 %v3170, 1.442695
        %v3200 = vpow.pop %v3199
        %v3201 = vmul.f32 %v3171, 1.442695
        %v3202 = vpow.pop %v3201
        %v3203 = vmul.f32 %v3172, 1.442695
        %v3204 = vpow.pop %v3203
        %v3205 = vadd.f32 %v3174, 1.0
        %v3206 = vadd.f32 %v3176, 1.0
        %v3207 = vadd.f32 %v3178, 1.0
        %v3208 = vadd.f32 %v3180, 1.0
        %v3209 = vadd.f32 %v3182, 1.0
        %v3210 = vadd.f32 %v3184, 1.0
        %v3211 = vadd.f32 %v3186, 1.0
        %v3212 = vadd.f32 %v3188, 1.0
        %v3213 = vadd.f32 %v3190, 1.0
        %v3214 = vadd.f32 %v3192, 1.0
        %v3215 = vadd.f32 %v3194, 1.0
        %v3216 = vadd.f32 %v3196, 1.0
        %v3217 = vadd.f32 %v3198, 1.0
        %v3218 = vadd.f32 %v3200, 1.0
        %v3219 = vadd.f32 %v3202, 1.0
        %v3220 = vadd.f32 %v3204, 1.0
        %v3221 = vrcp.pop %v3205
        %v3222 = vmul.f32 1.0, %v3221
        %v3223 = vrcp.pop %v3206
        %v3224 = vmul.f32 1.0, %v3223
        %v3225 = vrcp.pop %v3207
        %v3226 = vmul.f32 1.0, %v3225
        %v3227 = vrcp.pop %v3208
        %v3228 = vmul.f32 1.0, %v3227
        %v3229 = vrcp.pop %v3209
        %v3230 = vmul.f32 1.0, %v3229
        %v3231 = vrcp.pop %v3210
        %v3232 = vmul.f32 1.0, %v3231
        %v3233 = vrcp.pop %v3211
        %v3234 = vmul.f32 1.0, %v3233
        %v3235 = vrcp.pop %v3212
        %v3236 = vmul.f32 1.0, %v3235
        %v3237 = vrcp.pop %v3213
        %v3238 = vmul.f32 1.0, %v3237
        %v3239 = vrcp.pop %v3214
        %v3240 = vmul.f32 1.0, %v3239
        %v3241 = vrcp.pop %v3215
        %v3242 = vmul.f32 1.0, %v3241
        %v3243 = vrcp.pop %v3216
        %v3244 = vmul.f32 1.0, %v3243
        %v3245 = vrcp.pop %v3217
        %v3246 = vmul.f32 1.0, %v3245
        %v3247 = vrcp.pop %v3218
        %v3248 = vmul.f32 1.0, %v3247
        %v3249 = vrcp.pop %v3219
        %v3250 = vmul.f32 1.0, %v3249
        %v3251 = vrcp.pop %v3220
        %v3252 = vmul.f32 1.0, %v3251
        %v3253 = vmul.f32 %v3222, %v2989
        %v3254 = vmul.f32 %v3224, %v2990
        %v3255 = vmul.f32 %v3226, %v2991
        %v3256 = vmul.f32 %v3228, %v2992
        %v3257 = vmul.f32 %v3230, %v2993
        %v3258 = vmul.f32 %v3232, %v2994
        %v3259 = vmul.f32 %v3234, %v2995
        %v3260 = vmul.f32 %v3236, %v2996
        %v3261 = vmul.f32 %v3238, %v2997
        %v3262 = vmul.f32 %v3240, %v2998
        %v3263 = vmul.f32 %v3242, %v2999
        %v3264 = vmul.f32 %v3244, %v3000
        %v3265 = vmul.f32 %v3246, %v3001
        %v3266 = vmul.f32 %v3248, %v3002
        %v3267 = vmul.f32 %v3250, %v3003
        %v3268 = vmul.f32 %v3252, %v3004
        %v3269 = vsub.f32 1.0, %v3222
        %v3270 = vsub.f32 1.0, %v3224
        %v3271 = vsub.f32 1.0, %v3226
        %v3272 = vsub.f32 1.0, %v3228
        %v3273 = vsub.f32 1.0, %v3230
        %v3274 = vsub.f32 1.0, %v3232
        %v3275 = vsub.f32 1.0, %v3234
        %v3276 = vsub.f32 1.0, %v3236
        %v3277 = vsub.f32 1.0, %v3238
        %v3278 = vsub.f32 1.0, %v3240
        %v3279 = vsub.f32 1.0, %v3242
        %v3280 = vsub.f32 1.0, %v3244
        %v3281 = vsub.f32 1.0, %v3246
        %v3282 = vsub.f32 1.0, %v3248
        %v3283 = vsub.f32 1.0, %v3250
        %v3284 = vsub.f32 1.0, %v3252
        %3301 = vrot.lane.b32.xlu0 %v2989, 112
        %v3302 = vpop.permute.xlu0 %3301
        %3303 = vrot.lane.b32.xlu0 %v2990, 112
        %v3304 = vpop.permute.xlu0 %3303
        %3305 = vrot.lane.b32.xlu0 %v2991, 112
        %v3306 = vpop.permute.xlu0 %3305
        %3307 = vrot.lane.b32.xlu0 %v2992, 112
        %v3308 = vpop.permute.xlu0 %3307
        %3309 = vrot.lane.b32.xlu0 %v2993, 112
        %v3310 = vpop.permute.xlu0 %3309
        %3311 = vrot.lane.b32.xlu0 %v2994, 112
        %v3312 = vpop.permute.xlu0 %3311
        %3313 = vrot.lane.b32.xlu0 %v2995, 112
        %v3314 = vpop.permute.xlu0 %3313
        %3315 = vrot.lane.b32.xlu0 %v2996, 112
        %v3316 = vpop.permute.xlu0 %3315
        %3317 = vrot.lane.b32.xlu0 %v2997, 112
        %v3318 = vpop.permute.xlu0 %3317
        %3319 = vrot.lane.b32.xlu0 %v2998, 112
        %v3320 = vpop.permute.xlu0 %3319
        %3321 = vrot.lane.b32.xlu0 %v2999, 112
        %v3322 = vpop.permute.xlu0 %3321
        %3323 = vrot.lane.b32.xlu0 %v3000, 112
        %v3324 = vpop.permute.xlu0 %3323
        %3325 = vrot.lane.b32.xlu0 %v3001, 112
        %v3326 = vpop.permute.xlu0 %3325
        %3327 = vrot.lane.b32.xlu0 %v3002, 112
        %v3328 = vpop.permute.xlu0 %3327
        %3329 = vrot.lane.b32.xlu0 %v3003, 112
        %v3330 = vpop.permute.xlu0 %3329
        %3331 = vrot.lane.b32.xlu0 %v3004, 112
        %v3332 = vpop.permute.xlu0 %3331
        %v3349 = vmul.f32 %v3269, %v3302
        %v3350 = vmul.f32 %v3270, %v3304
        %v3351 = vmul.f32 %v3271, %v3306
        %v3352 = vmul.f32 %v3272, %v3308
        %v3353 = vmul.f32 %v3273, %v3310
        %v3354 = vmul.f32 %v3274, %v3312
        %v3355 = vmul.f32 %v3275, %v3314
        %v3356 = vmul.f32 %v3276, %v3316
        %v3357 = vmul.f32 %v3277, %v3318
        %v3358 = vmul.f32 %v3278, %v3320
        %v3359 = vmul.f32 %v3279, %v3322
        %v3360 = vmul.f32 %v3280, %v3324
        %v3361 = vmul.f32 %v3281, %v3326
        %v3362 = vmul.f32 %v3282, %v3328
        %v3363 = vmul.f32 %v3283, %v3330
        %v3364 = vmul.f32 %v3284, %v3332
        %v3365 = vadd.f32 %v3253, %v3349
        %v3366 = vadd.f32 %v3254, %v3350
        %v3367 = vadd.f32 %v3255, %v3351
        %v3368 = vadd.f32 %v3256, %v3352
        %v3369 = vadd.f32 %v3257, %v3353
        %v3370 = vadd.f32 %v3258, %v3354
        %v3371 = vadd.f32 %v3259, %v3355
        %v3372 = vadd.f32 %v3260, %v3356
        %v3373 = vadd.f32 %v3261, %v3357
        %v3374 = vadd.f32 %v3262, %v3358
        %v3375 = vadd.f32 %v3263, %v3359
        %v3376 = vadd.f32 %v3264, %v3360
        %v3377 = vadd.f32 %v3265, %v3361
        %v3378 = vadd.f32 %v3266, %v3362
        %v3379 = vadd.f32 %v3267, %v3363
        %v3380 = vadd.f32 %v3268, %v3364
        %v3381 = vpack.c.bf16 %v3366, %v3365
        %v3382 = vpack.c.bf16 %v3368, %v3367
        %v3383 = vpack.c.bf16 %v3370, %v3369
        %v3384 = vpack.c.bf16 %v3372, %v3371
        %v3385 = vpack.c.bf16 %v3374, %v3373
        %v3386 = vpack.c.bf16 %v3376, %v3375
        %v3387 = vpack.c.bf16 %v3378, %v3377
        %v3388 = vpack.c.bf16 %v3380, %v3379
        %v3389 = vld [vmem:[%s9] sm:$0xf]
        %v3390 = vld [vmem:[%s9 + $0x4] sm:$0xf]
        %v3391 = vld [vmem:[%s10] sm:$0x1]
        %v3393 = vlaneseq
        %v3394 = vshrl.u32 %v3393, 7
        %v3395 = vsub.s32 0, %v3394
        %v3396 = vrot.slane %v3391, %v3395
        %v3400 = vunpack.c.l.b16 %v3389
        %v3401 = vunpack.c.l.b16 %v3390
        %v3402 = vpack.c.b16 %v3401, %v3400
        %v3405 = vsel %vm2802, %v3381, 0
        %v3408 = vsel %vm2802, %v3382, 0
        %v3411 = vsel %vm2802, %v3383, 0
        %v3414 = vsel %vm2802, %v3384, 0
        %v3417 = vsel %vm2802, %v3385, 0
        %v3420 = vsel %vm2802, %v3386, 0
        %v3423 = vsel %vm2802, %v3387, 0
        %v3426 = vsel %vm2802, %v3388, 0
        %3428 = vmatprep.subr.bf16.mxu0 0
        %3429 = vmatpush1.bf16.msra.mxu0 %v3402
        %3430 = vmatprep.subr.bf16.mxu0 0
        %3431 = vmatpush1.bf16.msra.mxu0 0
        %3432 = vmatprep.subr.bf16.mxu0 0
        %3433 = vmatpush1.bf16.msra.mxu0 0
        %3434 = vmatprep.subr.bf16.mxu0 0
        %3435 = vmatpush1.bf16.msra.mxu0 0
        %3436 = vmatprep.subr.bf16.mxu0 0
        %3437 = vmatpush1.bf16.msra.mxu0 0
        %3438 = vmatprep.subr.bf16.mxu0 0
        %3439 = vmatpush1.bf16.msra.mxu0 0
        %3440 = vmatprep.subr.bf16.mxu0 0
        %3441 = vmatpush1.bf16.msra.mxu0 0
        %3442 = vmatprep.subr.bf16.mxu0 0
        %3443 = vmatpush1.bf16.msra.mxu0 0
        %3444 = vmatprep.subr.bf16.mxu0 0
        %3445 = vmatpush1.bf16.msra.mxu0 0
        %3446 = vmatprep.subr.bf16.mxu0 0
        %3447 = vmatpush1.bf16.msra.mxu0 0
        %3448 = vmatprep.subr.bf16.mxu0 0
        %3449 = vmatpush1.bf16.msra.mxu0 0
        %3450 = vmatprep.subr.bf16.mxu0 0
        %3451 = vmatpush1.bf16.msra.mxu0 0
        %3452 = vmatprep.subr.bf16.mxu0 0
        %3453 = vmatpush1.bf16.msra.mxu0 0
        %3454 = vmatprep.subr.bf16.mxu0 0
        %3455 = vmatpush1.bf16.msra.mxu0 0
        %3456 = vmatprep.subr.bf16.mxu0 0
        %3457 = vmatpush1.bf16.msra.mxu0 0
        %3458 = vmatprep.subr.bf16.mxu0 0
        %3459 = vmatpush1.bf16.msra.mxu0 0
        %3460 = vmatprep.mubr.bf16.mxu0 0
        %3461 = vmatmul.mubr.bf16.gmra.mrb[0].mxu0 %v3405
        %v3462 = vpop.f32.mrb[0].mxu0
        %v3463 = vadd.f32 %v3396, %v3462
        %v3464 = vpop.f32.mrb[0].mxu0
        %v3465 = vpop.f32.mrb[0].mxu0
        %v3466 = vadd.f32 %v3396, %v3465
        %v3467 = vpop.f32.mrb[0].mxu0
        %3468 = vmatprep.mubr.bf16.mxu0 0
        %3469 = vmatmul.mubr.bf16.gmra.mrb[0].mxu0 %v3408
        %v3470 = vpop.f32.mrb[0].mxu0
        %v3471 = vadd.f32 %v3396, %v3470
        %v3472 = vpop.f32.mrb[0].mxu0
        %v3473 = vpop.f32.mrb[0].mxu0
        %v3474 = vadd.f32 %v3396, %v3473
        %v3475 = vpop.f32.mrb[0].mxu0
        %3476 = vmatprep.mubr.bf16.mxu0 0
        %3477 = vmatmul.mubr.bf16.gmra.mrb[0].mxu0 %v3411
        %v3478 = vpop.f32.mrb[0].mxu0
        %v3479 = vadd.f32 %v3396, %v3478
        %v3480 = vpop.f32.mrb[0].mxu0
        %v3481 = vpop.f32.mrb[0].mxu0
        %v3482 = vadd.f32 %v3396, %v3481
        %v3483 = vpop.f32.mrb[0].mxu0
        %3484 = vmatprep.mubr.bf16.mxu0 0
        %3485 = vmatmul.mubr.bf16.gmra.mrb[0].mxu0 %v3414
        %v3486 = vpop.f32.mrb[0].mxu0
        %v3487 = vadd.f32 %v3396, %v3486
        %v3488 = vpop.f32.mrb[0].mxu0
        %v3489 = vpop.f32.mrb[0].mxu0
        %v3490 = vadd.f32 %v3396, %v3489
        %v3491 = vpop.f32.mrb[0].mxu0
        %3492 = vmatprep.mubr.bf16.mxu0 0
        %3493 = vmatmul.mubr.bf16.gmra.mrb[0].mxu0 %v3417
        %v3494 = vpop.f32.mrb[0].mxu0
        %v3495 = vadd.f32 %v3396, %v3494
        %v3496 = vpop.f32.mrb[0].mxu0
        %v3497 = vpop.f32.mrb[0].mxu0
        %v3498 = vadd.f32 %v3396, %v3497
        %v3499 = vpop.f32.mrb[0].mxu0
        %3500 = vmatprep.mubr.bf16.mxu0 0
        %3501 = vmatmul.mubr.bf16.gmra.mrb[0].mxu0 %v3420
        %v3502 = vpop.f32.mrb[0].mxu0
        %v3503 = vadd.f32 %v3396, %v3502
        %v3504 = vpop.f32.mrb[0].mxu0
        %v3505 = vpop.f32.mrb[0].mxu0
        %v3506 = vadd.f32 %v3396, %v3505
        %v3507 = vpop.f32.mrb[0].mxu0
        %3508 = vmatprep.mubr.bf16.mxu0 0
        %3509 = vmatmul.mubr.bf16.gmra.mrb[0].mxu0 %v3423
        %v3510 = vpop.f32.mrb[0].mxu0
        %v3511 = vadd.f32 %v3396, %v3510
        %v3512 = vpop.f32.mrb[0].mxu0
        %v3513 = vpop.f32.mrb[0].mxu0
        %v3514 = vadd.f32 %v3396, %v3513
        %v3515 = vpop.f32.mrb[0].mxu0
        %3516 = vmatprep.mubr.bf16.mxu0 0
        %3517 = vmatmul.mubr.bf16.gmra.mrb[0].mxu0 %v3426
        %v3518 = vpop.f32.mrb[0].mxu0
        %v3519 = vadd.f32 %v3396, %v3518
        %v3520 = vpop.f32.mrb[0].mxu0
        %v3521 = vpop.f32.mrb[0].mxu0
        %v3522 = vadd.f32 %v3396, %v3521
        %v3523 = vpop.f32.mrb[0].mxu0
        %3524 = vdwg.mxu0
        %v3525 = vmax.f32 %v3463, 0.0
        %v3526 = vmax.f32 %v3466, 0.0
        %v3527 = vmax.f32 %v3471, 0.0
        %v3528 = vmax.f32 %v3474, 0.0
        %v3529 = vmax.f32 %v3479, 0.0
        %v3530 = vmax.f32 %v3482, 0.0
        %v3531 = vmax.f32 %v3487, 0.0
        %v3532 = vmax.f32 %v3490, 0.0
        %v3533 = vmax.f32 %v3495, 0.0
        %v3534 = vmax.f32 %v3498, 0.0
        %v3535 = vmax.f32 %v3503, 0.0
        %v3536 = vmax.f32 %v3506, 0.0
        %v3537 = vmax.f32 %v3511, 0.0
        %v3538 = vmax.f32 %v3514, 0.0
        %v3539 = vmax.f32 %v3519, 0.0
        %v3540 = vmax.f32 %v3522, 0.0
        %v3541 = vpack.c.bf16 %v3526, %v3525
        %v3542 = vpack.c.bf16 %v3528, %v3527
        %v3543 = vpack.c.bf16 %v3530, %v3529
        %v3544 = vpack.c.bf16 %v3532, %v3531
        %v3545 = vpack.c.bf16 %v3534, %v3533
        %v3546 = vpack.c.bf16 %v3536, %v3535
        %v3547 = vpack.c.bf16 %v3538, %v3537
        %v3548 = vpack.c.bf16 %v3540, %v3539
        %v3549 = vld [vmem:[%s11] sm:$0xf]
        %v3550 = vld [vmem:[%s11 + $0x4] sm:$0xf]
        %v3551 = vld [vmem:[%s12] sm:$0x1]
        %v3553 = vlaneseq
        %v3554 = vshrl.u32 %v3553, 7
        %v3555 = vsub.s32 0, %v3554
        %v3556 = vrot.slane %v3551, %v3555
        %v3560 = vunpack.c.l.b16 %v3549
        %v3561 = vunpack.c.l.b16 %v3550
        %v3562 = vpack.c.b16 %v3561, %v3560
        %v3565 = vsel %vm2802, %v3541, 0
        %v3568 = vsel %vm2802, %v3542, 0
        %v3571 = vsel %vm2802, %v3543, 0
        %v3574 = vsel %vm2802, %v3544, 0
        %v3577 = vsel %vm2802, %v3545, 0
        %v3580 = vsel %vm2802, %v3546, 0
        %v3583 = vsel %vm2802, %v3547, 0
        %v3586 = vsel %vm2802, %v3548, 0
        %3588 = vmatprep.subr.bf16.mxu0 0
        %3589 = vmatpush1.bf16.msra.mxu0 %v3562
        %3590 = vmatprep.subr.bf16.mxu0 0
        %3591 = vmatpush1.bf16.msra.mxu0 0
        %3592 = vmatprep.subr.bf16.mxu0 0
        %3593 = vmatpush1.bf16.msra.mxu0 0
        %3594 = vmatprep.subr.bf16.mxu0 0
        %3595 = vmatpush1.bf16.msra.mxu0 0
        %3596 = vmatprep.subr.bf16.mxu0 0
        %3597 = vmatpush1.bf16.msra.mxu0 0
        %3598 = vmatprep.subr.bf16.mxu0 0
        %3599 = vmatpush1.bf16.msra.mxu0 0
        %3600 = vmatprep.subr.bf16.mxu0 0
        %3601 = vmatpush1.bf16.msra.mxu0 0
        %3602 = vmatprep.subr.bf16.mxu0 0
        %3603 = vmatpush1.bf16.msra.mxu0 0
        %3604 = vmatprep.subr.bf16.mxu0 0
        %3605 = vmatpush1.bf16.msra.mxu0 0
        %3606 = vmatprep.subr.bf16.mxu0 0
        %3607 = vmatpush1.bf16.msra.mxu0 0
        %3608 = vmatprep.subr.bf16.mxu0 0
        %3609 = vmatpush1.bf16.msra.mxu0 0
        %3610 = vmatprep.subr.bf16.mxu0 0
        %3611 = vmatpush1.bf16.msra.mxu0 0
        %3612 = vmatprep.subr.bf16.mxu0 0
        %3613 = vmatpush1.bf16.msra.mxu0 0
        %3614 = vmatprep.subr.bf16.mxu0 0
        %3615 = vmatpush1.bf16.msra.mxu0 0
        %3616 = vmatprep.subr.bf16.mxu0 0
        %3617 = vmatpush1.bf16.msra.mxu0 0
        %3618 = vmatprep.subr.bf16.mxu0 0
        %3619 = vmatpush1.bf16.msra.mxu0 0
        %3620 = vmatprep.mubr.bf16.mxu0 0
        %3621 = vmatmul.mubr.bf16.gmra.mrb[0].mxu0 %v3565
        %v3622 = vpop.f32.mrb[0].mxu0
        %v3623 = vadd.f32 %v3556, %v3622
        %v3624 = vpop.f32.mrb[0].mxu0
        %v3625 = vpop.f32.mrb[0].mxu0
        %v3626 = vadd.f32 %v3556, %v3625
        %v3627 = vpop.f32.mrb[0].mxu0
        %3628 = vmatprep.mubr.bf16.mxu0 0
        %3629 = vmatmul.mubr.bf16.gmra.mrb[0].mxu0 %v3568
        %v3630 = vpop.f32.mrb[0].mxu0
        %v3631 = vadd.f32 %v3556, %v3630
        %v3632 = vpop.f32.mrb[0].mxu0
        %v3633 = vpop.f32.mrb[0].mxu0
        %v3634 = vadd.f32 %v3556, %v3633
        %v3635 = vpop.f32.mrb[0].mxu0
        %3636 = vmatprep.mubr.bf16.mxu0 0
        %3637 = vmatmul.mubr.bf16.gmra.mrb[0].mxu0 %v3571
        %v3638 = vpop.f32.mrb[0].mxu0
        %v3639 = vadd.f32 %v3556, %v3638
        %v3640 = vpop.f32.mrb[0].mxu0
        %v3641 = vpop.f32.mrb[0].mxu0
        %v3642 = vadd.f32 %v3556, %v3641
        %v3643 = vpop.f32.mrb[0].mxu0
        %3644 = vmatprep.mubr.bf16.mxu0 0
        %3645 = vmatmul.mubr.bf16.gmra.mrb[0].mxu0 %v3574
        %v3646 = vpop.f32.mrb[0].mxu0
        %v3647 = vadd.f32 %v3556, %v3646
        %v3648 = vpop.f32.mrb[0].mxu0
        %v3649 = vpop.f32.mrb[0].mxu0
        %v3650 = vadd.f32 %v3556, %v3649
        %v3651 = vpop.f32.mrb[0].mxu0
        %3652 = vmatprep.mubr.bf16.mxu0 0
        %3653 = vmatmul.mubr.bf16.gmra.mrb[0].mxu0 %v3577
        %v3654 = vpop.f32.mrb[0].mxu0
        %v3655 = vadd.f32 %v3556, %v3654
        %v3656 = vpop.f32.mrb[0].mxu0
        %v3657 = vpop.f32.mrb[0].mxu0
        %v3658 = vadd.f32 %v3556, %v3657
        %v3659 = vpop.f32.mrb[0].mxu0
        %3660 = vmatprep.mubr.bf16.mxu0 0
        %3661 = vmatmul.mubr.bf16.gmra.mrb[0].mxu0 %v3580
        %v3662 = vpop.f32.mrb[0].mxu0
        %v3663 = vadd.f32 %v3556, %v3662
        %v3664 = vpop.f32.mrb[0].mxu0
        %v3665 = vpop.f32.mrb[0].mxu0
        %v3666 = vadd.f32 %v3556, %v3665
        %v3667 = vpop.f32.mrb[0].mxu0
        %3668 = vmatprep.mubr.bf16.mxu0 0
        %3669 = vmatmul.mubr.bf16.gmra.mrb[0].mxu0 %v3583
        %v3670 = vpop.f32.mrb[0].mxu0
        %v3671 = vadd.f32 %v3556, %v3670
        %v3672 = vpop.f32.mrb[0].mxu0
        %v3673 = vpop.f32.mrb[0].mxu0
        %v3674 = vadd.f32 %v3556, %v3673
        %v3675 = vpop.f32.mrb[0].mxu0
        %3676 = vmatprep.mubr.bf16.mxu0 0
        %3677 = vmatmul.mubr.bf16.gmra.mrb[0].mxu0 %v3586
        %v3678 = vpop.f32.mrb[0].mxu0
        %v3679 = vadd.f32 %v3556, %v3678
        %v3680 = vpop.f32.mrb[0].mxu0
        %v3681 = vpop.f32.mrb[0].mxu0
        %v3682 = vadd.f32 %v3556, %v3681
        %v3683 = vpop.f32.mrb[0].mxu0
        %3684 = vdwg.mxu0
        %v3685 = vadd.f32 %v440, %v3623
        %v3686 = vadd.f32 %v441, %v3626
        %v3687 = vadd.f32 %v442, %v3631
        %v3688 = vadd.f32 %v443, %v3634
        %v3689 = vadd.f32 %v444, %v3639
        %v3690 = vadd.f32 %v445, %v3642
        %v3691 = vadd.f32 %v446, %v3647
        %v3692 = vadd.f32 %v447, %v3650
        %v3693 = vadd.f32 %v448, %v3655
        %v3694 = vadd.f32 %v449, %v3658
        %v3695 = vadd.f32 %v450, %v3663
        %v3696 = vadd.f32 %v451, %v3666
        %v3697 = vadd.f32 %v452, %v3671
        %v3698 = vadd.f32 %v453, %v3674
        %v3699 = vadd.f32 %v454, %v3679
        %v3700 = vadd.f32 %v455, %v3682
        %vm3701 = vcmask 162816
        %3702 = vst.msk [vmem:[%s433] sm:$0xff] %vm3701, %v3685
        %3703 = vst.msk [vmem:[%s433 + $0x8] sm:$0xff] %vm3701, %v3686
        %3704 = vst.msk [vmem:[%s433 + $0x10] sm:$0xff] %vm3701, %v3687
        %3705 = vst.msk [vmem:[%s433 + $0x18] sm:$0xff] %vm3701, %v3688
        %3706 = vst.msk [vmem:[%s433 + $0x20] sm:$0xff] %vm3701, %v3689
        %3707 = vst.msk [vmem:[%s433 + $0x28] sm:$0xff] %vm3701, %v3690
        %3708 = vst.msk [vmem:[%s433 + $0x30] sm:$0xff] %vm3701, %v3691
        %3709 = vst.msk [vmem:[%s433 + $0x38] sm:$0xff] %vm3701, %v3692
        %3710 = vst.msk [vmem:[%s433 + $0x40] sm:$0xff] %vm3701, %v3693
        %3711 = vst.msk [vmem:[%s433 + $0x48] sm:$0xff] %vm3701, %v3694
        %3712 = vst.msk [vmem:[%s433 + $0x50] sm:$0xff] %vm3701, %v3695
        %3713 = vst.msk [vmem:[%s433 + $0x58] sm:$0xff] %vm3701, %v3696
        %3714 = vst.msk [vmem:[%s433 + $0x60] sm:$0xff] %vm3701, %v3697
        %3715 = vst.msk [vmem:[%s433 + $0x68] sm:$0xff] %vm3701, %v3698
        %3716 = vst.msk [vmem:[%s433 + $0x70] sm:$0xff] %vm3701, %v3699
        %3717 = vst.msk [vmem:[%s433 + $0x78] sm:$0xff] %vm3701, %v3700
        %s3718 = sand.u32 %s313, 1
        %s3719 = scalar_lea.sflag [#allocation3], %s3718
        %s3720 = sand.u32 %s313, 1
        %s3721 = smul.addr %s3720, 128
        %s3722 = scalar_lea.vmem [#allocation2], %s3721
        // Predicated region
        $region73: #{st_att_block.1} parent=71 // pred_check
          %p3723 = pneg %p323
        $region74: #{st_att_block.1} parent=71 // pred_check_branch
          %3725 = sbr.rel (%p3723) target = $region76
        $region75: #{st_att_block.1} parent=71 // pred_region
          %s3727 = ssub.s32 2048, 2048
          %3728 = vsyncadd %s3719, %s3727
          %s3729 = smul.addr %s27, 16
          %s3730 = smul.addr %s3729, 128
          %s3731 = scalar_lea.hbm %s13, %s3730
          %s3732 = sshll.u32 %s3722, 4
          %s3733 = int_to_ptr.vmem [resolvable:$true] %s3732
          %3738 = dma.vmem_to_hbm [thread:$0]  %s3733, 2048, %s3731, %s3719, 128, 128, 8
        $region76: #{st_att_block.1} parent=71 // pred_fallthru
          _
      $region72: #{st_att_block.1} parent=5 // pred_fallthru
        _
      %p3739 = scmp.le.s32.totalorder 2, %s22
      // Predicated region
      $region77: #{st_att_block.1} parent=5 // pred_check
        %p3740 = pneg %p3739
      $region78: #{st_att_block.1} parent=5 // pred_check_branch
        %3742 = sbr.rel (%p3740) target = $region80
      $region79: #{st_att_block.1} parent=5 // pred_region
        %s3743 = ssub.s32 %s22, 2
        // Predicated region
        $region81: #{st_att_block.1} parent=79 // pred_check
          %p3744 = pneg %p329
        $region82: #{st_att_block.1} parent=79 // pred_check_branch
          %3746 = sbr.rel (%p3744) target = $region84
        $region83: #{st_att_block.1} parent=79 // pred_region
          %s3747 = sand.u32 %s314, 1
          %s3748 = scalar_lea.sflag [#allocation3], %s3747
          %s3749 = sand.u32 %s314, 1
          %s3750 = smul.addr %s3749, 128
          %s3751 = scalar_lea.vmem [#allocation2], %s3750
          %3752 = dma.done %s3748, 2048
        $region84: #{st_att_block.1} parent=79 // pred_fallthru
          _
      $region80: #{st_att_block.1} parent=5 // pred_fallthru
        _
    $region6: #{st_att_block.1} parent=1 // loop_footer
      %s26 = sadd.s32 1, %s22
    $region7: #{st_att_block.1} parent=1 // loop_footer_branch
      %21 = sbr.rel target = $region3
    $region8: #{st_att_block.1} parent=1 // loop_exit
      _
    %3753 = vsyncpa [#allocation3], 1
    %s3754 = scalar_lea.sflag [#allocation3], 1
    %3755 = vsyncpa %s3754, 1

</llo_original>
